<compile_context>
chip_gen: v7x
topology: tpu7x:2x2x1
jax: 0.10.0
libtpu: 0.0.40
codegen_flags: <defaults>
</compile_context>

<pallas_src>
import math

import jax
import jax.numpy as jnp
from jax.experimental import pallas as pl

# ---------------- config ----------------
VOCAB = 256
EMBED = 64
HEADS = 4
KV_HEADS = 2
HEAD_DIM = EMBED // HEADS          # 16
GROUPS = HEADS // KV_HEADS
LAYERS = 2
CTX = 16
EXPANSION = 2
HIDDEN = EMBED * EXPANSION         # 128
EPS = 1e-5
ROPE_THETA = 500000.0

QW = HEADS * HEAD_DIM              # 64  : q projection width
KW = KV_HEADS * HEAD_DIM           # 32  : k / v projection width
QKVW = QW + 2 * KW                 # 128 : fused qkv projection width (lane-dense)
QW2 = QW // 2                      # 32
KW2 = KW // 2                      # 16
HD2 = HEAD_DIM // 2                # 8


def _rms(x, w, eps):
    return x * jax.lax.rsqrt(jnp.mean(x * x, axis=-1, keepdims=True) + eps) * w


# ---------------- fused Pallas kernel (single invocation, no grid) ----------------
def gpt_kernel(x_ref, mask_ref, cosq_ref, sinq_ref, cosk_ref, sink_ref,
               lnf_ref, wout_ref,
               ln1_ref, wqkv_ref, wo_ref, ln2_ref, wgu_ref, wd_ref,
               o_ref):
    """Whole forward (post embedding-gather) for all B*T rows at once.

    Layer loop is statically unrolled; residual stream stays in vregs; all weights are
    whole-array VMEM resident.  mask_ref is the block-diagonal causal additive bias.
    """
    bf16 = jnp.bfloat16
    scale = 1.0 / math.sqrt(HEAD_DIM)

    x = x_ref[...]                                     # (N, C) f32 residual stream
    mask = mask_ref[...]                               # (N, N) additive causal bias
    cq, sq = cosq_ref[...], sinq_ref[...]              # (N, QW2)
    ck, sk = cosk_ref[...], sink_ref[...]              # (N, KW2)

    for l in range(LAYERS):                            # static unroll over layers
        # ---------------- attention ----------------
        xn = _rms(x, ln1_ref[l], EPS)
        qkv = jnp.dot(xn.astype(bf16), wqkv_ref[l],    # fused q|k|v, 128-wide output
                      preferred_element_type=jnp.float32)
        q_ev, q_od = qkv[:, :QW2], qkv[:, QW2:QW]
        k_ev, k_od = qkv[:, QW:QW + KW2], qkv[:, QW + KW2:QW + KW]
        v = qkv[:, QW + KW:]                           # original (interleaved) layout

        # rotary applied once across all (kv-)heads; q/k columns are pre-permuted to
        # [all heads' even components | all heads' odd components]; no concat needed —
        # the rotated halves are kept separate (dot products are invariant to layout).
        qr_ev = q_ev * cq - q_od * sq
        qr_od = q_ev * sq + q_od * cq
        kr_ev = k_ev * ck - k_od * sk
        kr_od = k_ev * sk + k_od * ck

        wo_l = wo_ref[l]                               # (C, C) f32
        attn = jnp.zeros_like(x)                       # (N, C) f32 accumulator
        for h in range(HEADS):                         # static unroll over heads
            g = h // GROUPS                            # GQA: kv head for query head h
            # scores: two partial MXU matmuls over the [evens] / [odds] halves
            s = (jnp.einsum('nd,md->nm',
                            qr_ev[:, h * HD2:(h + 1) * HD2],
                            kr_ev[:, g * HD2:(g + 1) * HD2],
                            preferred_element_type=jnp.float32) +
                 jnp.einsum('nd,md->nm',
                            qr_od[:, h * HD2:(h + 1) * HD2],
                            kr_od[:, g * HD2:(g + 1) * HD2],
                            preferred_element_type=jnp.float32)) * scale + mask
            s = s - jnp.max(s, axis=-1, keepdims=True)
            p = jnp.exp(s)
            p = p * pl.reciprocal(jnp.sum(p, axis=-1, keepdims=True), approx=True)
            pv = jnp.einsum('nm,md->nd', p, v[:, g * HEAD_DIM:(g + 1) * HEAD_DIM],
                            preferred_element_type=jnp.float32)
            # per-head accumulation through the matching wo row slice (no head concat)
            attn = attn + jnp.dot(pv, wo_l[h * HEAD_DIM:(h + 1) * HEAD_DIM, :],
                                  preferred_element_type=jnp.float32)
        x = x + attn                                   # dropout p = 0.0 -> identity

        # ---------------- gated SiLU MLP ----------------
        xn = _rms(x, ln2_ref[l], EPS)
        gu = jnp.dot(xn.astype(bf16), wgu_ref[l],      # fused gate|up, 256-wide output
                     preferred_element_type=jnp.float32)
        g_, u_ = gu[:, :HIDDEN], gu[:, HIDDEN:]
        hdn = g_ * jax.nn.sigmoid(g_) * u_
        x = x + jnp.dot(hdn.astype(bf16), wd_ref[l],
                        preferred_element_type=jnp.float32)

    # ---------------- final norm + tied lm head ----------------
    xf = _rms(x, lnf_ref[...], EPS)
    o_ref[...] = jnp.dot(xf.astype(bf16), wout_ref[...],
                         preferred_element_type=jnp.float32)


# ---------------- wrapper ----------------
def gpt_forward(tokens, params):
    B, T = tokens.shape
    N = B * T
    # TODO(synk): fuse the embedding gather into the kernel (scalar-prefetch row gather)
    #             instead of materializing x in HBM; negligible at this toy size.
    x = params['embed'][tokens].reshape(N, EMBED)

    # block-diagonal causal additive bias over the folded (B*T) rows
    r = jnp.arange(N)
    same_seq = (r[:, None] // T) == (r[None, :] // T)
    causal = r[:, None] >= r[None, :]
    mask = jnp.where(same_seq & causal, 0.0, -1e30).astype(jnp.float32)

    # rotary tables tiled per (kv-)head and per batch row (match [evens|odds] layout)
    cos, sin = params['cos'][:T], params['sin'][:T]
    cosq = jnp.tile(cos, (B, HEADS))
    sinq = jnp.tile(sin, (B, HEADS))
    cosk = jnp.tile(cos, (B, KV_HEADS))
    sink = jnp.tile(sin, (B, KV_HEADS))

    logits = pl.pallas_call(
        gpt_kernel,
        out_shape=jax.ShapeDtypeStruct((N, VOCAB), jnp.float32),
    )(x, mask, cosq, sinq, cosk, sink,
      params['ln_f_2d'], params['w_out'],
      params['ln1_s'], params['wqkv_s'], params['wo_s'],
      params['ln2_s'], params['wgu_s'], params['wd_s'])
    return logits.reshape(B, T, VOCAB)


# ---------------- parameter init (deterministic, synthetic) ----------------
def _global_half_perm(num_heads):
    """Column permutation putting all heads' even rope components first, then all odds."""
    evens = [h * HEAD_DIM + 2 * i for h in range(num_heads) for i in range(HD2)]
    odds = [h * HEAD_DIM + 2 * i + 1 for h in range(num_heads) for i in range(HD2)]
    return jnp.asarray(evens + odds, dtype=jnp.int32)


def init_params(key):
    std, std_out = 0.02, 0.02 / math.sqrt(2 * LAYERS)
    keys = jax.random.split(key, 1 + 7 * LAYERS)
    ki = iter(keys)
    embed = jax.random.normal(next(ki), (VOCAB, EMBED), jnp.float32) * std

    perm_q = _global_half_perm(HEADS)
    perm_k = _global_half_perm(KV_HEADS)

    layers = []
    for _ in range(LAYERS):
        wq = jax.random.normal(next(ki), (EMBED, QW), jnp.float32) * std
        wk = jax.random.normal(next(ki), (EMBED, KW), jnp.float32) * std
        wv = jax.random.normal(next(ki), (EMBED, KW), jnp.float32) * std
        wo = jax.random.normal(next(ki), (EMBED, EMBED), jnp.float32) * std_out
        wg = jax.random.normal(next(ki), (EMBED, HIDDEN), jnp.float32) * std
        wu = jax.random.normal(next(ki), (EMBED, HIDDEN), jnp.float32) * std
        wd = jax.random.normal(next(ki), (HIDDEN, EMBED), jnp.float32) * std_out
        layers.append(dict(ln1=jnp.ones((EMBED,), jnp.float32),
                           ln2=jnp.ones((EMBED,), jnp.float32),
                           wq=wq, wk=wk, wv=wv, wo=wo, wg=wg, wu=wu, wd=wd))

    # kernel-side stacked / fused / pre-permuted weights
    wqkv_s = jnp.stack([jnp.concatenate(
        [L['wq'][:, perm_q], L['wk'][:, perm_k], L['wv']], axis=1) for L in layers]
    ).astype(jnp.bfloat16)                                        # (L, C, 128) bf16
    wo_s = jnp.stack([L['wo'] for L in layers])                   # (L, C, C)  f32
    wgu_s = jnp.stack([jnp.concatenate([L['wg'], L['wu']], axis=1) for L in layers]
                      ).astype(jnp.bfloat16)                      # (L, C, 256) bf16
    wd_s = jnp.stack([L['wd'] for L in layers]).astype(jnp.bfloat16)
    ln1_s = jnp.stack([L['ln1'][None, :] for L in layers])        # (L, 1, C) f32
    ln2_s = jnp.stack([L['ln2'][None, :] for L in layers])
    ln_f = jnp.ones((EMBED,), jnp.float32)

    # rotary tables (cos/sin of precompute_freqs_cis)
    freqs = 1.0 / ROPE_THETA ** (jnp.arange(0, HEAD_DIM - 1, 2, dtype=jnp.float32) / HEAD_DIM)
    t = jnp.arange(CTX, dtype=jnp.float32)
    ang = jnp.outer(t, freqs)                                     # (CTX, HD//2)
    cos, sin = jnp.cos(ang), jnp.sin(ang)

    return dict(
        # reference-side (f32, unpermuted)
        embed=embed, layers=layers, ln_f=ln_f, cos=cos, sin=sin,
        # kernel-side (fused / stacked, tied lm head precomputed)
        ln_f_2d=ln_f[None, :],
        w_out=embed.T.astype(jnp.bfloat16),
        ln1_s=ln1_s, ln2_s=ln2_s, wqkv_s=wqkv_s, wo_s=wo_s, wgu_s=wgu_s, wd_s=wd_s,
    )


# ---------------- pure-JAX reference (for correctness check) ----------------
def _rope_interleaved(h, cos, sin):
    x0, x1 = h[..., 0::2], h[..., 1::2]
    return jnp.stack([x0 * cos - x1 * sin, x0 * sin + x1 * cos], axis=-1).reshape(h.shape)


def _block_ref(x, layer, cos, sin):
    B, T, C = x.shape
    xn = _rms(x, layer['ln1'], EPS)
    x2 = xn.reshape(B * T, C)
    q = (x2 @ layer['wq']).reshape(B, T, QW)
    k = (x2 @ layer['wk']).reshape(B, T, KW)
    v = (x2 @ layer['wv']).reshape(B, T, KW)
    scale = 1.0 / math.sqrt(HEAD_DIM)
    causal = (jax.lax.broadcasted_iota(jnp.int32, (T, T), 0) >=
              jax.lax.broadcasted_iota(jnp.int32, (T, T), 1))
    outs = []
    for h in range(HEADS):
        g = h // GROUPS
        qh = _rope_interleaved(q[..., h * HEAD_DIM:(h + 1) * HEAD_DIM], cos[None], sin[None])
        kh = _rope_interleaved(k[..., g * HEAD_DIM:(g + 1) * HEAD_DIM], cos[None], sin[None])
        vh = v[..., g * HEAD_DIM:(g + 1) * HEAD_DIM]
        s = jnp.einsum('bqd,bkd->bqk', qh, kh) * scale
        s = jnp.where(causal[None], s, -1e30)
        p = jax.nn.softmax(s, axis=-1)
        outs.append(jnp.einsum('bqk,bkd->bqd', p, vh))
    x = x + (jnp.concatenate(outs, -1).reshape(B * T, C) @ layer['wo']).reshape(B, T, C)
    xn = _rms(x, layer['ln2'], EPS)
    x2 = xn.reshape(B * T, C)
    g_, u_ = x2 @ layer['wg'], x2 @ layer['wu']
    return x + (((g_ * jax.nn.sigmoid(g_)) * u_) @ layer['wd']).reshape(B, T, C)


def gpt_reference(tokens, params):
    x = params['embed'][tokens]
    T = tokens.shape[1]
    cos, sin = params['cos'][:T], params['sin'][:T]
    for layer in params['layers']:
        x = _block_ref(x, layer, cos, sin)
    xn = _rms(x, params['ln_f'], EPS)
    return xn @ params['embed'].T


# ---------------- main ----------------
if __name__ == "__main__":
    key = jax.random.PRNGKey(0)
    kp, kt = jax.random.split(key)
    params = init_params(kp)

    B, T = 2, 8
    tokens = jax.random.randint(kt, (B, T), 0, VOCAB, dtype=jnp.int32)

    logits = jax.block_until_ready(gpt_forward(tokens, params))
    assert logits.shape == (B, T, VOCAB) and logits.dtype == jnp.float32

    ref = jax.block_until_ready(gpt_reference(tokens, params))
    max_err = float(jnp.max(jnp.abs(logits - ref)))
    assert max_err < 5e-2, f"mismatch vs reference: {max_err}"

    print("KERNEL_OK")
</pallas_src>

<mosaic_0001>
module attributes {stable_mosaic.version = 11 : i64} {
  func.func @gpt_kernel(%arg0: memref<16x64xf32, #tpu.memory_space<vmem>>, %arg1: memref<16x16xf32, #tpu.memory_space<vmem>>, %arg2: memref<16x32xf32, #tpu.memory_space<vmem>>, %arg3: memref<16x32xf32, #tpu.memory_space<vmem>>, %arg4: memref<16x16xf32, #tpu.memory_space<vmem>>, %arg5: memref<16x16xf32, #tpu.memory_space<vmem>>, %arg6: memref<1x64xf32, #tpu.memory_space<vmem>>, %arg7: memref<64x256xbf16, #tpu.memory_space<vmem>>, %arg8: memref<2x1x64xf32, #tpu.memory_space<vmem>>, %arg9: memref<2x64x128xbf16, #tpu.memory_space<vmem>>, %arg10: memref<2x64x64xf32, #tpu.memory_space<vmem>>, %arg11: memref<2x1x64xf32, #tpu.memory_space<vmem>>, %arg12: memref<2x64x256xbf16, #tpu.memory_space<vmem>>, %arg13: memref<2x128x64xbf16, #tpu.memory_space<vmem>>, %arg14: memref<16x256xf32, #tpu.memory_space<vmem>>) attributes {dimension_semantics = [], scalar_prefetch = 0 : i64, scratch_operands = 0 : i64, tpu.core_type = #tpu.core_type<tc>} {
    %c0 = arith.constant 0 : index
    %c0_0 = arith.constant 0 : index
    %0 = vector.load %arg0[%c0, %c0_0] : memref<16x64xf32, #tpu.memory_space<vmem>>, vector<16x64xf32>
    %c0_1 = arith.constant 0 : index
    %c0_2 = arith.constant 0 : index
    %1 = vector.load %arg1[%c0_1, %c0_2] : memref<16x16xf32, #tpu.memory_space<vmem>>, vector<16x16xf32>
    %c0_3 = arith.constant 0 : index
    %c0_4 = arith.constant 0 : index
    %2 = vector.load %arg2[%c0_3, %c0_4] : memref<16x32xf32, #tpu.memory_space<vmem>>, vector<16x32xf32>
    %c0_5 = arith.constant 0 : index
    %c0_6 = arith.constant 0 : index
    %3 = vector.load %arg3[%c0_5, %c0_6] : memref<16x32xf32, #tpu.memory_space<vmem>>, vector<16x32xf32>
    %c0_7 = arith.constant 0 : index
    %c0_8 = arith.constant 0 : index
    %4 = vector.load %arg4[%c0_7, %c0_8] : memref<16x16xf32, #tpu.memory_space<vmem>>, vector<16x16xf32>
    %c0_9 = arith.constant 0 : index
    %c0_10 = arith.constant 0 : index
    %5 = vector.load %arg5[%c0_9, %c0_10] : memref<16x16xf32, #tpu.memory_space<vmem>>, vector<16x16xf32>
    %c0_11 = arith.constant 0 : index
    %c0_12 = arith.constant 0 : index
    %c0_13 = arith.constant 0 : index
    %6 = vector.load %arg8[%c0_11, %c0_12, %c0_13] : memref<2x1x64xf32, #tpu.memory_space<vmem>>, vector<1x1x64xf32>
    %7 = vector.shape_cast %6 : vector<1x1x64xf32> to vector<1x64xf32>
    %8 = arith.mulf %0, %0 : vector<16x64xf32>
    %cst = arith.constant dense<0.000000e+00> : vector<16xf32>
    %9 = vector.multi_reduction <add>, %8, %cst [1] : vector<16x64xf32> to vector<16xf32>
    %10 = vector.shape_cast %9 : vector<16xf32> to vector<16x1xf32>
    %cst_14 = arith.constant 6.400000e+01 : f32
    %11 = vector.broadcast %cst_14 : f32 to vector<16x1xf32>
    %12 = arith.divf %10, %11 : vector<16x1xf32>
    %cst_15 = arith.constant 9.99999974E-6 : f32
    %13 = vector.broadcast %cst_15 : f32 to vector<16x1xf32>
    %14 = arith.addf %12, %13 : vector<16x1xf32>
    %15 = math.rsqrt %14 : vector<16x1xf32>
    %16 = vector.broadcast %15 : vector<16x1xf32> to vector<16x64xf32>
    %17 = arith.mulf %0, %16 : vector<16x64xf32>
    %18 = vector.broadcast %7 : vector<1x64xf32> to vector<16x64xf32>
    %19 = arith.mulf %17, %18 : vector<16x64xf32>
    %20 = arith.truncf %19 : vector<16x64xf32> to vector<16x64xbf16>
    %c0_16 = arith.constant 0 : index
    %c0_17 = arith.constant 0 : index
    %c0_18 = arith.constant 0 : index
    %21 = vector.load %arg9[%c0_16, %c0_17, %c0_18] : memref<2x64x128xbf16, #tpu.memory_space<vmem>>, vector<1x64x128xbf16>
    %22 = vector.shape_cast %21 : vector<1x64x128xbf16> to vector<64x128xbf16>
    %cst_19 = arith.constant dense<0.000000e+00> : vector<16x128xf32>
    %23 = tpu.matmul %20, %22, %cst_19 {dimension_numbers = #tpu.dot_dimension_numbers<[1], [0], [0], [1], [0, 0, 1, 1], [], []>} : vector<16x64xbf16>, vector<64x128xbf16>, vector<16x128xf32> -> vector<16x128xf32>
    %24 = vector.extract_strided_slice %23 {offsets = [0, 0], sizes = [16, 32], strides = [1, 1]} : vector<16x128xf32> to vector<16x32xf32>
    %25 = vector.extract_strided_slice %23 {offsets = [0, 32], sizes = [16, 32], strides = [1, 1]} : vector<16x128xf32> to vector<16x32xf32>
    %26 = vector.extract_strided_slice %23 {offsets = [0, 64], sizes = [16, 16], strides = [1, 1]} : vector<16x128xf32> to vector<16x16xf32>
    %27 = vector.extract_strided_slice %23 {offsets = [0, 80], sizes = [16, 16], strides = [1, 1]} : vector<16x128xf32> to vector<16x16xf32>
    %28 = vector.extract_strided_slice %23 {offsets = [0, 96], sizes = [16, 32], strides = [1, 1]} : vector<16x128xf32> to vector<16x32xf32>
    %29 = arith.mulf %24, %2 : vector<16x32xf32>
    %30 = arith.mulf %25, %3 : vector<16x32xf32>
    %31 = arith.subf %29, %30 : vector<16x32xf32>
    %32 = arith.mulf %24, %3 : vector<16x32xf32>
    %33 = arith.mulf %25, %2 : vector<16x32xf32>
    %34 = arith.addf %32, %33 : vector<16x32xf32>
    %35 = arith.mulf %26, %4 : vector<16x16xf32>
    %36 = arith.mulf %27, %5 : vector<16x16xf32>
    %37 = arith.subf %35, %36 : vector<16x16xf32>
    %38 = arith.mulf %26, %5 : vector<16x16xf32>
    %39 = arith.mulf %27, %4 : vector<16x16xf32>
    %40 = arith.addf %38, %39 : vector<16x16xf32>
    %c0_20 = arith.constant 0 : index
    %c0_21 = arith.constant 0 : index
    %c0_22 = arith.constant 0 : index
    %41 = vector.load %arg10[%c0_20, %c0_21, %c0_22] : memref<2x64x64xf32, #tpu.memory_space<vmem>>, vector<1x64x64xf32>
    %42 = vector.shape_cast %41 : vector<1x64x64xf32> to vector<64x64xf32>
    %cst_23 = arith.constant 0.000000e+00 : f32
    %43 = vector.broadcast %cst_23 : f32 to vector<16x64xf32>
    %44 = vector.extract_strided_slice %31 {offsets = [0, 0], sizes = [16, 8], strides = [1, 1]} : vector<16x32xf32> to vector<16x8xf32>
    %45 = vector.extract_strided_slice %37 {offsets = [0, 0], sizes = [16, 8], strides = [1, 1]} : vector<16x16xf32> to vector<16x8xf32>
    "tpu.trace_start"() <{level = 10 : i32, message = "nd,md->nm"}> : () -> ()
    %cst_24 = arith.constant dense<0.000000e+00> : vector<16x16xf32>
    %46 = tpu.matmul %44, %45, %cst_24 {dimension_numbers = #tpu.dot_dimension_numbers<[1], [1], [0], [0], [0, 0, 1, 0], [], []>} : vector<16x8xf32>, vector<16x8xf32>, vector<16x16xf32> -> vector<16x16xf32>
    "tpu.trace_stop"() : () -> ()
    %47 = vector.extract_strided_slice %34 {offsets = [0, 0], sizes = [16, 8], strides = [1, 1]} : vector<16x32xf32> to vector<16x8xf32>
    %48 = vector.extract_strided_slice %40 {offsets = [0, 0], sizes = [16, 8], strides = [1, 1]} : vector<16x16xf32> to vector<16x8xf32>
    "tpu.trace_start"() <{level = 10 : i32, message = "nd,md->nm"}> : () -> ()
    %cst_25 = arith.constant dense<0.000000e+00> : vector<16x16xf32>
    %49 = tpu.matmul %47, %48, %cst_25 {dimension_numbers = #tpu.dot_dimension_numbers<[1], [1], [0], [0], [0, 0, 1, 0], [], []>} : vector<16x8xf32>, vector<16x8xf32>, vector<16x16xf32> -> vector<16x16xf32>
    "tpu.trace_stop"() : () -> ()
    %50 = arith.addf %46, %49 : vector<16x16xf32>
    %cst_26 = arith.constant 2.500000e-01 : f32
    %51 = vector.broadcast %cst_26 : f32 to vector<16x16xf32>
    %52 = arith.mulf %50, %51 : vector<16x16xf32>
    %53 = arith.addf %52, %1 : vector<16x16xf32>
    %cst_27 = arith.constant dense<0xFF800000> : vector<16xf32>
    %54 = vector.multi_reduction <maximumf>, %53, %cst_27 [1] : vector<16x16xf32> to vector<16xf32>
    %55 = vector.shape_cast %54 : vector<16xf32> to vector<16x1xf32>
    %56 = vector.broadcast %55 : vector<16x1xf32> to vector<16x16xf32>
    %57 = arith.subf %53, %56 : vector<16x16xf32>
    %58 = math.exp %57 : vector<16x16xf32>
    %cst_28 = arith.constant dense<0.000000e+00> : vector<16xf32>
    %59 = vector.multi_reduction <add>, %58, %cst_28 [1] : vector<16x16xf32> to vector<16xf32>
    %60 = vector.shape_cast %59 : vector<16xf32> to vector<16x1xf32>
    %61 = tpu.reciprocal %60 {approx = true} : vector<16x1xf32> -> vector<16x1xf32>
    %62 = vector.broadcast %61 : vector<16x1xf32> to vector<16x16xf32>
    %63 = arith.mulf %58, %62 : vector<16x16xf32>
    %64 = vector.extract_strided_slice %28 {offsets = [0, 0], sizes = [16, 16], strides = [1, 1]} : vector<16x32xf32> to vector<16x16xf32>
    "tpu.trace_start"() <{level = 10 : i32, message = "nm,md->nd"}> : () -> ()
    %cst_29 = arith.constant dense<0.000000e+00> : vector<16x16xf32>
    %65 = tpu.matmul %63, %64, %cst_29 {dimension_numbers = #tpu.dot_dimension_numbers<[1], [0], [0], [1], [0, 0, 1, 1], [], []>} : vector<16x16xf32>, vector<16x16xf32>, vector<16x16xf32> -> vector<16x16xf32>
    "tpu.trace_stop"() : () -> ()
    %66 = vector.extract_strided_slice %42 {offsets = [0, 0], sizes = [16, 64], strides = [1, 1]} : vector<64x64xf32> to vector<16x64xf32>
    %cst_30 = arith.constant dense<0.000000e+00> : vector<16x64xf32>
    %67 = tpu.matmul %65, %66, %cst_30 {dimension_numbers = #tpu.dot_dimension_numbers<[1], [0], [0], [1], [0, 0, 1, 1], [], []>} : vector<16x16xf32>, vector<16x64xf32>, vector<16x64xf32> -> vector<16x64xf32>
    %68 = arith.addf %43, %67 : vector<16x64xf32>
    %69 = vector.extract_strided_slice %31 {offsets = [0, 8], sizes = [16, 8], strides = [1, 1]} : vector<16x32xf32> to vector<16x8xf32>
    %70 = vector.extract_strided_slice %37 {offsets = [0, 0], sizes = [16, 8], strides = [1, 1]} : vector<16x16xf32> to vector<16x8xf32>
    "tpu.trace_start"() <{level = 10 : i32, message = "nd,md->nm"}> : () -> ()
    %cst_31 = arith.constant dense<0.000000e+00> : vector<16x16xf32>
    %71 = tpu.matmul %69, %70, %cst_31 {dimension_numbers = #tpu.dot_dimension_numbers<[1], [1], [0], [0], [0, 0, 1, 0], [], []>} : vector<16x8xf32>, vector<16x8xf32>, vector<16x16xf32> -> vector<16x16xf32>
    "tpu.trace_stop"() : () -> ()
    %72 = vector.extract_strided_slice %34 {offsets = [0, 8], sizes = [16, 8], strides = [1, 1]} : vector<16x32xf32> to vector<16x8xf32>
    %73 = vector.extract_strided_slice %40 {offsets = [0, 0], sizes = [16, 8], strides = [1, 1]} : vector<16x16xf32> to vector<16x8xf32>
    "tpu.trace_start"() <{level = 10 : i32, message = "nd,md->nm"}> : () -> ()
    %cst_32 = arith.constant dense<0.000000e+00> : vector<16x16xf32>
    %74 = tpu.matmul %72, %73, %cst_32 {dimension_numbers = #tpu.dot_dimension_numbers<[1], [1], [0], [0], [0, 0, 1, 0], [], []>} : vector<16x8xf32>, vector<16x8xf32>, vector<16x16xf32> -> vector<16x16xf32>
    "tpu.trace_stop"() : () -> ()
    %75 = arith.addf %71, %74 : vector<16x16xf32>
    %cst_33 = arith.constant 2.500000e-01 : f32
    %76 = vector.broadcast %cst_33 : f32 to vector<16x16xf32>
    %77 = arith.mulf %75, %76 : vector<16x16xf32>
    %78 = arith.addf %77, %1 : vector<16x16xf32>
    %cst_34 = arith.constant dense<0xFF800000> : vector<16xf32>
    %79 = vector.multi_reduction <maximumf>, %78, %cst_34 [1] : vector<16x16xf32> to vector<16xf32>
    %80 = vector.shape_cast %79 : vector<16xf32> to vector<16x1xf32>
    %81 = vector.broadcast %80 : vector<16x1xf32> to vector<16x16xf32>
    %82 = arith.subf %78, %81 : vector<16x16xf32>
    %83 = math.exp %82 : vector<16x16xf32>
    %cst_35 = arith.constant dense<0.000000e+00> : vector<16xf32>
    %84 = vector.multi_reduction <add>, %83, %cst_35 [1] : vector<16x16xf32> to vector<16xf32>
    %85 = vector.shape_cast %84 : vector<16xf32> to vector<16x1xf32>
    %86 = tpu.reciprocal %85 {approx = true} : vector<16x1xf32> -> vector<16x1xf32>
    %87 = vector.broadcast %86 : vector<16x1xf32> to vector<16x16xf32>
    %88 = arith.mulf %83, %87 : vector<16x16xf32>
    %89 = vector.extract_strided_slice %28 {offsets = [0, 0], sizes = [16, 16], strides = [1, 1]} : vector<16x32xf32> to vector<16x16xf32>
    "tpu.trace_start"() <{level = 10 : i32, message = "nm,md->nd"}> : () -> ()
    %cst_36 = arith.constant dense<0.000000e+00> : vector<16x16xf32>
    %90 = tpu.matmul %88, %89, %cst_36 {dimension_numbers = #tpu.dot_dimension_numbers<[1], [0], [0], [1], [0, 0, 1, 1], [], []>} : vector<16x16xf32>, vector<16x16xf32>, vector<16x16xf32> -> vector<16x16xf32>
    "tpu.trace_stop"() : () -> ()
    %91 = vector.extract_strided_slice %42 {offsets = [16, 0], sizes = [16, 64], strides = [1, 1]} : vector<64x64xf32> to vector<16x64xf32>
    %cst_37 = arith.constant dense<0.000000e+00> : vector<16x64xf32>
    %92 = tpu.matmul %90, %91, %cst_37 {dimension_numbers = #tpu.dot_dimension_numbers<[1], [0], [0], [1], [0, 0, 1, 1], [], []>} : vector<16x16xf32>, vector<16x64xf32>, vector<16x64xf32> -> vector<16x64xf32>
    %93 = arith.addf %68, %92 : vector<16x64xf32>
    %94 = vector.extract_strided_slice %31 {offsets = [0, 16], sizes = [16, 8], strides = [1, 1]} : vector<16x32xf32> to vector<16x8xf32>
    %95 = vector.extract_strided_slice %37 {offsets = [0, 8], sizes = [16, 8], strides = [1, 1]} : vector<16x16xf32> to vector<16x8xf32>
    "tpu.trace_start"() <{level = 10 : i32, message = "nd,md->nm"}> : () -> ()
    %cst_38 = arith.constant dense<0.000000e+00> : vector<16x16xf32>
    %96 = tpu.matmul %94, %95, %cst_38 {dimension_numbers = #tpu.dot_dimension_numbers<[1], [1], [0], [0], [0, 0, 1, 0], [], []>} : vector<16x8xf32>, vector<16x8xf32>, vector<16x16xf32> -> vector<16x16xf32>
    "tpu.trace_stop"() : () -> ()
    %97 = vector.extract_strided_slice %34 {offsets = [0, 16], sizes = [16, 8], strides = [1, 1]} : vector<16x32xf32> to vector<16x8xf32>
    %98 = vector.extract_strided_slice %40 {offsets = [0, 8], sizes = [16, 8], strides = [1, 1]} : vector<16x16xf32> to vector<16x8xf32>
    "tpu.trace_start"() <{level = 10 : i32, message = "nd,md->nm"}> : () -> ()
    %cst_39 = arith.constant dense<0.000000e+00> : vector<16x16xf32>
    %99 = tpu.matmul %97, %98, %cst_39 {dimension_numbers = #tpu.dot_dimension_numbers<[1], [1], [0], [0], [0, 0, 1, 0], [], []>} : vector<16x8xf32>, vector<16x8xf32>, vector<16x16xf32> -> vector<16x16xf32>
    "tpu.trace_stop"() : () -> ()
    %100 = arith.addf %96, %99 : vector<16x16xf32>
    %cst_40 = arith.constant 2.500000e-01 : f32
    %101 = vector.broadcast %cst_40 : f32 to vector<16x16xf32>
    %102 = arith.mulf %100, %101 : vector<16x16xf32>
    %103 = arith.addf %102, %1 : vector<16x16xf32>
    %cst_41 = arith.constant dense<0xFF800000> : vector<16xf32>
    %104 = vector.multi_reduction <maximumf>, %103, %cst_41 [1] : vector<16x16xf32> to vector<16xf32>
    %105 = vector.shape_cast %104 : vector<16xf32> to vector<16x1xf32>
    %106 = vector.broadcast %105 : vector<16x1xf32> to vector<16x16xf32>
    %107 = arith.subf %103, %106 : vector<16x16xf32>
    %108 = math.exp %107 : vector<16x16xf32>
    %cst_42 = arith.constant dense<0.000000e+00> : vector<16xf32>
    %109 = vector.multi_reduction <add>, %108, %cst_42 [1] : vector<16x16xf32> to vector<16xf32>
    %110 = vector.shape_cast %109 : vector<16xf32> to vector<16x1xf32>
    %111 = tpu.reciprocal %110 {approx = true} : vector<16x1xf32> -> vector<16x1xf32>
    %112 = vector.broadcast %111 : vector<16x1xf32> to vector<16x16xf32>
    %113 = arith.mulf %108, %112 : vector<16x16xf32>
    %114 = vector.extract_strided_slice %28 {offsets = [0, 16], sizes = [16, 16], strides = [1, 1]} : vector<16x32xf32> to vector<16x16xf32>
    "tpu.trace_start"() <{level = 10 : i32, message = "nm,md->nd"}> : () -> ()
    %cst_43 = arith.constant dense<0.000000e+00> : vector<16x16xf32>
    %115 = tpu.matmul %113, %114, %cst_43 {dimension_numbers = #tpu.dot_dimension_numbers<[1], [0], [0], [1], [0, 0, 1, 1], [], []>} : vector<16x16xf32>, vector<16x16xf32>, vector<16x16xf32> -> vector<16x16xf32>
    "tpu.trace_stop"() : () -> ()
    %116 = vector.extract_strided_slice %42 {offsets = [32, 0], sizes = [16, 64], strides = [1, 1]} : vector<64x64xf32> to vector<16x64xf32>
    %cst_44 = arith.constant dense<0.000000e+00> : vector<16x64xf32>
    %117 = tpu.matmul %115, %116, %cst_44 {dimension_numbers = #tpu.dot_dimension_numbers<[1], [0], [0], [1], [0, 0, 1, 1], [], []>} : vector<16x16xf32>, vector<16x64xf32>, vector<16x64xf32> -> vector<16x64xf32>
    %118 = arith.addf %93, %117 : vector<16x64xf32>
    %119 = vector.extract_strided_slice %31 {offsets = [0, 24], sizes = [16, 8], strides = [1, 1]} : vector<16x32xf32> to vector<16x8xf32>
    %120 = vector.extract_strided_slice %37 {offsets = [0, 8], sizes = [16, 8], strides = [1, 1]} : vector<16x16xf32> to vector<16x8xf32>
    "tpu.trace_start"() <{level = 10 : i32, message = "nd,md->nm"}> : () -> ()
    %cst_45 = arith.constant dense<0.000000e+00> : vector<16x16xf32>
    %121 = tpu.matmul %119, %120, %cst_45 {dimension_numbers = #tpu.dot_dimension_numbers<[1], [1], [0], [0], [0, 0, 1, 0], [], []>} : vector<16x8xf32>, vector<16x8xf32>, vector<16x16xf32> -> vector<16x16xf32>
    "tpu.trace_stop"() : () -> ()
    %122 = vector.extract_strided_slice %34 {offsets = [0, 24], sizes = [16, 8], strides = [1, 1]} : vector<16x32xf32> to vector<16x8xf32>
    %123 = vector.extract_strided_slice %40 {offsets = [0, 8], sizes = [16, 8], strides = [1, 1]} : vector<16x16xf32> to vector<16x8xf32>
    "tpu.trace_start"() <{level = 10 : i32, message = "nd,md->nm"}> : () -> ()
    %cst_46 = arith.constant dense<0.000000e+00> : vector<16x16xf32>
    %124 = tpu.matmul %122, %123, %cst_46 {dimension_numbers = #tpu.dot_dimension_numbers<[1], [1], [0], [0], [0, 0, 1, 0], [], []>} : vector<16x8xf32>, vector<16x8xf32>, vector<16x16xf32> -> vector<16x16xf32>
    "tpu.trace_stop"() : () -> ()
    %125 = arith.addf %121, %124 : vector<16x16xf32>
    %cst_47 = arith.constant 2.500000e-01 : f32
    %126 = vector.broadcast %cst_47 : f32 to vector<16x16xf32>
    %127 = arith.mulf %125, %126 : vector<16x16xf32>
    %128 = arith.addf %127, %1 : vector<16x16xf32>
    %cst_48 = arith.constant dense<0xFF800000> : vector<16xf32>
    %129 = vector.multi_reduction <maximumf>, %128, %cst_48 [1] : vector<16x16xf32> to vector<16xf32>
    %130 = vector.shape_cast %129 : vector<16xf32> to vector<16x1xf32>
    %131 = vector.broadcast %130 : vector<16x1xf32> to vector<16x16xf32>
    %132 = arith.subf %128, %131 : vector<16x16xf32>
    %133 = math.exp %132 : vector<16x16xf32>
    %cst_49 = arith.constant dense<0.000000e+00> : vector<16xf32>
    %134 = vector.multi_reduction <add>, %133, %cst_49 [1] : vector<16x16xf32> to vector<16xf32>
    %135 = vector.shape_cast %134 : vector<16xf32> to vector<16x1xf32>
    %136 = tpu.reciprocal %135 {approx = true} : vector<16x1xf32> -> vector<16x1xf32>
    %137 = vector.broadcast %136 : vector<16x1xf32> to vector<16x16xf32>
    %138 = arith.mulf %133, %137 : vector<16x16xf32>
    %139 = vector.extract_strided_slice %28 {offsets = [0, 16], sizes = [16, 16], strides = [1, 1]} : vector<16x32xf32> to vector<16x16xf32>
    "tpu.trace_start"() <{level = 10 : i32, message = "nm,md->nd"}> : () -> ()
    %cst_50 = arith.constant dense<0.000000e+00> : vector<16x16xf32>
    %140 = tpu.matmul %138, %139, %cst_50 {dimension_numbers = #tpu.dot_dimension_numbers<[1], [0], [0], [1], [0, 0, 1, 1], [], []>} : vector<16x16xf32>, vector<16x16xf32>, vector<16x16xf32> -> vector<16x16xf32>
    "tpu.trace_stop"() : () -> ()
    %141 = vector.extract_strided_slice %42 {offsets = [48, 0], sizes = [16, 64], strides = [1, 1]} : vector<64x64xf32> to vector<16x64xf32>
    %cst_51 = arith.constant dense<0.000000e+00> : vector<16x64xf32>
    %142 = tpu.matmul %140, %141, %cst_51 {dimension_numbers = #tpu.dot_dimension_numbers<[1], [0], [0], [1], [0, 0, 1, 1], [], []>} : vector<16x16xf32>, vector<16x64xf32>, vector<16x64xf32> -> vector<16x64xf32>
    %143 = arith.addf %118, %142 : vector<16x64xf32>
    %144 = arith.addf %0, %143 : vector<16x64xf32>
    %c0_52 = arith.constant 0 : index
    %c0_53 = arith.constant 0 : index
    %c0_54 = arith.constant 0 : index
    %145 = vector.load %arg11[%c0_52, %c0_53, %c0_54] : memref<2x1x64xf32, #tpu.memory_space<vmem>>, vector<1x1x64xf32>
    %146 = vector.shape_cast %145 : vector<1x1x64xf32> to vector<1x64xf32>
    %147 = arith.mulf %144, %144 : vector<16x64xf32>
    %cst_55 = arith.constant dense<0.000000e+00> : vector<16xf32>
    %148 = vector.multi_reduction <add>, %147, %cst_55 [1] : vector<16x64xf32> to vector<16xf32>
    %149 = vector.shape_cast %148 : vector<16xf32> to vector<16x1xf32>
    %cst_56 = arith.constant 6.400000e+01 : f32
    %150 = vector.broadcast %cst_56 : f32 to vector<16x1xf32>
    %151 = arith.divf %149, %150 : vector<16x1xf32>
    %cst_57 = arith.constant 9.99999974E-6 : f32
    %152 = vector.broadcast %cst_57 : f32 to vector<16x1xf32>
    %153 = arith.addf %151, %152 : vector<16x1xf32>
    %154 = math.rsqrt %153 : vector<16x1xf32>
    %155 = vector.broadcast %154 : vector<16x1xf32> to vector<16x64xf32>
    %156 = arith.mulf %144, %155 : vector<16x64xf32>
    %157 = vector.broadcast %146 : vector<1x64xf32> to vector<16x64xf32>
    %158 = arith.mulf %156, %157 : vector<16x64xf32>
    %159 = arith.truncf %158 : vector<16x64xf32> to vector<16x64xbf16>
    %c0_58 = arith.constant 0 : index
    %c0_59 = arith.constant 0 : index
    %c0_60 = arith.constant 0 : index
    %160 = vector.load %arg12[%c0_58, %c0_59, %c0_60] : memref<2x64x256xbf16, #tpu.memory_space<vmem>>, vector<1x64x256xbf16>
    %161 = vector.shape_cast %160 : vector<1x64x256xbf16> to vector<64x256xbf16>
    %cst_61 = arith.constant dense<0.000000e+00> : vector<16x256xf32>
    %162 = tpu.matmul %159, %161, %cst_61 {dimension_numbers = #tpu.dot_dimension_numbers<[1], [0], [0], [1], [0, 0, 1, 1], [], []>} : vector<16x64xbf16>, vector<64x256xbf16>, vector<16x256xf32> -> vector<16x256xf32>
    %163 = vector.extract_strided_slice %162 {offsets = [0, 0], sizes = [16, 128], strides = [1, 1]} : vector<16x256xf32> to vector<16x128xf32>
    %164 = vector.extract_strided_slice %162 {offsets = [0, 128], sizes = [16, 128], strides = [1, 1]} : vector<16x256xf32> to vector<16x128xf32>
    %165 = arith.negf %163 : vector<16x128xf32>
    %166 = math.exp %165 : vector<16x128xf32>
    %cst_62 = arith.constant 1.000000e+00 : f32
    %167 = vector.broadcast %cst_62 : f32 to vector<16x128xf32>
    %168 = arith.addf %167, %166 : vector<16x128xf32>
    %169 = arith.divf %167, %168 : vector<16x128xf32>
    %170 = arith.mulf %163, %169 : vector<16x128xf32>
    %171 = arith.mulf %170, %164 : vector<16x128xf32>
    %172 = arith.truncf %171 : vector<16x128xf32> to vector<16x128xbf16>
    %c0_63 = arith.constant 0 : index
    %c0_64 = arith.constant 0 : index
    %c0_65 = arith.constant 0 : index
    %173 = vector.load %arg13[%c0_63, %c0_64, %c0_65] : memref<2x128x64xbf16, #tpu.memory_space<vmem>>, vector<1x128x64xbf16>
    %174 = vector.shape_cast %173 : vector<1x128x64xbf16> to vector<128x64xbf16>
    %cst_66 = arith.constant dense<0.000000e+00> : vector<16x64xf32>
    %175 = tpu.matmul %172, %174, %cst_66 {dimension_numbers = #tpu.dot_dimension_numbers<[1], [0], [0], [1], [0, 0, 1, 1], [], []>} : vector<16x128xbf16>, vector<128x64xbf16>, vector<16x64xf32> -> vector<16x64xf32>
    %176 = arith.addf %144, %175 : vector<16x64xf32>
    %c1 = arith.constant 1 : index
    %c0_67 = arith.constant 0 : index
    %c0_68 = arith.constant 0 : index
    %177 = vector.load %arg8[%c1, %c0_67, %c0_68] : memref<2x1x64xf32, #tpu.memory_space<vmem>>, vector<1x1x64xf32>
    %178 = vector.shape_cast %177 : vector<1x1x64xf32> to vector<1x64xf32>
    %179 = arith.mulf %176, %176 : vector<16x64xf32>
    %cst_69 = arith.constant dense<0.000000e+00> : vector<16xf32>
    %180 = vector.multi_reduction <add>, %179, %cst_69 [1] : vector<16x64xf32> to vector<16xf32>
    %181 = vector.shape_cast %180 : vector<16xf32> to vector<16x1xf32>
    %cst_70 = arith.constant 6.400000e+01 : f32
    %182 = vector.broadcast %cst_70 : f32 to vector<16x1xf32>
    %183 = arith.divf %181, %182 : vector<16x1xf32>
    %cst_71 = arith.constant 9.99999974E-6 : f32
    %184 = vector.broadcast %cst_71 : f32 to vector<16x1xf32>
    %185 = arith.addf %183, %184 : vector<16x1xf32>
    %186 = math.rsqrt %185 : vector<16x1xf32>
    %187 = vector.broadcast %186 : vector<16x1xf32> to vector<16x64xf32>
    %188 = arith.mulf %176, %187 : vector<16x64xf32>
    %189 = vector.broadcast %178 : vector<1x64xf32> to vector<16x64xf32>
    %190 = arith.mulf %188, %189 : vector<16x64xf32>
    %191 = arith.truncf %190 : vector<16x64xf32> to vector<16x64xbf16>
    %c1_72 = arith.constant 1 : index
    %c0_73 = arith.constant 0 : index
    %c0_74 = arith.constant 0 : index
    %192 = vector.load %arg9[%c1_72, %c0_73, %c0_74] : memref<2x64x128xbf16, #tpu.memory_space<vmem>>, vector<1x64x128xbf16>
    %193 = vector.shape_cast %192 : vector<1x64x128xbf16> to vector<64x128xbf16>
    %cst_75 = arith.constant dense<0.000000e+00> : vector<16x128xf32>
    %194 = tpu.matmul %191, %193, %cst_75 {dimension_numbers = #tpu.dot_dimension_numbers<[1], [0], [0], [1], [0, 0, 1, 1], [], []>} : vector<16x64xbf16>, vector<64x128xbf16>, vector<16x128xf32> -> vector<16x128xf32>
    %195 = vector.extract_strided_slice %194 {offsets = [0, 0], sizes = [16, 32], strides = [1, 1]} : vector<16x128xf32> to vector<16x32xf32>
    %196 = vector.extract_strided_slice %194 {offsets = [0, 32], sizes = [16, 32], strides = [1, 1]} : vector<16x128xf32> to vector<16x32xf32>
    %197 = vector.extract_strided_slice %194 {offsets = [0, 64], sizes = [16, 16], strides = [1, 1]} : vector<16x128xf32> to vector<16x16xf32>
    %198 = vector.extract_strided_slice %194 {offsets = [0, 80], sizes = [16, 16], strides = [1, 1]} : vector<16x128xf32> to vector<16x16xf32>
    %199 = vector.extract_strided_slice %194 {offsets = [0, 96], sizes = [16, 32], strides = [1, 1]} : vector<16x128xf32> to vector<16x32xf32>
    %200 = arith.mulf %195, %2 : vector<16x32xf32>
    %201 = arith.mulf %196, %3 : vector<16x32xf32>
    %202 = arith.subf %200, %201 : vector<16x32xf32>
    %203 = arith.mulf %195, %3 : vector<16x32xf32>
    %204 = arith.mulf %196, %2 : vector<16x32xf32>
    %205 = arith.addf %203, %204 : vector<16x32xf32>
    %206 = arith.mulf %197, %4 : vector<16x16xf32>
    %207 = arith.mulf %198, %5 : vector<16x16xf32>
    %208 = arith.subf %206, %207 : vector<16x16xf32>
    %209 = arith.mulf %197, %5 : vector<16x16xf32>
    %210 = arith.mulf %198, %4 : vector<16x16xf32>
    %211 = arith.addf %209, %210 : vector<16x16xf32>
    %c1_76 = arith.constant 1 : index
    %c0_77 = arith.constant 0 : index
    %c0_78 = arith.constant 0 : index
    %212 = vector.load %arg10[%c1_76, %c0_77, %c0_78] : memref<2x64x64xf32, #tpu.memory_space<vmem>>, vector<1x64x64xf32>
    %213 = vector.shape_cast %212 : vector<1x64x64xf32> to vector<64x64xf32>
    %cst_79 = arith.constant 0.000000e+00 : f32
    %214 = vector.broadcast %cst_79 : f32 to vector<16x64xf32>
    %215 = vector.extract_strided_slice %202 {offsets = [0, 0], sizes = [16, 8], strides = [1, 1]} : vector<16x32xf32> to vector<16x8xf32>
    %216 = vector.extract_strided_slice %208 {offsets = [0, 0], sizes = [16, 8], strides = [1, 1]} : vector<16x16xf32> to vector<16x8xf32>
    "tpu.trace_start"() <{level = 10 : i32, message = "nd,md->nm"}> : () -> ()
    %cst_80 = arith.constant dense<0.000000e+00> : vector<16x16xf32>
    %217 = tpu.matmul %215, %216, %cst_80 {dimension_numbers = #tpu.dot_dimension_numbers<[1], [1], [0], [0], [0, 0, 1, 0], [], []>} : vector<16x8xf32>, vector<16x8xf32>, vector<16x16xf32> -> vector<16x16xf32>
    "tpu.trace_stop"() : () -> ()
    %218 = vector.extract_strided_slice %205 {offsets = [0, 0], sizes = [16, 8], strides = [1, 1]} : vector<16x32xf32> to vector<16x8xf32>
    %219 = vector.extract_strided_slice %211 {offsets = [0, 0], sizes = [16, 8], strides = [1, 1]} : vector<16x16xf32> to vector<16x8xf32>
    "tpu.trace_start"() <{level = 10 : i32, message = "nd,md->nm"}> : () -> ()
    %cst_81 = arith.constant dense<0.000000e+00> : vector<16x16xf32>
    %220 = tpu.matmul %218, %219, %cst_81 {dimension_numbers = #tpu.dot_dimension_numbers<[1], [1], [0], [0], [0, 0, 1, 0], [], []>} : vector<16x8xf32>, vector<16x8xf32>, vector<16x16xf32> -> vector<16x16xf32>
    "tpu.trace_stop"() : () -> ()
    %221 = arith.addf %217, %220 : vector<16x16xf32>
    %cst_82 = arith.constant 2.500000e-01 : f32
    %222 = vector.broadcast %cst_82 : f32 to vector<16x16xf32>
    %223 = arith.mulf %221, %222 : vector<16x16xf32>
    %224 = arith.addf %223, %1 : vector<16x16xf32>
    %cst_83 = arith.constant dense<0xFF800000> : vector<16xf32>
    %225 = vector.multi_reduction <maximumf>, %224, %cst_83 [1] : vector<16x16xf32> to vector<16xf32>
    %226 = vector.shape_cast %225 : vector<16xf32> to vector<16x1xf32>
    %227 = vector.broadcast %226 : vector<16x1xf32> to vector<16x16xf32>
    %228 = arith.subf %224, %227 : vector<16x16xf32>
    %229 = math.exp %228 : vector<16x16xf32>
    %cst_84 = arith.constant dense<0.000000e+00> : vector<16xf32>
    %230 = vector.multi_reduction <add>, %229, %cst_84 [1] : vector<16x16xf32> to vector<16xf32>
    %231 = vector.shape_cast %230 : vector<16xf32> to vector<16x1xf32>
    %232 = tpu.reciprocal %231 {approx = true} : vector<16x1xf32> -> vector<16x1xf32>
    %233 = vector.broadcast %232 : vector<16x1xf32> to vector<16x16xf32>
    %234 = arith.mulf %229, %233 : vector<16x16xf32>
    %235 = vector.extract_strided_slice %199 {offsets = [0, 0], sizes = [16, 16], strides = [1, 1]} : vector<16x32xf32> to vector<16x16xf32>
    "tpu.trace_start"() <{level = 10 : i32, message = "nm,md->nd"}> : () -> ()
    %cst_85 = arith.constant dense<0.000000e+00> : vector<16x16xf32>
    %236 = tpu.matmul %234, %235, %cst_85 {dimension_numbers = #tpu.dot_dimension_numbers<[1], [0], [0], [1], [0, 0, 1, 1], [], []>} : vector<16x16xf32>, vector<16x16xf32>, vector<16x16xf32> -> vector<16x16xf32>
    "tpu.trace_stop"() : () -> ()
    %237 = vector.extract_strided_slice %213 {offsets = [0, 0], sizes = [16, 64], strides = [1, 1]} : vector<64x64xf32> to vector<16x64xf32>
    %cst_86 = arith.constant dense<0.000000e+00> : vector<16x64xf32>
    %238 = tpu.matmul %236, %237, %cst_86 {dimension_numbers = #tpu.dot_dimension_numbers<[1], [0], [0], [1], [0, 0, 1, 1], [], []>} : vector<16x16xf32>, vector<16x64xf32>, vector<16x64xf32> -> vector<16x64xf32>
    %239 = arith.addf %214, %238 : vector<16x64xf32>
    %240 = vector.extract_strided_slice %202 {offsets = [0, 8], sizes = [16, 8], strides = [1, 1]} : vector<16x32xf32> to vector<16x8xf32>
    %241 = vector.extract_strided_slice %208 {offsets = [0, 0], sizes = [16, 8], strides = [1, 1]} : vector<16x16xf32> to vector<16x8xf32>
    "tpu.trace_start"() <{level = 10 : i32, message = "nd,md->nm"}> : () -> ()
    %cst_87 = arith.constant dense<0.000000e+00> : vector<16x16xf32>
    %242 = tpu.matmul %240, %241, %cst_87 {dimension_numbers = #tpu.dot_dimension_numbers<[1], [1], [0], [0], [0, 0, 1, 0], [], []>} : vector<16x8xf32>, vector<16x8xf32>, vector<16x16xf32> -> vector<16x16xf32>
    "tpu.trace_stop"() : () -> ()
    %243 = vector.extract_strided_slice %205 {offsets = [0, 8], sizes = [16, 8], strides = [1, 1]} : vector<16x32xf32> to vector<16x8xf32>
    %244 = vector.extract_strided_slice %211 {offsets = [0, 0], sizes = [16, 8], strides = [1, 1]} : vector<16x16xf32> to vector<16x8xf32>
    "tpu.trace_start"() <{level = 10 : i32, message = "nd,md->nm"}> : () -> ()
    %cst_88 = arith.constant dense<0.000000e+00> : vector<16x16xf32>
    %245 = tpu.matmul %243, %244, %cst_88 {dimension_numbers = #tpu.dot_dimension_numbers<[1], [1], [0], [0], [0, 0, 1, 0], [], []>} : vector<16x8xf32>, vector<16x8xf32>, vector<16x16xf32> -> vector<16x16xf32>
    "tpu.trace_stop"() : () -> ()
    %246 = arith.addf %242, %245 : vector<16x16xf32>
    %cst_89 = arith.constant 2.500000e-01 : f32
    %247 = vector.broadcast %cst_89 : f32 to vector<16x16xf32>
    %248 = arith.mulf %246, %247 : vector<16x16xf32>
    %249 = arith.addf %248, %1 : vector<16x16xf32>
    %cst_90 = arith.constant dense<0xFF800000> : vector<16xf32>
    %250 = vector.multi_reduction <maximumf>, %249, %cst_90 [1] : vector<16x16xf32> to vector<16xf32>
    %251 = vector.shape_cast %250 : vector<16xf32> to vector<16x1xf32>
    %252 = vector.broadcast %251 : vector<16x1xf32> to vector<16x16xf32>
    %253 = arith.subf %249, %252 : vector<16x16xf32>
    %254 = math.exp %253 : vector<16x16xf32>
    %cst_91 = arith.constant dense<0.000000e+00> : vector<16xf32>
    %255 = vector.multi_reduction <add>, %254, %cst_91 [1] : vector<16x16xf32> to vector<16xf32>
    %256 = vector.shape_cast %255 : vector<16xf32> to vector<16x1xf32>
    %257 = tpu.reciprocal %256 {approx = true} : vector<16x1xf32> -> vector<16x1xf32>
    %258 = vector.broadcast %257 : vector<16x1xf32> to vector<16x16xf32>
    %259 = arith.mulf %254, %258 : vector<16x16xf32>
    %260 = vector.extract_strided_slice %199 {offsets = [0, 0], sizes = [16, 16], strides = [1, 1]} : vector<16x32xf32> to vector<16x16xf32>
    "tpu.trace_start"() <{level = 10 : i32, message = "nm,md->nd"}> : () -> ()
    %cst_92 = arith.constant dense<0.000000e+00> : vector<16x16xf32>
    %261 = tpu.matmul %259, %260, %cst_92 {dimension_numbers = #tpu.dot_dimension_numbers<[1], [0], [0], [1], [0, 0, 1, 1], [], []>} : vector<16x16xf32>, vector<16x16xf32>, vector<16x16xf32> -> vector<16x16xf32>
    "tpu.trace_stop"() : () -> ()
    %262 = vector.extract_strided_slice %213 {offsets = [16, 0], sizes = [16, 64], strides = [1, 1]} : vector<64x64xf32> to vector<16x64xf32>
    %cst_93 = arith.constant dense<0.000000e+00> : vector<16x64xf32>
    %263 = tpu.matmul %261, %262, %cst_93 {dimension_numbers = #tpu.dot_dimension_numbers<[1], [0], [0], [1], [0, 0, 1, 1], [], []>} : vector<16x16xf32>, vector<16x64xf32>, vector<16x64xf32> -> vector<16x64xf32>
    %264 = arith.addf %239, %263 : vector<16x64xf32>
    %265 = vector.extract_strided_slice %202 {offsets = [0, 16], sizes = [16, 8], strides = [1, 1]} : vector<16x32xf32> to vector<16x8xf32>
    %266 = vector.extract_strided_slice %208 {offsets = [0, 8], sizes = [16, 8], strides = [1, 1]} : vector<16x16xf32> to vector<16x8xf32>
    "tpu.trace_start"() <{level = 10 : i32, message = "nd,md->nm"}> : () -> ()
    %cst_94 = arith.constant dense<0.000000e+00> : vector<16x16xf32>
    %267 = tpu.matmul %265, %266, %cst_94 {dimension_numbers = #tpu.dot_dimension_numbers<[1], [1], [0], [0], [0, 0, 1, 0], [], []>} : vector<16x8xf32>, vector<16x8xf32>, vector<16x16xf32> -> vector<16x16xf32>
    "tpu.trace_stop"() : () -> ()
    %268 = vector.extract_strided_slice %205 {offsets = [0, 16], sizes = [16, 8], strides = [1, 1]} : vector<16x32xf32> to vector<16x8xf32>
    %269 = vector.extract_strided_slice %211 {offsets = [0, 8], sizes = [16, 8], strides = [1, 1]} : vector<16x16xf32> to vector<16x8xf32>
    "tpu.trace_start"() <{level = 10 : i32, message = "nd,md->nm"}> : () -> ()
    %cst_95 = arith.constant dense<0.000000e+00> : vector<16x16xf32>
    %270 = tpu.matmul %268, %269, %cst_95 {dimension_numbers = #tpu.dot_dimension_numbers<[1], [1], [0], [0], [0, 0, 1, 0], [], []>} : vector<16x8xf32>, vector<16x8xf32>, vector<16x16xf32> -> vector<16x16xf32>
    "tpu.trace_stop"() : () -> ()
    %271 = arith.addf %267, %270 : vector<16x16xf32>
    %cst_96 = arith.constant 2.500000e-01 : f32
    %272 = vector.broadcast %cst_96 : f32 to vector<16x16xf32>
    %273 = arith.mulf %271, %272 : vector<16x16xf32>
    %274 = arith.addf %273, %1 : vector<16x16xf32>
    %cst_97 = arith.constant dense<0xFF800000> : vector<16xf32>
    %275 = vector.multi_reduction <maximumf>, %274, %cst_97 [1] : vector<16x16xf32> to vector<16xf32>
    %276 = vector.shape_cast %275 : vector<16xf32> to vector<16x1xf32>
    %277 = vector.broadcast %276 : vector<16x1xf32> to vector<16x16xf32>
    %278 = arith.subf %274, %277 : vector<16x16xf32>
    %279 = math.exp %278 : vector<16x16xf32>
    %cst_98 = arith.constant dense<0.000000e+00> : vector<16xf32>
    %280 = vector.multi_reduction <add>, %279, %cst_98 [1] : vector<16x16xf32> to vector<16xf32>
    %281 = vector.shape_cast %280 : vector<16xf32> to vector<16x1xf32>
    %282 = tpu.reciprocal %281 {approx = true} : vector<16x1xf32> -> vector<16x1xf32>
    %283 = vector.broadcast %282 : vector<16x1xf32> to vector<16x16xf32>
    %284 = arith.mulf %279, %283 : vector<16x16xf32>
    %285 = vector.extract_strided_slice %199 {offsets = [0, 16], sizes = [16, 16], strides = [1, 1]} : vector<16x32xf32> to vector<16x16xf32>
    "tpu.trace_start"() <{level = 10 : i32, message = "nm,md->nd"}> : () -> ()
    %cst_99 = arith.constant dense<0.000000e+00> : vector<16x16xf32>
    %286 = tpu.matmul %284, %285, %cst_99 {dimension_numbers = #tpu.dot_dimension_numbers<[1], [0], [0], [1], [0, 0, 1, 1], [], []>} : vector<16x16xf32>, vector<16x16xf32>, vector<16x16xf32> -> vector<16x16xf32>
    "tpu.trace_stop"() : () -> ()
    %287 = vector.extract_strided_slice %213 {offsets = [32, 0], sizes = [16, 64], strides = [1, 1]} : vector<64x64xf32> to vector<16x64xf32>
    %cst_100 = arith.constant dense<0.000000e+00> : vector<16x64xf32>
    %288 = tpu.matmul %286, %287, %cst_100 {dimension_numbers = #tpu.dot_dimension_numbers<[1], [0], [0], [1], [0, 0, 1, 1], [], []>} : vector<16x16xf32>, vector<16x64xf32>, vector<16x64xf32> -> vector<16x64xf32>
    %289 = arith.addf %264, %288 : vector<16x64xf32>
    %290 = vector.extract_strided_slice %202 {offsets = [0, 24], sizes = [16, 8], strides = [1, 1]} : vector<16x32xf32> to vector<16x8xf32>
    %291 = vector.extract_strided_slice %208 {offsets = [0, 8], sizes = [16, 8], strides = [1, 1]} : vector<16x16xf32> to vector<16x8xf32>
    "tpu.trace_start"() <{level = 10 : i32, message = "nd,md->nm"}> : () -> ()
    %cst_101 = arith.constant dense<0.000000e+00> : vector<16x16xf32>
    %292 = tpu.matmul %290, %291, %cst_101 {dimension_numbers = #tpu.dot_dimension_numbers<[1], [1], [0], [0], [0, 0, 1, 0], [], []>} : vector<16x8xf32>, vector<16x8xf32>, vector<16x16xf32> -> vector<16x16xf32>
    "tpu.trace_stop"() : () -> ()
    %293 = vector.extract_strided_slice %205 {offsets = [0, 24], sizes = [16, 8], strides = [1, 1]} : vector<16x32xf32> to vector<16x8xf32>
    %294 = vector.extract_strided_slice %211 {offsets = [0, 8], sizes = [16, 8], strides = [1, 1]} : vector<16x16xf32> to vector<16x8xf32>
    "tpu.trace_start"() <{level = 10 : i32, message = "nd,md->nm"}> : () -> ()
    %cst_102 = arith.constant dense<0.000000e+00> : vector<16x16xf32>
    %295 = tpu.matmul %293, %294, %cst_102 {dimension_numbers = #tpu.dot_dimension_numbers<[1], [1], [0], [0], [0, 0, 1, 0], [], []>} : vector<16x8xf32>, vector<16x8xf32>, vector<16x16xf32> -> vector<16x16xf32>
    "tpu.trace_stop"() : () -> ()
    %296 = arith.addf %292, %295 : vector<16x16xf32>
    %cst_103 = arith.constant 2.500000e-01 : f32
    %297 = vector.broadcast %cst_103 : f32 to vector<16x16xf32>
    %298 = arith.mulf %296, %297 : vector<16x16xf32>
    %299 = arith.addf %298, %1 : vector<16x16xf32>
    %cst_104 = arith.constant dense<0xFF800000> : vector<16xf32>
    %300 = vector.multi_reduction <maximumf>, %299, %cst_104 [1] : vector<16x16xf32> to vector<16xf32>
    %301 = vector.shape_cast %300 : vector<16xf32> to vector<16x1xf32>
    %302 = vector.broadcast %301 : vector<16x1xf32> to vector<16x16xf32>
    %303 = arith.subf %299, %302 : vector<16x16xf32>
    %304 = math.exp %303 : vector<16x16xf32>
    %cst_105 = arith.constant dense<0.000000e+00> : vector<16xf32>
    %305 = vector.multi_reduction <add>, %304, %cst_105 [1] : vector<16x16xf32> to vector<16xf32>
    %306 = vector.shape_cast %305 : vector<16xf32> to vector<16x1xf32>
    %307 = tpu.reciprocal %306 {approx = true} : vector<16x1xf32> -> vector<16x1xf32>
    %308 = vector.broadcast %307 : vector<16x1xf32> to vector<16x16xf32>
    %309 = arith.mulf %304, %308 : vector<16x16xf32>
    %310 = vector.extract_strided_slice %199 {offsets = [0, 16], sizes = [16, 16], strides = [1, 1]} : vector<16x32xf32> to vector<16x16xf32>
    "tpu.trace_start"() <{level = 10 : i32, message = "nm,md->nd"}> : () -> ()
    %cst_106 = arith.constant dense<0.000000e+00> : vector<16x16xf32>
    %311 = tpu.matmul %309, %310, %cst_106 {dimension_numbers = #tpu.dot_dimension_numbers<[1], [0], [0], [1], [0, 0, 1, 1], [], []>} : vector<16x16xf32>, vector<16x16xf32>, vector<16x16xf32> -> vector<16x16xf32>
    "tpu.trace_stop"() : () -> ()
    %312 = vector.extract_strided_slice %213 {offsets = [48, 0], sizes = [16, 64], strides = [1, 1]} : vector<64x64xf32> to vector<16x64xf32>
    %cst_107 = arith.constant dense<0.000000e+00> : vector<16x64xf32>
    %313 = tpu.matmul %311, %312, %cst_107 {dimension_numbers = #tpu.dot_dimension_numbers<[1], [0], [0], [1], [0, 0, 1, 1], [], []>} : vector<16x16xf32>, vector<16x64xf32>, vector<16x64xf32> -> vector<16x64xf32>
    %314 = arith.addf %289, %313 : vector<16x64xf32>
    %315 = arith.addf %176, %314 : vector<16x64xf32>
    %c1_108 = arith.constant 1 : index
    %c0_109 = arith.constant 0 : index
    %c0_110 = arith.constant 0 : index
    %316 = vector.load %arg11[%c1_108, %c0_109, %c0_110] : memref<2x1x64xf32, #tpu.memory_space<vmem>>, vector<1x1x64xf32>
    %317 = vector.shape_cast %316 : vector<1x1x64xf32> to vector<1x64xf32>
    %318 = arith.mulf %315, %315 : vector<16x64xf32>
    %cst_111 = arith.constant dense<0.000000e+00> : vector<16xf32>
    %319 = vector.multi_reduction <add>, %318, %cst_111 [1] : vector<16x64xf32> to vector<16xf32>
    %320 = vector.shape_cast %319 : vector<16xf32> to vector<16x1xf32>
    %cst_112 = arith.constant 6.400000e+01 : f32
    %321 = vector.broadcast %cst_112 : f32 to vector<16x1xf32>
    %322 = arith.divf %320, %321 : vector<16x1xf32>
    %cst_113 = arith.constant 9.99999974E-6 : f32
    %323 = vector.broadcast %cst_113 : f32 to vector<16x1xf32>
    %324 = arith.addf %322, %323 : vector<16x1xf32>
    %325 = math.rsqrt %324 : vector<16x1xf32>
    %326 = vector.broadcast %325 : vector<16x1xf32> to vector<16x64xf32>
    %327 = arith.mulf %315, %326 : vector<16x64xf32>
    %328 = vector.broadcast %317 : vector<1x64xf32> to vector<16x64xf32>
    %329 = arith.mulf %327, %328 : vector<16x64xf32>
    %330 = arith.truncf %329 : vector<16x64xf32> to vector<16x64xbf16>
    %c1_114 = arith.constant 1 : index
    %c0_115 = arith.constant 0 : index
    %c0_116 = arith.constant 0 : index
    %331 = vector.load %arg12[%c1_114, %c0_115, %c0_116] : memref<2x64x256xbf16, #tpu.memory_space<vmem>>, vector<1x64x256xbf16>
    %332 = vector.shape_cast %331 : vector<1x64x256xbf16> to vector<64x256xbf16>
    %cst_117 = arith.constant dense<0.000000e+00> : vector<16x256xf32>
    %333 = tpu.matmul %330, %332, %cst_117 {dimension_numbers = #tpu.dot_dimension_numbers<[1], [0], [0], [1], [0, 0, 1, 1], [], []>} : vector<16x64xbf16>, vector<64x256xbf16>, vector<16x256xf32> -> vector<16x256xf32>
    %334 = vector.extract_strided_slice %333 {offsets = [0, 0], sizes = [16, 128], strides = [1, 1]} : vector<16x256xf32> to vector<16x128xf32>
    %335 = vector.extract_strided_slice %333 {offsets = [0, 128], sizes = [16, 128], strides = [1, 1]} : vector<16x256xf32> to vector<16x128xf32>
    %336 = arith.negf %334 : vector<16x128xf32>
    %337 = math.exp %336 : vector<16x128xf32>
    %cst_118 = arith.constant 1.000000e+00 : f32
    %338 = vector.broadcast %cst_118 : f32 to vector<16x128xf32>
    %339 = arith.addf %338, %337 : vector<16x128xf32>
    %340 = arith.divf %338, %339 : vector<16x128xf32>
    %341 = arith.mulf %334, %340 : vector<16x128xf32>
    %342 = arith.mulf %341, %335 : vector<16x128xf32>
    %343 = arith.truncf %342 : vector<16x128xf32> to vector<16x128xbf16>
    %c1_119 = arith.constant 1 : index
    %c0_120 = arith.constant 0 : index
    %c0_121 = arith.constant 0 : index
    %344 = vector.load %arg13[%c1_119, %c0_120, %c0_121] : memref<2x128x64xbf16, #tpu.memory_space<vmem>>, vector<1x128x64xbf16>
    %345 = vector.shape_cast %344 : vector<1x128x64xbf16> to vector<128x64xbf16>
    %cst_122 = arith.constant dense<0.000000e+00> : vector<16x64xf32>
    %346 = tpu.matmul %343, %345, %cst_122 {dimension_numbers = #tpu.dot_dimension_numbers<[1], [0], [0], [1], [0, 0, 1, 1], [], []>} : vector<16x128xbf16>, vector<128x64xbf16>, vector<16x64xf32> -> vector<16x64xf32>
    %347 = arith.addf %315, %346 : vector<16x64xf32>
    %c0_123 = arith.constant 0 : index
    %c0_124 = arith.constant 0 : index
    %348 = vector.load %arg6[%c0_123, %c0_124] : memref<1x64xf32, #tpu.memory_space<vmem>>, vector<1x64xf32>
    %349 = arith.mulf %347, %347 : vector<16x64xf32>
    %cst_125 = arith.constant dense<0.000000e+00> : vector<16xf32>
    %350 = vector.multi_reduction <add>, %349, %cst_125 [1] : vector<16x64xf32> to vector<16xf32>
    %351 = vector.shape_cast %350 : vector<16xf32> to vector<16x1xf32>
    %cst_126 = arith.constant 6.400000e+01 : f32
    %352 = vector.broadcast %cst_126 : f32 to vector<16x1xf32>
    %353 = arith.divf %351, %352 : vector<16x1xf32>
    %cst_127 = arith.constant 9.99999974E-6 : f32
    %354 = vector.broadcast %cst_127 : f32 to vector<16x1xf32>
    %355 = arith.addf %353, %354 : vector<16x1xf32>
    %356 = math.rsqrt %355 : vector<16x1xf32>
    %357 = vector.broadcast %356 : vector<16x1xf32> to vector<16x64xf32>
    %358 = arith.mulf %347, %357 : vector<16x64xf32>
    %359 = vector.broadcast %348 : vector<1x64xf32> to vector<16x64xf32>
    %360 = arith.mulf %358, %359 : vector<16x64xf32>
    %361 = arith.truncf %360 : vector<16x64xf32> to vector<16x64xbf16>
    %c0_128 = arith.constant 0 : index
    %c0_129 = arith.constant 0 : index
    %362 = vector.load %arg7[%c0_128, %c0_129] : memref<64x256xbf16, #tpu.memory_space<vmem>>, vector<64x256xbf16>
    %cst_130 = arith.constant dense<0.000000e+00> : vector<16x256xf32>
    %363 = tpu.matmul %361, %362, %cst_130 {dimension_numbers = #tpu.dot_dimension_numbers<[1], [0], [0], [1], [0, 0, 1, 1], [], []>} : vector<16x64xbf16>, vector<64x256xbf16>, vector<16x256xf32> -> vector<16x256xf32>
    %c0_131 = arith.constant 0 : index
    %c0_132 = arith.constant 0 : index
    %364 = vector.load %arg14[%c0_131, %c0_132] : memref<16x256xf32, #tpu.memory_space<vmem>>, vector<16x256xf32>
    tpu.vector_store %arg14[%c0_131, %c0_132], %363 {strides = array<i32>} : memref<16x256xf32, #tpu.memory_space<vmem>>, vector<16x256xf32>,
    return
  }
}

</mosaic_0001>

<llo_original>
// kernel: tpu_custom_call.1
$region0: #{tpu_custom_call.1}
  #allocation0 [shape = 'u32[]', space=smem, size = 0x4, offset = 0x4, fixed_abs, tag = 'smem constant byte address 0x4 - core index']
  #allocation1 [shape = 'u32[144,128]{1,0:T(1,128)}', space=vmem, size = 0x12000, scoped, tag = 'internal scratch']
  %s0 = inlined_call_operand.vmem [shape: f32[16,64], index: 0, kind: input, shape index: {}]
  %s1 = inlined_call_operand.vmem [shape: f32[16,16], index: 1, kind: input, shape index: {}]
  %s2 = inlined_call_operand.hbm [shape: f32[16,32], index: 2, kind: input, shape index: {}]
  %s3 = inlined_call_operand.hbm [shape: f32[16,32], index: 3, kind: input, shape index: {}]
  %s4 = inlined_call_operand.hbm [shape: f32[16,16], index: 4, kind: input, shape index: {}]
  %s5 = inlined_call_operand.hbm [shape: f32[16,16], index: 5, kind: input, shape index: {}]
  %s6 = inlined_call_operand.vmem [shape: f32[1,64], index: 6, kind: input, shape index: {}]
  %s7 = inlined_call_operand.vmem [shape: bf16[64,256], index: 7, kind: input, shape index: {}]
  %s8 = inlined_call_operand.vmem [shape: f32[2,1,64], index: 8, kind: input, shape index: {}]
  %s9 = inlined_call_operand.hbm [shape: bf16[2,64,128], index: 9, kind: input, shape index: {}]
  %s10 = inlined_call_operand.vmem [shape: f32[2,64,64], index: 10, kind: input, shape index: {}]
  %s11 = inlined_call_operand.vmem [shape: f32[2,1,64], index: 11, kind: input, shape index: {}]
  %s12 = inlined_call_operand.hbm [shape: bf16[2,64,256], index: 12, kind: input, shape index: {}]
  %s13 = inlined_call_operand.vmem [shape: bf16[2,128,64], index: 13, kind: input, shape index: {}]
  %s14 = inlined_call_operand.hbm [shape: f32[16,256], index: 14, kind: output, shape index: {}]
  %s15 = sld [smem:[#allocation0]]
  $region90: #{tpu_custom_call.1} parent=0
    _
  %s17 = ssub.s32 1, %s15
  %s18 = scalar_select 0, %s17, %s15
  $region1: #{tpu_custom_call.1} parent=0
    #allocation2 [shape = 'u8[8192]{0}', space=vmem, size = 0x2000, scoped, tag = 'input window, operand 2, single buffered']
    #allocation3 [shape = 's32[1]{0}', space=sflag, size = 0x4, scoped, tag = 'scoped memory for tpu_custom_call.1']
    #allocation4 [shape = 's32[1]{0}', space=sflag, size = 0x4, scoped, tag = 'scoped memory for tpu_custom_call.1']
    #allocation5 [shape = 'u8[8192]{0}', space=vmem, size = 0x2000, scoped, tag = 'input window, operand 3, single buffered']
    #allocation6 [shape = 's32[1]{0}', space=sflag, size = 0x4, scoped, tag = 'scoped memory for tpu_custom_call.1']
    #allocation7 [shape = 'u8[8192]{0}', space=vmem, size = 0x2000, scoped, tag = 'input window, operand 4, single buffered']
    #allocation8 [shape = 'u8[8192]{0}', space=vmem, size = 0x2000, scoped, tag = 'input window, operand 5, single buffered']
    #allocation9 [shape = 's32[1]{0}', space=sflag, size = 0x4, scoped, tag = 'scoped memory for tpu_custom_call.1']
    #allocation10 [shape = 'u8[32768]{0}', space=vmem, size = 0x8000, scoped, tag = 'input window, operand 9, single buffered']
    #allocation11 [shape = 'u8[65536]{0}', space=vmem, size = 0x10000, scoped, tag = 'input window, operand 12, single buffered']
    #allocation12 [shape = 's32[1]{0}', space=sflag, size = 0x4, scoped, tag = 'scoped memory for tpu_custom_call.1']
    #allocation13 [shape = 'u8[16384]{0}', space=vmem, size = 0x4000, scoped, tag = 'output window, operand 0, single buffered']
    %19 = vsyncpa [#allocation3], 0
    %20 = vsyncpa [#allocation6], 0
    %21 = vsyncpa [#allocation9], 0
    %22 = vsyncpa [#allocation12], 0
    %23 = vsyncpa [#allocation4], 0
    // Predicated region
    $region2: #{tpu_custom_call.1} parent=1 // pred_check
      _
    $region3: #{tpu_custom_call.1} parent=1 // pred_check_branch
      %25 = sbr.rel (0) target = $region5
    $region4: #{tpu_custom_call.1} parent=1 // pred_region
      _
    $region5: #{tpu_custom_call.1} parent=1 // pred_fallthru
      _
    // Predicated region
    $region6: #{tpu_custom_call.1} parent=1 // pred_check
      _
    $region7: #{tpu_custom_call.1} parent=1 // pred_check_branch
      %27 = sbr.rel (0) target = $region9
    $region8: #{tpu_custom_call.1} parent=1 // pred_region
      _
    $region9: #{tpu_custom_call.1} parent=1 // pred_fallthru
      _
    // Predicated region
    $region10: #{tpu_custom_call.1} parent=1 // pred_check
      _
    $region11: #{tpu_custom_call.1} parent=1 // pred_check_branch
      %29 = sbr.rel (0) target = $region13
    $region12: #{tpu_custom_call.1} parent=1 // pred_region
      %s31 = ssub.s32 256, 256
      %32 = vsyncadd [#allocation3], %s31
      %s33 = sshll.u32 [#allocation2], 4
      %s34 = int_to_ptr.vmem [resolvable:$true] %s33
      %39 = dma.hbm_to_vmem [thread:$0]  %s2, 256, %s34, [#allocation3], 128, 128, 8
    $region13: #{tpu_custom_call.1} parent=1 // pred_fallthru
      _
    // Predicated region
    $region14: #{tpu_custom_call.1} parent=1 // pred_check
      _
    $region15: #{tpu_custom_call.1} parent=1 // pred_check_branch
      %41 = sbr.rel (0) target = $region17
    $region16: #{tpu_custom_call.1} parent=1 // pred_region
      %s43 = ssub.s32 256, 256
      %44 = vsyncadd [#allocation6], %s43
      %s45 = sshll.u32 [#allocation5], 4
      %s46 = int_to_ptr.vmem [resolvable:$true] %s45
      %51 = dma.hbm_to_vmem [thread:$0]  %s3, 256, %s46, [#allocation6], 128, 128, 8
    $region17: #{tpu_custom_call.1} parent=1 // pred_fallthru
      _
    // Predicated region
    $region18: #{tpu_custom_call.1} parent=1 // pred_check
      _
    $region19: #{tpu_custom_call.1} parent=1 // pred_check_branch
      %53 = sbr.rel (0) target = $region21
    $region20: #{tpu_custom_call.1} parent=1 // pred_region
      %s55 = ssub.s32 256, 256
      %56 = vsyncadd [#allocation6], %s55
      %s57 = sshll.u32 [#allocation7], 4
      %s58 = int_to_ptr.vmem [resolvable:$true] %s57
      %63 = dma.hbm_to_vmem [thread:$0]  %s4, 256, %s58, [#allocation6], 128, 128, 8
    $region21: #{tpu_custom_call.1} parent=1 // pred_fallthru
      _
    // Predicated region
    $region22: #{tpu_custom_call.1} parent=1 // pred_check
      _
    $region23: #{tpu_custom_call.1} parent=1 // pred_check_branch
      %65 = sbr.rel (0) target = $region25
    $region24: #{tpu_custom_call.1} parent=1 // pred_region
      %s67 = ssub.s32 256, 256
      %68 = vsyncadd [#allocation9], %s67
      %s69 = sshll.u32 [#allocation8], 4
      %s70 = int_to_ptr.vmem [resolvable:$true] %s69
      %75 = dma.hbm_to_vmem [thread:$0]  %s5, 256, %s70, [#allocation9], 128, 128, 8
    $region25: #{tpu_custom_call.1} parent=1 // pred_fallthru
      _
    // Predicated region
    $region26: #{tpu_custom_call.1} parent=1 // pred_check
      _
    $region27: #{tpu_custom_call.1} parent=1 // pred_check_branch
      %77 = sbr.rel (0) target = $region29
    $region28: #{tpu_custom_call.1} parent=1 // pred_region
      _
    $region29: #{tpu_custom_call.1} parent=1 // pred_fallthru
      _
    // Predicated region
    $region30: #{tpu_custom_call.1} parent=1 // pred_check
      _
    $region31: #{tpu_custom_call.1} parent=1 // pred_check_branch
      %79 = sbr.rel (0) target = $region33
    $region32: #{tpu_custom_call.1} parent=1 // pred_region
      _
    $region33: #{tpu_custom_call.1} parent=1 // pred_fallthru
      _
    // Predicated region
    $region34: #{tpu_custom_call.1} parent=1 // pred_check
      _
    $region35: #{tpu_custom_call.1} parent=1 // pred_check_branch
      %81 = sbr.rel (0) target = $region37
    $region36: #{tpu_custom_call.1} parent=1 // pred_region
      _
    $region37: #{tpu_custom_call.1} parent=1 // pred_fallthru
      _
    // Predicated region
    $region38: #{tpu_custom_call.1} parent=1 // pred_check
      _
    $region39: #{tpu_custom_call.1} parent=1 // pred_check_branch
      %83 = sbr.rel (0) target = $region41
    $region40: #{tpu_custom_call.1} parent=1 // pred_region
      %s85 = ssub.s32 1024, 1024
      %86 = vsyncadd [#allocation9], %s85
      %s87 = sshll.u32 [#allocation10], 4
      %s88 = int_to_ptr.vmem [resolvable:$true] %s87
      %93 = dma.hbm_to_vmem [thread:$0]  %s9, 1024, %s88, [#allocation9], 64, 64, 4
    $region41: #{tpu_custom_call.1} parent=1 // pred_fallthru
      _
    // Predicated region
    $region42: #{tpu_custom_call.1} parent=1 // pred_check
      _
    $region43: #{tpu_custom_call.1} parent=1 // pred_check_branch
      %95 = sbr.rel (0) target = $region45
    $region44: #{tpu_custom_call.1} parent=1 // pred_region
      _
    $region45: #{tpu_custom_call.1} parent=1 // pred_fallthru
      _
    // Predicated region
    $region46: #{tpu_custom_call.1} parent=1 // pred_check
      _
    $region47: #{tpu_custom_call.1} parent=1 // pred_check_branch
      %97 = sbr.rel (0) target = $region49
    $region48: #{tpu_custom_call.1} parent=1 // pred_region
      _
    $region49: #{tpu_custom_call.1} parent=1 // pred_fallthru
      _
    // Predicated region
    $region50: #{tpu_custom_call.1} parent=1 // pred_check
      _
    $region51: #{tpu_custom_call.1} parent=1 // pred_check_branch
      %99 = sbr.rel (0) target = $region53
    $region52: #{tpu_custom_call.1} parent=1 // pred_region
      %s101 = ssub.s32 2048, 2048
      %102 = vsyncadd [#allocation12], %s101
      %s103 = sshll.u32 [#allocation11], 4
      %s104 = int_to_ptr.vmem [resolvable:$true] %s103
      %109 = dma.hbm_to_vmem [thread:$0]  %s12, 2048, %s104, [#allocation12], 128, 128, 8
    $region53: #{tpu_custom_call.1} parent=1 // pred_fallthru
      _
    // Predicated region
    $region54: #{tpu_custom_call.1} parent=1 // pred_check
      _
    $region55: #{tpu_custom_call.1} parent=1 // pred_check_branch
      %111 = sbr.rel (0) target = $region57
    $region56: #{tpu_custom_call.1} parent=1 // pred_region
      _
    $region57: #{tpu_custom_call.1} parent=1 // pred_fallthru
      _
    // Predicated region
    $region58: #{tpu_custom_call.1} parent=1 // pred_check
      _
    $region59: #{tpu_custom_call.1} parent=1 // pred_check_branch
      %113 = sbr.rel (0) target = $region61
    $region60: #{tpu_custom_call.1} parent=1 // pred_region
      %114 = dma.done [#allocation3], 256
    $region61: #{tpu_custom_call.1} parent=1 // pred_fallthru
      _
    // Predicated region
    $region62: #{tpu_custom_call.1} parent=1 // pred_check
      _
    $region63: #{tpu_custom_call.1} parent=1 // pred_check_branch
      %116 = sbr.rel (0) target = $region65
    $region64: #{tpu_custom_call.1} parent=1 // pred_region
      %117 = dma.done [#allocation6], 256
    $region65: #{tpu_custom_call.1} parent=1 // pred_fallthru
      _
    // Predicated region
    $region66: #{tpu_custom_call.1} parent=1 // pred_check
      _
    $region67: #{tpu_custom_call.1} parent=1 // pred_check_branch
      %119 = sbr.rel (0) target = $region69
    $region68: #{tpu_custom_call.1} parent=1 // pred_region
      %120 = dma.done [#allocation6], 256
    $region69: #{tpu_custom_call.1} parent=1 // pred_fallthru
      _
    // Predicated region
    $region70: #{tpu_custom_call.1} parent=1 // pred_check
      _
    $region71: #{tpu_custom_call.1} parent=1 // pred_check_branch
      %122 = sbr.rel (0) target = $region73
    $region72: #{tpu_custom_call.1} parent=1 // pred_region
      %123 = dma.done [#allocation9], 256
    $region73: #{tpu_custom_call.1} parent=1 // pred_fallthru
      _
    // Predicated region
    $region74: #{tpu_custom_call.1} parent=1 // pred_check
      _
    $region75: #{tpu_custom_call.1} parent=1 // pred_check_branch
      %125 = sbr.rel (0) target = $region77
    $region76: #{tpu_custom_call.1} parent=1 // pred_region
      %126 = dma.done [#allocation9], 1024
    $region77: #{tpu_custom_call.1} parent=1 // pred_fallthru
      _
    // Predicated region
    $region78: #{tpu_custom_call.1} parent=1 // pred_check
      _
    $region79: #{tpu_custom_call.1} parent=1 // pred_check_branch
      %128 = sbr.rel (0) target = $region81
    $region80: #{tpu_custom_call.1} parent=1 // pred_region
      %129 = dma.done [#allocation12], 2048
    $region81: #{tpu_custom_call.1} parent=1 // pred_fallthru
      _
    %v131 = vld [vmem:[%s0] sm:$0xff]
    %v132 = vld [vmem:[%s0 + $0x8] sm:$0xff]
    %v133 = vld [vmem:[%s1] sm:$0xff]
    %v134 = vld [vmem:[%s1 + $0x8] sm:$0xff]
    %v135 = vld [vmem:[#allocation2] sm:$0xff]
    %v136 = vld [vmem:[#allocation2 + $0x8] sm:$0xff]
    %v137 = vld [vmem:[#allocation5] sm:$0xff]
    %v138 = vld [vmem:[#allocation5 + $0x8] sm:$0xff]
    %v139 = vld [vmem:[#allocation7] sm:$0xff]
    %v140 = vld [vmem:[#allocation7 + $0x8] sm:$0xff]
    %v141 = vld [vmem:[#allocation8] sm:$0xff]
    %v142 = vld [vmem:[#allocation8 + $0x8] sm:$0xff]
    %v143 = vld [vmem:[%s8] sm:$0x1]
    %v144 = vmul.f32 %v131, %v131
    %v145 = vmul.f32 %v132, %v132
    %vm146 = vcmask 523264
    %v147 = vsel %vm146, %v144, 0.0
    %148 = vadd.xlane.f32.xlu0 %v147
    %v149 = vpop.xlane.xlu0 %148
    %v150 = vsel %vm146, %v145, 0.0
    %151 = vadd.xlane.f32.xlu0 %v150
    %v152 = vpop.xlane.xlu0 %151
    %v153 = vrcp.pop 64.0
    %v154 = vmul.f32 %v149, %v153
    %v155 = vmul.f32 %v152, %v153
    %v156 = vadd.f32 %v154, 1e-05
    %v157 = vadd.f32 %v155, 1e-05
    %v158 = vrsqrt.pop %v156
    %v159 = vrsqrt.pop %v157
    %v160 = vmul.f32 %v131, %v158
    %v161 = vmul.f32 %v132, %v159
    %v163 = vlaneseq
    %v164 = vshrl.u32 %v163, 7
    %v165 = vsub.s32 0, %v164
    %v166 = vrot.slane %v143, %v165
    %v168 = vmul.f32 %v160, %v166
    %v169 = vmul.f32 %v161, %v166
    %v170 = vpack.c.bf16 %v169, %v168
    %v171 = vld [vmem:[#allocation10] sm:$0xf]
    %v172 = vld [vmem:[#allocation10 + $0x4] sm:$0xf]
    %v173 = vld [vmem:[#allocation10 + $0x8] sm:$0xf]
    %v174 = vld [vmem:[#allocation10 + $0xc] sm:$0xf]
    %v175 = vld [vmem:[#allocation10 + $0x10] sm:$0xf]
    %v176 = vld [vmem:[#allocation10 + $0x14] sm:$0xf]
    %v177 = vld [vmem:[#allocation10 + $0x18] sm:$0xf]
    %v178 = vld [vmem:[#allocation10 + $0x1c] sm:$0xf]
    %v187 = vunpack.c.l.b16 %v171
    %v188 = vunpack.c.l.b16 %v172
    %v189 = vunpack.c.l.b16 %v173
    %v190 = vunpack.c.l.b16 %v174
    %v191 = vunpack.c.l.b16 %v175
    %v192 = vunpack.c.l.b16 %v176
    %v193 = vunpack.c.l.b16 %v177
    %v194 = vunpack.c.l.b16 %v178
    %v195 = vpack.c.b16 %v188, %v187
    %v196 = vpack.c.b16 %v190, %v189
    %v197 = vpack.c.b16 %v192, %v191
    %v198 = vpack.c.b16 %v194, %v193
    %v204 = vsel %vm146, %v170, 0
    %206 = vmatprep.subr.bf16.mxu0 0
    %207 = vmatpush1.bf16.msra.mxu0 %v195
    %208 = vmatprep.subr.bf16.mxu0 0
    %209 = vmatpush1.bf16.msra.mxu0 %v196
    %210 = vmatprep.subr.bf16.mxu0 0
    %211 = vmatpush1.bf16.msra.mxu0 %v197
    %212 = vmatprep.subr.bf16.mxu0 0
    %213 = vmatpush1.bf16.msra.mxu0 %v198
    %214 = vmatprep.subr.bf16.mxu0 0
    %215 = vmatpush1.bf16.msra.mxu0 0
    %216 = vmatprep.subr.bf16.mxu0 0
    %217 = vmatpush1.bf16.msra.mxu0 0
    %218 = vmatprep.subr.bf16.mxu0 0
    %219 = vmatpush1.bf16.msra.mxu0 0
    %220 = vmatprep.subr.bf16.mxu0 0
    %221 = vmatpush1.bf16.msra.mxu0 0
    %222 = vmatprep.subr.bf16.mxu0 0
    %223 = vmatpush1.bf16.msra.mxu0 0
    %224 = vmatprep.subr.bf16.mxu0 0
    %225 = vmatpush1.bf16.msra.mxu0 0
    %226 = vmatprep.subr.bf16.mxu0 0
    %227 = vmatpush1.bf16.msra.mxu0 0
    %228 = vmatprep.subr.bf16.mxu0 0
    %229 = vmatpush1.bf16.msra.mxu0 0
    %230 = vmatprep.subr.bf16.mxu0 0
    %231 = vmatpush1.bf16.msra.mxu0 0
    %232 = vmatprep.subr.bf16.mxu0 0
    %233 = vmatpush1.bf16.msra.mxu0 0
    %234 = vmatprep.subr.bf16.mxu0 0
    %235 = vmatpush1.bf16.msra.mxu0 0
    %236 = vmatprep.subr.bf16.mxu0 0
    %237 = vmatpush1.bf16.msra.mxu0 0
    %238 = vmatprep.mubr.bf16.mxu0 0
    %239 = vmatmul.mubr.bf16.gmra.mrb[0].mxu0 %v204
    %v240 = vpop.f32.mrb[0].mxu0
    %v241 = vadd.f32 0.0, %v240
    %v242 = vpop.f32.mrb[0].mxu0
    %v243 = vpop.f32.mrb[0].mxu0
    %v244 = vadd.f32 0.0, %v243
    %v245 = vpop.f32.mrb[0].mxu0
    %246 = vdwg.mxu0
    %v247 = vmul.f32 %v241, %v135
    %v248 = vmul.f32 %v244, %v136
    %251 = vrot.lane.b32.xlu0 %v137, 32
    %v252 = vpop.permute.xlu0 %251
    %253 = vrot.lane.b32.xlu0 %v138, 32
    %v254 = vpop.permute.xlu0 %253
    %v257 = vmul.f32 %v241, %v252
    %v258 = vmul.f32 %v244, %v254
    %261 = vrot.lane.b32.xlu0 %v257, 96
    %v262 = vpop.permute.xlu0 %261
    %263 = vrot.lane.b32.xlu0 %v258, 96
    %v264 = vpop.permute.xlu0 %263
    %v267 = vsub.f32 %v247, %v262
    %v268 = vsub.f32 %v248, %v264
    %v269 = vmul.f32 %v241, %v137
    %v270 = vmul.f32 %v244, %v138
    %273 = vrot.lane.b32.xlu0 %v135, 32
    %v274 = vpop.permute.xlu0 %273
    %275 = vrot.lane.b32.xlu0 %v136, 32
    %v276 = vpop.permute.xlu0 %275
    %v279 = vmul.f32 %v241, %v274
    %v280 = vmul.f32 %v244, %v276
    %283 = vrot.lane.b32.xlu0 %v279, 96
    %v284 = vpop.permute.xlu0 %283
    %285 = vrot.lane.b32.xlu0 %v280, 96
    %v286 = vpop.permute.xlu0 %285
    %v289 = vadd.f32 %v269, %v284
    %v290 = vadd.f32 %v270, %v286
    %293 = vrot.lane.b32.xlu0 %v139, 64
    %v294 = vpop.permute.xlu0 %293
    %295 = vrot.lane.b32.xlu0 %v140, 64
    %v296 = vpop.permute.xlu0 %295
    %v299 = vmul.f32 %v241, %v294
    %v300 = vmul.f32 %v244, %v296
    %303 = vrot.lane.b32.xlu0 %v141, 80
    %v304 = vpop.permute.xlu0 %303
    %305 = vrot.lane.b32.xlu0 %v142, 80
    %v306 = vpop.permute.xlu0 %305
    %v309 = vmul.f32 %v241, %v304
    %v310 = vmul.f32 %v244, %v306
    %313 = vrot.lane.b32.xlu0 %v309, 112
    %v314 = vpop.permute.xlu0 %313
    %315 = vrot.lane.b32.xlu0 %v310, 112
    %v316 = vpop.permute.xlu0 %315
    %v319 = vsub.f32 %v299, %v314
    %v320 = vsub.f32 %v300, %v316
    %321 = vrot.lane.b32.xlu0 %v141, 64
    %v322 = vpop.permute.xlu0 %321
    %323 = vrot.lane.b32.xlu0 %v142, 64
    %v324 = vpop.permute.xlu0 %323
    %v327 = vmul.f32 %v241, %v322
    %v328 = vmul.f32 %v244, %v324
    %329 = vrot.lane.b32.xlu0 %v139, 80
    %v330 = vpop.permute.xlu0 %329
    %331 = vrot.lane.b32.xlu0 %v140, 80
    %v332 = vpop.permute.xlu0 %331
    %v335 = vmul.f32 %v241, %v330
    %v336 = vmul.f32 %v244, %v332
    %339 = vrot.lane.b32.xlu0 %v335, 112
    %v340 = vpop.permute.xlu0 %339
    %341 = vrot.lane.b32.xlu0 %v336, 112
    %v342 = vpop.permute.xlu0 %341
    %v345 = vadd.f32 %v327, %v340
    %v346 = vadd.f32 %v328, %v342
    %v347 = vld [vmem:[%s10] sm:$0xff]
    %v348 = vld [vmem:[%s10 + $0x8] sm:$0xff]
    %v349 = vld [vmem:[%s10 + $0x10] sm:$0xff]
    %v350 = vld [vmem:[%s10 + $0x18] sm:$0xff]
    %v351 = vld [vmem:[%s10 + $0x20] sm:$0xff]
    %v352 = vld [vmem:[%s10 + $0x28] sm:$0xff]
    %v353 = vld [vmem:[%s10 + $0x30] sm:$0xff]
    %v354 = vld [vmem:[%s10 + $0x38] sm:$0xff]
    %357 = vrot.lane.b32.xlu0 %v345, 64
    %v358 = vpop.permute.xlu0 %357
    %359 = vrot.lane.b32.xlu0 %v346, 64
    %v360 = vpop.permute.xlu0 %359
    %vm361 = vcmask 64512
    %v363 = vsel %vm361, %v289, 0
    %v366 = vsel %vm361, %v290, 0
    %v368 = vsel %vm361, %v358, 0
    %v370 = vsel %vm361, %v360, 0
    %372 = vmatprep.subr.mxu0 0.0
    %373 = vmatpush1.xpose.msra.mxu0 %v368
    %374 = vmatprep.subr.mxu0 0.0
    %375 = vmatpush1.xpose.msra.mxu0 %v370
    %376 = vmatprep.subr.mxu0 0.0
    %377 = vmatpush1.xpose.msra.mxu0 0.0
    %378 = vmatprep.subr.mxu0 0.0
    %379 = vmatpush1.xpose.msra.mxu0 0.0
    %380 = vmatprep.subr.mxu0 0.0
    %381 = vmatpush1.xpose.msra.mxu0 0.0
    %382 = vmatprep.subr.mxu0 0.0
    %383 = vmatpush1.xpose.msra.mxu0 0.0
    %384 = vmatprep.subr.mxu0 0.0
    %385 = vmatpush1.xpose.msra.mxu0 0.0
    %386 = vmatprep.subr.mxu0 0.0
    %387 = vmatpush1.xpose.msra.mxu0 0.0
    %388 = vmatprep.subr.mxu0 0.0
    %389 = vmatpush1.xpose.msra.mxu0 0.0
    %390 = vmatprep.subr.mxu0 0.0
    %391 = vmatpush1.xpose.msra.mxu0 0.0
    %392 = vmatprep.subr.mxu0 0.0
    %393 = vmatpush1.xpose.msra.mxu0 0.0
    %394 = vmatprep.subr.mxu0 0.0
    %395 = vmatpush1.xpose.msra.mxu0 0.0
    %396 = vmatprep.subr.mxu0 0.0
    %397 = vmatpush1.xpose.msra.mxu0 0.0
    %398 = vmatprep.subr.mxu0 0.0
    %399 = vmatpush1.xpose.msra.mxu0 0.0
    %400 = vmatprep.subr.mxu0 0.0
    %401 = vmatpush1.xpose.msra.mxu0 0.0
    %402 = vmatprep.subr.mxu0 0.0
    %403 = vmatpush1.xpose.msra.mxu0 0.0
    %404 = vmatprep.subr.mxu0 0.0
    %405 = vmatpush1.xpose.msra.mxu0 0.0
    %406 = vmatprep.subr.mxu0 0.0
    %407 = vmatpush1.xpose.msra.mxu0 0.0
    %408 = vmatprep.subr.mxu0 0.0
    %409 = vmatpush1.xpose.msra.mxu0 0.0
    %410 = vmatprep.subr.mxu0 0.0
    %411 = vmatpush1.xpose.msra.mxu0 0.0
    %412 = vmatprep.subr.mxu0 0.0
    %413 = vmatpush1.xpose.msra.mxu0 0.0
    %414 = vmatprep.subr.mxu0 0.0
    %415 = vmatpush1.xpose.msra.mxu0 0.0
    %416 = vmatprep.subr.mxu0 0.0
    %417 = vmatpush1.xpose.msra.mxu0 0.0
    %418 = vmatprep.subr.mxu0 0.0
    %419 = vmatpush1.xpose.msra.mxu0 0.0
    %420 = vmatprep.subr.mxu0 0.0
    %421 = vmatpush1.xpose.msra.mxu0 0.0
    %422 = vmatprep.subr.mxu0 0.0
    %423 = vmatpush1.xpose.msra.mxu0 0.0
    %424 = vmatprep.subr.mxu0 0.0
    %425 = vmatpush1.xpose.msra.mxu0 0.0
    %426 = vmatprep.subr.mxu0 0.0
    %427 = vmatpush1.xpose.msra.mxu0 0.0
    %428 = vmatprep.subr.mxu0 0.0
    %429 = vmatpush1.xpose.msra.mxu0 0.0
    %430 = vmatprep.subr.mxu0 0.0
    %431 = vmatpush1.xpose.msra.mxu0 0.0
    %432 = vmatprep.subr.mxu0 0.0
    %433 = vmatpush1.xpose.msra.mxu0 0.0
    %434 = vmatprep.subr.mxu0 0.0
    %435 = vmatpush1.xpose.msra.mxu0 0.0
    %436 = vmatprep.mubr.f32.mxu0 0.0
    %437 = vmatmul.mubr.f32.gmra.mrb[0].mxu0 %v363
    %v438 = vpop.f32.mrb[0].mxu0
    %v439 = vadd.f32 0.0, %v438
    %v440 = vpop.f32.mrb[0].mxu0
    %441 = vmatprep.mubr.f32.mxu0 0.0
    %442 = vmatmul.mubr.f32.gmra.mrb[0].mxu0 %v366
    %v443 = vpop.f32.mrb[0].mxu0
    %v444 = vadd.f32 0.0, %v443
    %v445 = vpop.f32.mrb[0].mxu0
    %446 = vdwg.mxu0
    %449 = vrot.lane.b32.xlu0 %v319, 64
    %v450 = vpop.permute.xlu0 %449
    %451 = vrot.lane.b32.xlu0 %v320, 64
    %v452 = vpop.permute.xlu0 %451
    %v454 = vsel %vm361, %v267, 0
    %v457 = vsel %vm361, %v268, 0
    %v459 = vsel %vm361, %v450, 0
    %v461 = vsel %vm361, %v452, 0
    %463 = vmatprep.subr.mxu0 0.0
    %464 = vmatpush1.xpose.msra.mxu0 %v459
    %465 = vmatprep.subr.mxu0 0.0
    %466 = vmatpush1.xpose.msra.mxu0 %v461
    %467 = vmatprep.subr.mxu0 0.0
    %468 = vmatpush1.xpose.msra.mxu0 0.0
    %469 = vmatprep.subr.mxu0 0.0
    %470 = vmatpush1.xpose.msra.mxu0 0.0
    %471 = vmatprep.subr.mxu0 0.0
    %472 = vmatpush1.xpose.msra.mxu0 0.0
    %473 = vmatprep.subr.mxu0 0.0
    %474 = vmatpush1.xpose.msra.mxu0 0.0
    %475 = vmatprep.subr.mxu0 0.0
    %476 = vmatpush1.xpose.msra.mxu0 0.0
    %477 = vmatprep.subr.mxu0 0.0
    %478 = vmatpush1.xpose.msra.mxu0 0.0
    %479 = vmatprep.subr.mxu0 0.0
    %480 = vmatpush1.xpose.msra.mxu0 0.0
    %481 = vmatprep.subr.mxu0 0.0
    %482 = vmatpush1.xpose.msra.mxu0 0.0
    %483 = vmatprep.subr.mxu0 0.0
    %484 = vmatpush1.xpose.msra.mxu0 0.0
    %485 = vmatprep.subr.mxu0 0.0
    %486 = vmatpush1.xpose.msra.mxu0 0.0
    %487 = vmatprep.subr.mxu0 0.0
    %488 = vmatpush1.xpose.msra.mxu0 0.0
    %489 = vmatprep.subr.mxu0 0.0
    %490 = vmatpush1.xpose.msra.mxu0 0.0
    %491 = vmatprep.subr.mxu0 0.0
    %492 = vmatpush1.xpose.msra.mxu0 0.0
    %493 = vmatprep.subr.mxu0 0.0
    %494 = vmatpush1.xpose.msra.mxu0 0.0
    %495 = vmatprep.subr.mxu0 0.0
    %496 = vmatpush1.xpose.msra.mxu0 0.0
    %497 = vmatprep.subr.mxu0 0.0
    %498 = vmatpush1.xpose.msra.mxu0 0.0
    %499 = vmatprep.subr.mxu0 0.0
    %500 = vmatpush1.xpose.msra.mxu0 0.0
    %501 = vmatprep.subr.mxu0 0.0
    %502 = vmatpush1.xpose.msra.mxu0 0.0
    %503 = vmatprep.subr.mxu0 0.0
    %504 = vmatpush1.xpose.msra.mxu0 0.0
    %505 = vmatprep.subr.mxu0 0.0
    %506 = vmatpush1.xpose.msra.mxu0 0.0
    %507 = vmatprep.subr.mxu0 0.0
    %508 = vmatpush1.xpose.msra.mxu0 0.0
    %509 = vmatprep.subr.mxu0 0.0
    %510 = vmatpush1.xpose.msra.mxu0 0.0
    %511 = vmatprep.subr.mxu0 0.0
    %512 = vmatpush1.xpose.msra.mxu0 0.0
    %513 = vmatprep.subr.mxu0 0.0
    %514 = vmatpush1.xpose.msra.mxu0 0.0
    %515 = vmatprep.subr.mxu0 0.0
    %516 = vmatpush1.xpose.msra.mxu0 0.0
    %517 = vmatprep.subr.mxu0 0.0
    %518 = vmatpush1.xpose.msra.mxu0 0.0
    %519 = vmatprep.subr.mxu0 0.0
    %520 = vmatpush1.xpose.msra.mxu0 0.0
    %521 = vmatprep.subr.mxu0 0.0
    %522 = vmatpush1.xpose.msra.mxu0 0.0
    %523 = vmatprep.subr.mxu0 0.0
    %524 = vmatpush1.xpose.msra.mxu0 0.0
    %525 = vmatprep.subr.mxu0 0.0
    %526 = vmatpush1.xpose.msra.mxu0 0.0
    %527 = vmatprep.mubr.f32.mxu0 0.0
    %528 = vmatmul.mubr.f32.gmra.mrb[0].mxu0 %v454
    %v529 = vpop.f32.mrb[0].mxu0
    %v530 = vadd.f32 %v439, %v529
    %v531 = vpop.f32.mrb[0].mxu0
    %532 = vmatprep.mubr.f32.mxu0 0.0
    %533 = vmatmul.mubr.f32.gmra.mrb[0].mxu0 %v457
    %v534 = vpop.f32.mrb[0].mxu0
    %v535 = vadd.f32 %v444, %v534
    %v536 = vpop.f32.mrb[0].mxu0
    %537 = vdwg.mxu0
    %v538 = vmul.f32 %v530, 0.25
    %v539 = vmul.f32 %v535, 0.25
    %v540 = vadd.f32 %v538, %v133
    %v541 = vadd.f32 %v539, %v134
    %vm542 = vcmask 130048
    %v543 = vsel %vm542, %v540, -inf
    %544 = vmax.xlane.f32.xlu0 %v543
    %v545 = vpop.xlane.xlu0 %544
    %v546 = vsel %vm542, %v541, -inf
    %547 = vmax.xlane.f32.xlu0 %v546
    %v548 = vpop.xlane.xlu0 %547
    %v549 = vsub.f32 %v540, %v545
    %v550 = vsub.f32 %v541, %v548
    %v551 = vmul.f32 %v549, 1.442695
    %v552 = vpow.pop %v551
    %v553 = vmul.f32 %v550, 1.442695
    %v554 = vpow.pop %v553
    %v555 = vsel %vm542, %v552, 0.0
    %556 = vadd.xlane.f32.xlu0 %v555
    %v557 = vpop.xlane.xlu0 %556
    %v558 = vsel %vm542, %v554, 0.0
    %559 = vadd.xlane.f32.xlu0 %v558
    %v560 = vpop.xlane.xlu0 %559
    %v561 = vrcp.pop %v557
    %v562 = vrcp.pop %v560
    %v563 = vmul.f32 %v552, %v561
    %v564 = vmul.f32 %v554, %v562
    %567 = vrot.lane.b32.xlu0 %v241, 32
    %v568 = vpop.permute.xlu0 %567
    %569 = vrot.lane.b32.xlu0 %v244, 32
    %v570 = vpop.permute.xlu0 %569
    %v574 = vsel %vm542, %v563, 0
    %v577 = vsel %vm542, %v564, 0
    %579 = vmatprep.subr.mxu0 0.0
    %580 = vmatpush1.msra.mxu0 %v568
    %581 = vmatprep.subr.mxu0 0.0
    %582 = vmatpush1.msra.mxu0 %v570
    %583 = vmatprep.subr.mxu0 0.0
    %584 = vmatpush1.msra.mxu0 0.0
    %585 = vmatprep.subr.mxu0 0.0
    %586 = vmatpush1.msra.mxu0 0.0
    %587 = vmatprep.subr.mxu0 0.0
    %588 = vmatpush1.msra.mxu0 0.0
    %589 = vmatprep.subr.mxu0 0.0
    %590 = vmatpush1.msra.mxu0 0.0
    %591 = vmatprep.subr.mxu0 0.0
    %592 = vmatpush1.msra.mxu0 0.0
    %593 = vmatprep.subr.mxu0 0.0
    %594 = vmatpush1.msra.mxu0 0.0
    %595 = vmatprep.subr.mxu0 0.0
    %596 = vmatpush1.msra.mxu0 0.0
    %597 = vmatprep.subr.mxu0 0.0
    %598 = vmatpush1.msra.mxu0 0.0
    %599 = vmatprep.subr.mxu0 0.0
    %600 = vmatpush1.msra.mxu0 0.0
    %601 = vmatprep.subr.mxu0 0.0
    %602 = vmatpush1.msra.mxu0 0.0
    %603 = vmatprep.subr.mxu0 0.0
    %604 = vmatpush1.msra.mxu0 0.0
    %605 = vmatprep.subr.mxu0 0.0
    %606 = vmatpush1.msra.mxu0 0.0
    %607 = vmatprep.subr.mxu0 0.0
    %608 = vmatpush1.msra.mxu0 0.0
    %609 = vmatprep.subr.mxu0 0.0
    %610 = vmatpush1.msra.mxu0 0.0
    %611 = vmatprep.subr.mxu0 0.0
    %612 = vmatpush1.msra.mxu0 0.0
    %613 = vmatprep.subr.mxu0 0.0
    %614 = vmatpush1.msra.mxu0 0.0
    %615 = vmatprep.subr.mxu0 0.0
    %616 = vmatpush1.msra.mxu0 0.0
    %617 = vmatprep.subr.mxu0 0.0
    %618 = vmatpush1.msra.mxu0 0.0
    %619 = vmatprep.subr.mxu0 0.0
    %620 = vmatpush1.msra.mxu0 0.0
    %621 = vmatprep.subr.mxu0 0.0
    %622 = vmatpush1.msra.mxu0 0.0
    %623 = vmatprep.subr.mxu0 0.0
    %624 = vmatpush1.msra.mxu0 0.0
    %625 = vmatprep.subr.mxu0 0.0
    %626 = vmatpush1.msra.mxu0 0.0
    %627 = vmatprep.subr.mxu0 0.0
    %628 = vmatpush1.msra.mxu0 0.0
    %629 = vmatprep.subr.mxu0 0.0
    %630 = vmatpush1.msra.mxu0 0.0
    %631 = vmatprep.subr.mxu0 0.0
    %632 = vmatpush1.msra.mxu0 0.0
    %633 = vmatprep.subr.mxu0 0.0
    %634 = vmatpush1.msra.mxu0 0.0
    %635 = vmatprep.subr.mxu0 0.0
    %636 = vmatpush1.msra.mxu0 0.0
    %637 = vmatprep.subr.mxu0 0.0
    %638 = vmatpush1.msra.mxu0 0.0
    %639 = vmatprep.subr.mxu0 0.0
    %640 = vmatpush1.msra.mxu0 0.0
    %641 = vmatprep.subr.mxu0 0.0
    %642 = vmatpush1.msra.mxu0 0.0
    %643 = vmatprep.mubr.f32.mxu0 0.0
    %644 = vmatmul.mubr.f32.gmra.mrb[0].mxu0 %v574
    %v645 = vpop.f32.mrb[0].mxu0
    %v646 = vadd.f32 0.0, %v645
    %v647 = vpop.f32.mrb[0].mxu0
    %648 = vmatprep.mubr.f32.mxu0 0.0
    %649 = vmatmul.mubr.f32.gmra.mrb[0].mxu0 %v577
    %v650 = vpop.f32.mrb[0].mxu0
    %v651 = vadd.f32 0.0, %v650
    %v652 = vpop.f32.mrb[0].mxu0
    %653 = vdwg.mxu0
    %654 = vrot.lane.b32.xlu0 %v289, 120
    %v655 = vpop.permute.xlu0 %654
    %656 = vrot.lane.b32.xlu0 %v290, 120
    %v657 = vpop.permute.xlu0 %656
    %v658 = vsel %vm361, %v655, 0
    %v660 = vsel %vm361, %v657, 0
    %662 = vmatprep.subr.mxu0 0.0
    %663 = vmatpush1.xpose.msra.mxu0 %v368
    %664 = vmatprep.subr.mxu0 0.0
    %665 = vmatpush1.xpose.msra.mxu0 %v370
    %666 = vmatprep.subr.mxu0 0.0
    %667 = vmatpush1.xpose.msra.mxu0 0.0
    %668 = vmatprep.subr.mxu0 0.0
    %669 = vmatpush1.xpose.msra.mxu0 0.0
    %670 = vmatprep.subr.mxu0 0.0
    %671 = vmatpush1.xpose.msra.mxu0 0.0
    %672 = vmatprep.subr.mxu0 0.0
    %673 = vmatpush1.xpose.msra.mxu0 0.0
    %674 = vmatprep.subr.mxu0 0.0
    %675 = vmatpush1.xpose.msra.mxu0 0.0
    %676 = vmatprep.subr.mxu0 0.0
    %677 = vmatpush1.xpose.msra.mxu0 0.0
    %678 = vmatprep.subr.mxu0 0.0
    %679 = vmatpush1.xpose.msra.mxu0 0.0
    %680 = vmatprep.subr.mxu0 0.0
    %681 = vmatpush1.xpose.msra.mxu0 0.0
    %682 = vmatprep.subr.mxu0 0.0
    %683 = vmatpush1.xpose.msra.mxu0 0.0
    %684 = vmatprep.subr.mxu0 0.0
    %685 = vmatpush1.xpose.msra.mxu0 0.0
    %686 = vmatprep.subr.mxu0 0.0
    %687 = vmatpush1.xpose.msra.mxu0 0.0
    %688 = vmatprep.subr.mxu0 0.0
    %689 = vmatpush1.xpose.msra.mxu0 0.0
    %690 = vmatprep.subr.mxu0 0.0
    %691 = vmatpush1.xpose.msra.mxu0 0.0
    %692 = vmatprep.subr.mxu0 0.0
    %693 = vmatpush1.xpose.msra.mxu0 0.0
    %694 = vmatprep.subr.mxu0 0.0
    %695 = vmatpush1.xpose.msra.mxu0 0.0
    %696 = vmatprep.subr.mxu0 0.0
    %697 = vmatpush1.xpose.msra.mxu0 0.0
    %698 = vmatprep.subr.mxu0 0.0
    %699 = vmatpush1.xpose.msra.mxu0 0.0
    %700 = vmatprep.subr.mxu0 0.0
    %701 = vmatpush1.xpose.msra.mxu0 0.0
    %702 = vmatprep.subr.mxu0 0.0
    %703 = vmatpush1.xpose.msra.mxu0 0.0
    %704 = vmatprep.subr.mxu0 0.0
    %705 = vmatpush1.xpose.msra.mxu0 0.0
    %706 = vmatprep.subr.mxu0 0.0
    %707 = vmatpush1.xpose.msra.mxu0 0.0
    %708 = vmatprep.subr.mxu0 0.0
    %709 = vmatpush1.xpose.msra.mxu0 0.0
    %710 = vmatprep.subr.mxu0 0.0
    %711 = vmatpush1.xpose.msra.mxu0 0.0
    %712 = vmatprep.subr.mxu0 0.0
    %713 = vmatpush1.xpose.msra.mxu0 0.0
    %714 = vmatprep.subr.mxu0 0.0
    %715 = vmatpush1.xpose.msra.mxu0 0.0
    %716 = vmatprep.subr.mxu0 0.0
    %717 = vmatpush1.xpose.msra.mxu0 0.0
    %718 = vmatprep.subr.mxu0 0.0
    %719 = vmatpush1.xpose.msra.mxu0 0.0
    %720 = vmatprep.subr.mxu0 0.0
    %721 = vmatpush1.xpose.msra.mxu0 0.0
    %722 = vmatprep.subr.mxu0 0.0
    %723 = vmatpush1.xpose.msra.mxu0 0.0
    %724 = vmatprep.subr.mxu0 0.0
    %725 = vmatpush1.xpose.msra.mxu0 0.0
    %726 = vmatprep.mubr.f32.mxu0 0.0
    %727 = vmatmul.mubr.f32.gmra.mrb[0].mxu0 %v658
    %v728 = vpop.f32.mrb[0].mxu0
    %v729 = vadd.f32 0.0, %v728
    %v730 = vpop.f32.mrb[0].mxu0
    %731 = vmatprep.mubr.f32.mxu0 0.0
    %732 = vmatmul.mubr.f32.gmra.mrb[0].mxu0 %v660
    %v733 = vpop.f32.mrb[0].mxu0
    %v734 = vadd.f32 0.0, %v733
    %v735 = vpop.f32.mrb[0].mxu0
    %736 = vdwg.mxu0
    %737 = vrot.lane.b32.xlu0 %v267, 120
    %v738 = vpop.permute.xlu0 %737
    %739 = vrot.lane.b32.xlu0 %v268, 120
    %v740 = vpop.permute.xlu0 %739
    %v741 = vsel %vm361, %v738, 0
    %v743 = vsel %vm361, %v740, 0
    %745 = vmatprep.subr.mxu0 0.0
    %746 = vmatpush1.xpose.msra.mxu0 %v459
    %747 = vmatprep.subr.mxu0 0.0
    %748 = vmatpush1.xpose.msra.mxu0 %v461
    %749 = vmatprep.subr.mxu0 0.0
    %750 = vmatpush1.xpose.msra.mxu0 0.0
    %751 = vmatprep.subr.mxu0 0.0
    %752 = vmatpush1.xpose.msra.mxu0 0.0
    %753 = vmatprep.subr.mxu0 0.0
    %754 = vmatpush1.xpose.msra.mxu0 0.0
    %755 = vmatprep.subr.mxu0 0.0
    %756 = vmatpush1.xpose.msra.mxu0 0.0
    %757 = vmatprep.subr.mxu0 0.0
    %758 = vmatpush1.xpose.msra.mxu0 0.0
    %759 = vmatprep.subr.mxu0 0.0
    %760 = vmatpush1.xpose.msra.mxu0 0.0
    %761 = vmatprep.subr.mxu0 0.0
    %762 = vmatpush1.xpose.msra.mxu0 0.0
    %763 = vmatprep.subr.mxu0 0.0
    %764 = vmatpush1.xpose.msra.mxu0 0.0
    %765 = vmatprep.subr.mxu0 0.0
    %766 = vmatpush1.xpose.msra.mxu0 0.0
    %767 = vmatprep.subr.mxu0 0.0
    %768 = vmatpush1.xpose.msra.mxu0 0.0
    %769 = vmatprep.subr.mxu0 0.0
    %770 = vmatpush1.xpose.msra.mxu0 0.0
    %771 = vmatprep.subr.mxu0 0.0
    %772 = vmatpush1.xpose.msra.mxu0 0.0
    %773 = vmatprep.subr.mxu0 0.0
    %774 = vmatpush1.xpose.msra.mxu0 0.0
    %775 = vmatprep.subr.mxu0 0.0
    %776 = vmatpush1.xpose.msra.mxu0 0.0
    %777 = vmatprep.subr.mxu0 0.0
    %778 = vmatpush1.xpose.msra.mxu0 0.0
    %779 = vmatprep.subr.mxu0 0.0
    %780 = vmatpush1.xpose.msra.mxu0 0.0
    %781 = vmatprep.subr.mxu0 0.0
    %782 = vmatpush1.xpose.msra.mxu0 0.0
    %783 = vmatprep.subr.mxu0 0.0
    %784 = vmatpush1.xpose.msra.mxu0 0.0
    %785 = vmatprep.subr.mxu0 0.0
    %786 = vmatpush1.xpose.msra.mxu0 0.0
    %787 = vmatprep.subr.mxu0 0.0
    %788 = vmatpush1.xpose.msra.mxu0 0.0
    %789 = vmatprep.subr.mxu0 0.0
    %790 = vmatpush1.xpose.msra.mxu0 0.0
    %791 = vmatprep.subr.mxu0 0.0
    %792 = vmatpush1.xpose.msra.mxu0 0.0
    %793 = vmatprep.subr.mxu0 0.0
    %794 = vmatpush1.xpose.msra.mxu0 0.0
    %795 = vmatprep.subr.mxu0 0.0
    %796 = vmatpush1.xpose.msra.mxu0 0.0
    %797 = vmatprep.subr.mxu0 0.0
    %798 = vmatpush1.xpose.msra.mxu0 0.0
    %799 = vmatprep.subr.mxu0 0.0
    %800 = vmatpush1.xpose.msra.mxu0 0.0
    %801 = vmatprep.subr.mxu0 0.0
    %802 = vmatpush1.xpose.msra.mxu0 0.0
    %803 = vmatprep.subr.mxu0 0.0
    %804 = vmatpush1.xpose.msra.mxu0 0.0
    %805 = vmatprep.subr.mxu0 0.0
    %806 = vmatpush1.xpose.msra.mxu0 0.0
    %807 = vmatprep.subr.mxu0 0.0
    %808 = vmatpush1.xpose.msra.mxu0 0.0
    %809 = vmatprep.mubr.f32.mxu0 0.0
    %810 = vmatmul.mubr.f32.gmra.mrb[0].mxu0 %v741
    %v811 = vpop.f32.mrb[0].mxu0
    %v812 = vadd.f32 %v729, %v811
    %v813 = vpop.f32.mrb[0].mxu0
    %814 = vmatprep.mubr.f32.mxu0 0.0
    %815 = vmatmul.mubr.f32.gmra.mrb[0].mxu0 %v743
    %v816 = vpop.f32.mrb[0].mxu0
    %v817 = vadd.f32 %v734, %v816
    %v818 = vpop.f32.mrb[0].mxu0
    %819 = vdwg.mxu0
    %v820 = vmul.f32 %v812, 0.25
    %v821 = vmul.f32 %v817, 0.25
    %v822 = vadd.f32 %v820, %v133
    %v823 = vadd.f32 %v821, %v134
    %v824 = vsel %vm542, %v822, -inf
    %825 = vmax.xlane.f32.xlu0 %v824
    %v826 = vpop.xlane.xlu0 %825
    %v827 = vsel %vm542, %v823, -inf
    %828 = vmax.xlane.f32.xlu0 %v827
    %v829 = vpop.xlane.xlu0 %828
    %v830 = vsub.f32 %v822, %v826
    %v831 = vsub.f32 %v823, %v829
    %v832 = vmul.f32 %v830, 1.442695
    %v833 = vpow.pop %v832
    %v834 = vmul.f32 %v831, 1.442695
    %v835 = vpow.pop %v834
    %v836 = vsel %vm542, %v833, 0.0
    %837 = vadd.xlane.f32.xlu0 %v836
    %v838 = vpop.xlane.xlu0 %837
    %v839 = vsel %vm542, %v835, 0.0
    %840 = vadd.xlane.f32.xlu0 %v839
    %v841 = vpop.xlane.xlu0 %840
    %v842 = vrcp.pop %v838
    %v843 = vrcp.pop %v841
    %v844 = vmul.f32 %v833, %v842
    %v845 = vmul.f32 %v835, %v843
    %v847 = vsel %vm542, %v844, 0
    %v850 = vsel %vm542, %v845, 0
    %852 = vmatprep.subr.mxu0 0.0
    %853 = vmatpush1.msra.mxu0 %v568
    %854 = vmatprep.subr.mxu0 0.0
    %855 = vmatpush1.msra.mxu0 %v570
    %856 = vmatprep.subr.mxu0 0.0
    %857 = vmatpush1.msra.mxu0 0.0
    %858 = vmatprep.subr.mxu0 0.0
    %859 = vmatpush1.msra.mxu0 0.0
    %860 = vmatprep.subr.mxu0 0.0
    %861 = vmatpush1.msra.mxu0 0.0
    %862 = vmatprep.subr.mxu0 0.0
    %863 = vmatpush1.msra.mxu0 0.0
    %864 = vmatprep.subr.mxu0 0.0
    %865 = vmatpush1.msra.mxu0 0.0
    %866 = vmatprep.subr.mxu0 0.0
    %867 = vmatpush1.msra.mxu0 0.0
    %868 = vmatprep.subr.mxu0 0.0
    %869 = vmatpush1.msra.mxu0 0.0
    %870 = vmatprep.subr.mxu0 0.0
    %871 = vmatpush1.msra.mxu0 0.0
    %872 = vmatprep.subr.mxu0 0.0
    %873 = vmatpush1.msra.mxu0 0.0
    %874 = vmatprep.subr.mxu0 0.0
    %875 = vmatpush1.msra.mxu0 0.0
    %876 = vmatprep.subr.mxu0 0.0
    %877 = vmatpush1.msra.mxu0 0.0
    %878 = vmatprep.subr.mxu0 0.0
    %879 = vmatpush1.msra.mxu0 0.0
    %880 = vmatprep.subr.mxu0 0.0
    %881 = vmatpush1.msra.mxu0 0.0
    %882 = vmatprep.subr.mxu0 0.0
    %883 = vmatpush1.msra.mxu0 0.0
    %884 = vmatprep.subr.mxu0 0.0
    %885 = vmatpush1.msra.mxu0 0.0
    %886 = vmatprep.subr.mxu0 0.0
    %887 = vmatpush1.msra.mxu0 0.0
    %888 = vmatprep.subr.mxu0 0.0
    %889 = vmatpush1.msra.mxu0 0.0
    %890 = vmatprep.subr.mxu0 0.0
    %891 = vmatpush1.msra.mxu0 0.0
    %892 = vmatprep.subr.mxu0 0.0
    %893 = vmatpush1.msra.mxu0 0.0
    %894 = vmatprep.subr.mxu0 0.0
    %895 = vmatpush1.msra.mxu0 0.0
    %896 = vmatprep.subr.mxu0 0.0
    %897 = vmatpush1.msra.mxu0 0.0
    %898 = vmatprep.subr.mxu0 0.0
    %899 = vmatpush1.msra.mxu0 0.0
    %900 = vmatprep.subr.mxu0 0.0
    %901 = vmatpush1.msra.mxu0 0.0
    %902 = vmatprep.subr.mxu0 0.0
    %903 = vmatpush1.msra.mxu0 0.0
    %904 = vmatprep.subr.mxu0 0.0
    %905 = vmatpush1.msra.mxu0 0.0
    %906 = vmatprep.subr.mxu0 0.0
    %907 = vmatpush1.msra.mxu0 0.0
    %908 = vmatprep.subr.mxu0 0.0
    %909 = vmatpush1.msra.mxu0 0.0
    %910 = vmatprep.subr.mxu0 0.0
    %911 = vmatpush1.msra.mxu0 0.0
    %912 = vmatprep.subr.mxu0 0.0
    %913 = vmatpush1.msra.mxu0 0.0
    %914 = vmatprep.subr.mxu0 0.0
    %915 = vmatpush1.msra.mxu0 0.0
    %916 = vmatprep.mubr.f32.mxu0 0.0
    %917 = vmatmul.mubr.f32.gmra.mrb[0].mxu0 %v847
    %v918 = vpop.f32.mrb[0].mxu0
    %v919 = vadd.f32 0.0, %v918
    %v920 = vpop.f32.mrb[0].mxu0
    %921 = vmatprep.mubr.f32.mxu0 0.0
    %922 = vmatmul.mubr.f32.gmra.mrb[0].mxu0 %v850
    %v923 = vpop.f32.mrb[0].mxu0
    %v924 = vadd.f32 0.0, %v923
    %v925 = vpop.f32.mrb[0].mxu0
    %926 = vdwg.mxu0
    %v928 = vsel %vm542, %v919, 0
    %v931 = vsel %vm542, %v924, 0
    %933 = vmatprep.subr.mxu0 0.0
    %934 = vmatpush1.msra.mxu0 %v349
    %935 = vmatprep.subr.mxu0 0.0
    %936 = vmatpush1.msra.mxu0 %v350
    %937 = vmatprep.subr.mxu0 0.0
    %938 = vmatpush1.msra.mxu0 0.0
    %939 = vmatprep.subr.mxu0 0.0
    %940 = vmatpush1.msra.mxu0 0.0
    %941 = vmatprep.subr.mxu0 0.0
    %942 = vmatpush1.msra.mxu0 0.0
    %943 = vmatprep.subr.mxu0 0.0
    %944 = vmatpush1.msra.mxu0 0.0
    %945 = vmatprep.subr.mxu0 0.0
    %946 = vmatpush1.msra.mxu0 0.0
    %947 = vmatprep.subr.mxu0 0.0
    %948 = vmatpush1.msra.mxu0 0.0
    %949 = vmatprep.subr.mxu0 0.0
    %950 = vmatpush1.msra.mxu0 0.0
    %951 = vmatprep.subr.mxu0 0.0
    %952 = vmatpush1.msra.mxu0 0.0
    %953 = vmatprep.subr.mxu0 0.0
    %954 = vmatpush1.msra.mxu0 0.0
    %955 = vmatprep.subr.mxu0 0.0
    %956 = vmatpush1.msra.mxu0 0.0
    %957 = vmatprep.subr.mxu0 0.0
    %958 = vmatpush1.msra.mxu0 0.0
    %959 = vmatprep.subr.mxu0 0.0
    %960 = vmatpush1.msra.mxu0 0.0
    %961 = vmatprep.subr.mxu0 0.0
    %962 = vmatpush1.msra.mxu0 0.0
    %963 = vmatprep.subr.mxu0 0.0
    %964 = vmatpush1.msra.mxu0 0.0
    %965 = vmatprep.subr.mxu0 0.0
    %966 = vmatpush1.msra.mxu0 0.0
    %967 = vmatprep.subr.mxu0 0.0
    %968 = vmatpush1.msra.mxu0 0.0
    %969 = vmatprep.subr.mxu0 0.0
    %970 = vmatpush1.msra.mxu0 0.0
    %971 = vmatprep.subr.mxu0 0.0
    %972 = vmatpush1.msra.mxu0 0.0
    %973 = vmatprep.subr.mxu0 0.0
    %974 = vmatpush1.msra.mxu0 0.0
    %975 = vmatprep.subr.mxu0 0.0
    %976 = vmatpush1.msra.mxu0 0.0
    %977 = vmatprep.subr.mxu0 0.0
    %978 = vmatpush1.msra.mxu0 0.0
    %979 = vmatprep.subr.mxu0 0.0
    %980 = vmatpush1.msra.mxu0 0.0
    %981 = vmatprep.subr.mxu0 0.0
    %982 = vmatpush1.msra.mxu0 0.0
    %983 = vmatprep.subr.mxu0 0.0
    %984 = vmatpush1.msra.mxu0 0.0
    %985 = vmatprep.subr.mxu0 0.0
    %986 = vmatpush1.msra.mxu0 0.0
    %987 = vmatprep.subr.mxu0 0.0
    %988 = vmatpush1.msra.mxu0 0.0
    %989 = vmatprep.subr.mxu0 0.0
    %990 = vmatpush1.msra.mxu0 0.0
    %991 = vmatprep.subr.mxu0 0.0
    %992 = vmatpush1.msra.mxu0 0.0
    %993 = vmatprep.subr.mxu0 0.0
    %994 = vmatpush1.msra.mxu0 0.0
    %995 = vmatprep.subr.mxu0 0.0
    %996 = vmatpush1.msra.mxu0 0.0
    %997 = vmatprep.mubr.f32.mxu0 0.0
    %998 = vmatmul.mubr.f32.gmra.mrb[0].mxu0 %v928
    %v999 = vpop.f32.mrb[0].mxu0
    %v1000 = vadd.f32 0.0, %v999
    %v1001 = vpop.f32.mrb[0].mxu0
    %1002 = vmatprep.mubr.f32.mxu0 0.0
    %1003 = vmatmul.mubr.f32.gmra.mrb[0].mxu0 %v931
    %v1004 = vpop.f32.mrb[0].mxu0
    %v1005 = vadd.f32 0.0, %v1004
    %v1006 = vpop.f32.mrb[0].mxu0
    %1007 = vdwg.mxu0
    %v1009 = vsel %vm542, %v646, 0
    %v1012 = vsel %vm542, %v651, 0
    %1014 = vmatprep.subr.mxu0 0.0
    %1015 = vmatpush1.msra.mxu0 %v347
    %1016 = vmatprep.subr.mxu0 0.0
    %1017 = vmatpush1.msra.mxu0 %v348
    %1018 = vmatprep.subr.mxu0 0.0
    %1019 = vmatpush1.msra.mxu0 0.0
    %1020 = vmatprep.subr.mxu0 0.0
    %1021 = vmatpush1.msra.mxu0 0.0
    %1022 = vmatprep.subr.mxu0 0.0
    %1023 = vmatpush1.msra.mxu0 0.0
    %1024 = vmatprep.subr.mxu0 0.0
    %1025 = vmatpush1.msra.mxu0 0.0
    %1026 = vmatprep.subr.mxu0 0.0
    %1027 = vmatpush1.msra.mxu0 0.0
    %1028 = vmatprep.subr.mxu0 0.0
    %1029 = vmatpush1.msra.mxu0 0.0
    %1030 = vmatprep.subr.mxu0 0.0
    %1031 = vmatpush1.msra.mxu0 0.0
    %1032 = vmatprep.subr.mxu0 0.0
    %1033 = vmatpush1.msra.mxu0 0.0
    %1034 = vmatprep.subr.mxu0 0.0
    %1035 = vmatpush1.msra.mxu0 0.0
    %1036 = vmatprep.subr.mxu0 0.0
    %1037 = vmatpush1.msra.mxu0 0.0
    %1038 = vmatprep.subr.mxu0 0.0
    %1039 = vmatpush1.msra.mxu0 0.0
    %1040 = vmatprep.subr.mxu0 0.0
    %1041 = vmatpush1.msra.mxu0 0.0
    %1042 = vmatprep.subr.mxu0 0.0
    %1043 = vmatpush1.msra.mxu0 0.0
    %1044 = vmatprep.subr.mxu0 0.0
    %1045 = vmatpush1.msra.mxu0 0.0
    %1046 = vmatprep.subr.mxu0 0.0
    %1047 = vmatpush1.msra.mxu0 0.0
    %1048 = vmatprep.subr.mxu0 0.0
    %1049 = vmatpush1.msra.mxu0 0.0
    %1050 = vmatprep.subr.mxu0 0.0
    %1051 = vmatpush1.msra.mxu0 0.0
    %1052 = vmatprep.subr.mxu0 0.0
    %1053 = vmatpush1.msra.mxu0 0.0
    %1054 = vmatprep.subr.mxu0 0.0
    %1055 = vmatpush1.msra.mxu0 0.0
    %1056 = vmatprep.subr.mxu0 0.0
    %1057 = vmatpush1.msra.mxu0 0.0
    %1058 = vmatprep.subr.mxu0 0.0
    %1059 = vmatpush1.msra.mxu0 0.0
    %1060 = vmatprep.subr.mxu0 0.0
    %1061 = vmatpush1.msra.mxu0 0.0
    %1062 = vmatprep.subr.mxu0 0.0
    %1063 = vmatpush1.msra.mxu0 0.0
    %1064 = vmatprep.subr.mxu0 0.0
    %1065 = vmatpush1.msra.mxu0 0.0
    %1066 = vmatprep.subr.mxu0 0.0
    %1067 = vmatpush1.msra.mxu0 0.0
    %1068 = vmatprep.subr.mxu0 0.0
    %1069 = vmatpush1.msra.mxu0 0.0
    %1070 = vmatprep.subr.mxu0 0.0
    %1071 = vmatpush1.msra.mxu0 0.0
    %1072 = vmatprep.subr.mxu0 0.0
    %1073 = vmatpush1.msra.mxu0 0.0
    %1074 = vmatprep.subr.mxu0 0.0
    %1075 = vmatpush1.msra.mxu0 0.0
    %1076 = vmatprep.subr.mxu0 0.0
    %1077 = vmatpush1.msra.mxu0 0.0
    %1078 = vmatprep.mubr.f32.mxu0 0.0
    %1079 = vmatmul.mubr.f32.gmra.mrb[0].mxu0 %v1009
    %v1080 = vpop.f32.mrb[0].mxu0
    %v1081 = vadd.f32 %v1000, %v1080
    %v1082 = vpop.f32.mrb[0].mxu0
    %1083 = vmatprep.mubr.f32.mxu0 0.0
    %1084 = vmatmul.mubr.f32.gmra.mrb[0].mxu0 %v1012
    %v1085 = vpop.f32.mrb[0].mxu0
    %v1086 = vadd.f32 %v1005, %v1085
    %v1087 = vpop.f32.mrb[0].mxu0
    %1088 = vdwg.mxu0
    %1089 = vrot.lane.b32.xlu0 %v289, 112
    %v1090 = vpop.permute.xlu0 %1089
    %1091 = vrot.lane.b32.xlu0 %v290, 112
    %v1092 = vpop.permute.xlu0 %1091
    %1093 = vrot.lane.b32.xlu0 %v345, 56
    %v1094 = vpop.permute.xlu0 %1093
    %1095 = vrot.lane.b32.xlu0 %v346, 56
    %v1096 = vpop.permute.xlu0 %1095
    %v1097 = vsel %vm361, %v1090, 0
    %v1099 = vsel %vm361, %v1092, 0
    %v1101 = vsel %vm361, %v1094, 0
    %v1103 = vsel %vm361, %v1096, 0
    %1105 = vmatprep.subr.mxu0 0.0
    %1106 = vmatpush1.xpose.msra.mxu0 %v1101
    %1107 = vmatprep.subr.mxu0 0.0
    %1108 = vmatpush1.xpose.msra.mxu0 %v1103
    %1109 = vmatprep.subr.mxu0 0.0
    %1110 = vmatpush1.xpose.msra.mxu0 0.0
    %1111 = vmatprep.subr.mxu0 0.0
    %1112 = vmatpush1.xpose.msra.mxu0 0.0
    %1113 = vmatprep.subr.mxu0 0.0
    %1114 = vmatpush1.xpose.msra.mxu0 0.0
    %1115 = vmatprep.subr.mxu0 0.0
    %1116 = vmatpush1.xpose.msra.mxu0 0.0
    %1117 = vmatprep.subr.mxu0 0.0
    %1118 = vmatpush1.xpose.msra.mxu0 0.0
    %1119 = vmatprep.subr.mxu0 0.0
    %1120 = vmatpush1.xpose.msra.mxu0 0.0
    %1121 = vmatprep.subr.mxu0 0.0
    %1122 = vmatpush1.xpose.msra.mxu0 0.0
    %1123 = vmatprep.subr.mxu0 0.0
    %1124 = vmatpush1.xpose.msra.mxu0 0.0
    %1125 = vmatprep.subr.mxu0 0.0
    %1126 = vmatpush1.xpose.msra.mxu0 0.0
    %1127 = vmatprep.subr.mxu0 0.0
    %1128 = vmatpush1.xpose.msra.mxu0 0.0
    %1129 = vmatprep.subr.mxu0 0.0
    %1130 = vmatpush1.xpose.msra.mxu0 0.0
    %1131 = vmatprep.subr.mxu0 0.0
    %1132 = vmatpush1.xpose.msra.mxu0 0.0
    %1133 = vmatprep.subr.mxu0 0.0
    %1134 = vmatpush1.xpose.msra.mxu0 0.0
    %1135 = vmatprep.subr.mxu0 0.0
    %1136 = vmatpush1.xpose.msra.mxu0 0.0
    %1137 = vmatprep.subr.mxu0 0.0
    %1138 = vmatpush1.xpose.msra.mxu0 0.0
    %1139 = vmatprep.subr.mxu0 0.0
    %1140 = vmatpush1.xpose.msra.mxu0 0.0
    %1141 = vmatprep.subr.mxu0 0.0
    %1142 = vmatpush1.xpose.msra.mxu0 0.0
    %1143 = vmatprep.subr.mxu0 0.0
    %1144 = vmatpush1.xpose.msra.mxu0 0.0
    %1145 = vmatprep.subr.mxu0 0.0
    %1146 = vmatpush1.xpose.msra.mxu0 0.0
    %1147 = vmatprep.subr.mxu0 0.0
    %1148 = vmatpush1.xpose.msra.mxu0 0.0
    %1149 = vmatprep.subr.mxu0 0.0
    %1150 = vmatpush1.xpose.msra.mxu0 0.0
    %1151 = vmatprep.subr.mxu0 0.0
    %1152 = vmatpush1.xpose.msra.mxu0 0.0
    %1153 = vmatprep.subr.mxu0 0.0
    %1154 = vmatpush1.xpose.msra.mxu0 0.0
    %1155 = vmatprep.subr.mxu0 0.0
    %1156 = vmatpush1.xpose.msra.mxu0 0.0
    %1157 = vmatprep.subr.mxu0 0.0
    %1158 = vmatpush1.xpose.msra.mxu0 0.0
    %1159 = vmatprep.subr.mxu0 0.0
    %1160 = vmatpush1.xpose.msra.mxu0 0.0
    %1161 = vmatprep.subr.mxu0 0.0
    %1162 = vmatpush1.xpose.msra.mxu0 0.0
    %1163 = vmatprep.subr.mxu0 0.0
    %1164 = vmatpush1.xpose.msra.mxu0 0.0
    %1165 = vmatprep.subr.mxu0 0.0
    %1166 = vmatpush1.xpose.msra.mxu0 0.0
    %1167 = vmatprep.subr.mxu0 0.0
    %1168 = vmatpush1.xpose.msra.mxu0 0.0
    %1169 = vmatprep.mubr.f32.mxu0 0.0
    %1170 = vmatmul.mubr.f32.gmra.mrb[0].mxu0 %v1097
    %v1171 = vpop.f32.mrb[0].mxu0
    %v1172 = vadd.f32 0.0, %v1171
    %v1173 = vpop.f32.mrb[0].mxu0
    %1174 = vmatprep.mubr.f32.mxu0 0.0
    %1175 = vmatmul.mubr.f32.gmra.mrb[0].mxu0 %v1099
    %v1176 = vpop.f32.mrb[0].mxu0
    %v1177 = vadd.f32 0.0, %v1176
    %v1178 = vpop.f32.mrb[0].mxu0
    %1179 = vdwg.mxu0
    %1180 = vrot.lane.b32.xlu0 %v267, 112
    %v1181 = vpop.permute.xlu0 %1180
    %1182 = vrot.lane.b32.xlu0 %v268, 112
    %v1183 = vpop.permute.xlu0 %1182
    %1184 = vrot.lane.b32.xlu0 %v319, 56
    %v1185 = vpop.permute.xlu0 %1184
    %1186 = vrot.lane.b32.xlu0 %v320, 56
    %v1187 = vpop.permute.xlu0 %1186
    %v1188 = vsel %vm361, %v1181, 0
    %v1190 = vsel %vm361, %v1183, 0
    %v1192 = vsel %vm361, %v1185, 0
    %v1194 = vsel %vm361, %v1187, 0
    %1196 = vmatprep.subr.mxu0 0.0
    %1197 = vmatpush1.xpose.msra.mxu0 %v1192
    %1198 = vmatprep.subr.mxu0 0.0
    %1199 = vmatpush1.xpose.msra.mxu0 %v1194
    %1200 = vmatprep.subr.mxu0 0.0
    %1201 = vmatpush1.xpose.msra.mxu0 0.0
    %1202 = vmatprep.subr.mxu0 0.0
    %1203 = vmatpush1.xpose.msra.mxu0 0.0
    %1204 = vmatprep.subr.mxu0 0.0
    %1205 = vmatpush1.xpose.msra.mxu0 0.0
    %1206 = vmatprep.subr.mxu0 0.0
    %1207 = vmatpush1.xpose.msra.mxu0 0.0
    %1208 = vmatprep.subr.mxu0 0.0
    %1209 = vmatpush1.xpose.msra.mxu0 0.0
    %1210 = vmatprep.subr.mxu0 0.0
    %1211 = vmatpush1.xpose.msra.mxu0 0.0
    %1212 = vmatprep.subr.mxu0 0.0
    %1213 = vmatpush1.xpose.msra.mxu0 0.0
    %1214 = vmatprep.subr.mxu0 0.0
    %1215 = vmatpush1.xpose.msra.mxu0 0.0
    %1216 = vmatprep.subr.mxu0 0.0
    %1217 = vmatpush1.xpose.msra.mxu0 0.0
    %1218 = vmatprep.subr.mxu0 0.0
    %1219 = vmatpush1.xpose.msra.mxu0 0.0
    %1220 = vmatprep.subr.mxu0 0.0
    %1221 = vmatpush1.xpose.msra.mxu0 0.0
    %1222 = vmatprep.subr.mxu0 0.0
    %1223 = vmatpush1.xpose.msra.mxu0 0.0
    %1224 = vmatprep.subr.mxu0 0.0
    %1225 = vmatpush1.xpose.msra.mxu0 0.0
    %1226 = vmatprep.subr.mxu0 0.0
    %1227 = vmatpush1.xpose.msra.mxu0 0.0
    %1228 = vmatprep.subr.mxu0 0.0
    %1229 = vmatpush1.xpose.msra.mxu0 0.0
    %1230 = vmatprep.subr.mxu0 0.0
    %1231 = vmatpush1.xpose.msra.mxu0 0.0
    %1232 = vmatprep.subr.mxu0 0.0
    %1233 = vmatpush1.xpose.msra.mxu0 0.0
    %1234 = vmatprep.subr.mxu0 0.0
    %1235 = vmatpush1.xpose.msra.mxu0 0.0
    %1236 = vmatprep.subr.mxu0 0.0
    %1237 = vmatpush1.xpose.msra.mxu0 0.0
    %1238 = vmatprep.subr.mxu0 0.0
    %1239 = vmatpush1.xpose.msra.mxu0 0.0
    %1240 = vmatprep.subr.mxu0 0.0
    %1241 = vmatpush1.xpose.msra.mxu0 0.0
    %1242 = vmatprep.subr.mxu0 0.0
    %1243 = vmatpush1.xpose.msra.mxu0 0.0
    %1244 = vmatprep.subr.mxu0 0.0
    %1245 = vmatpush1.xpose.msra.mxu0 0.0
    %1246 = vmatprep.subr.mxu0 0.0
    %1247 = vmatpush1.xpose.msra.mxu0 0.0
    %1248 = vmatprep.subr.mxu0 0.0
    %1249 = vmatpush1.xpose.msra.mxu0 0.0
    %1250 = vmatprep.subr.mxu0 0.0
    %1251 = vmatpush1.xpose.msra.mxu0 0.0
    %1252 = vmatprep.subr.mxu0 0.0
    %1253 = vmatpush1.xpose.msra.mxu0 0.0
    %1254 = vmatprep.subr.mxu0 0.0
    %1255 = vmatpush1.xpose.msra.mxu0 0.0
    %1256 = vmatprep.subr.mxu0 0.0
    %1257 = vmatpush1.xpose.msra.mxu0 0.0
    %1258 = vmatprep.subr.mxu0 0.0
    %1259 = vmatpush1.xpose.msra.mxu0 0.0
    %1260 = vmatprep.mubr.f32.mxu0 0.0
    %1261 = vmatmul.mubr.f32.gmra.mrb[0].mxu0 %v1188
    %v1262 = vpop.f32.mrb[0].mxu0
    %v1263 = vadd.f32 %v1172, %v1262
    %v1264 = vpop.f32.mrb[0].mxu0
    %1265 = vmatprep.mubr.f32.mxu0 0.0
    %1266 = vmatmul.mubr.f32.gmra.mrb[0].mxu0 %v1190
    %v1267 = vpop.f32.mrb[0].mxu0
    %v1268 = vadd.f32 %v1177, %v1267
    %v1269 = vpop.f32.mrb[0].mxu0
    %1270 = vdwg.mxu0
    %v1271 = vmul.f32 %v1263, 0.25
    %v1272 = vmul.f32 %v1268, 0.25
    %v1273 = vadd.f32 %v1271, %v133
    %v1274 = vadd.f32 %v1272, %v134
    %v1275 = vsel %vm542, %v1273, -inf
    %1276 = vmax.xlane.f32.xlu0 %v1275
    %v1277 = vpop.xlane.xlu0 %1276
    %v1278 = vsel %vm542, %v1274, -inf
    %1279 = vmax.xlane.f32.xlu0 %v1278
    %v1280 = vpop.xlane.xlu0 %1279
    %v1281 = vsub.f32 %v1273, %v1277
    %v1282 = vsub.f32 %v1274, %v1280
    %v1283 = vmul.f32 %v1281, 1.442695
    %v1284 = vpow.pop %v1283
    %v1285 = vmul.f32 %v1282, 1.442695
    %v1286 = vpow.pop %v1285
    %v1287 = vsel %vm542, %v1284, 0.0
    %1288 = vadd.xlane.f32.xlu0 %v1287
    %v1289 = vpop.xlane.xlu0 %1288
    %v1290 = vsel %vm542, %v1286, 0.0
    %1291 = vadd.xlane.f32.xlu0 %v1290
    %v1292 = vpop.xlane.xlu0 %1291
    %v1293 = vrcp.pop %v1289
    %v1294 = vrcp.pop %v1292
    %v1295 = vmul.f32 %v1284, %v1293
    %v1296 = vmul.f32 %v1286, %v1294
    %1297 = vrot.lane.b32.xlu0 %v241, 16
    %v1298 = vpop.permute.xlu0 %1297
    %1299 = vrot.lane.b32.xlu0 %v244, 16
    %v1300 = vpop.permute.xlu0 %1299
    %v1304 = vsel %vm542, %v1295, 0
    %v1307 = vsel %vm542, %v1296, 0
    %1309 = vmatprep.subr.mxu0 0.0
    %1310 = vmatpush1.msra.mxu0 %v1298
    %1311 = vmatprep.subr.mxu0 0.0
    %1312 = vmatpush1.msra.mxu0 %v1300
    %1313 = vmatprep.subr.mxu0 0.0
    %1314 = vmatpush1.msra.mxu0 0.0
    %1315 = vmatprep.subr.mxu0 0.0
    %1316 = vmatpush1.msra.mxu0 0.0
    %1317 = vmatprep.subr.mxu0 0.0
    %1318 = vmatpush1.msra.mxu0 0.0
    %1319 = vmatprep.subr.mxu0 0.0
    %1320 = vmatpush1.msra.mxu0 0.0
    %1321 = vmatprep.subr.mxu0 0.0
    %1322 = vmatpush1.msra.mxu0 0.0
    %1323 = vmatprep.subr.mxu0 0.0
    %1324 = vmatpush1.msra.mxu0 0.0
    %1325 = vmatprep.subr.mxu0 0.0
    %1326 = vmatpush1.msra.mxu0 0.0
    %1327 = vmatprep.subr.mxu0 0.0
    %1328 = vmatpush1.msra.mxu0 0.0
    %1329 = vmatprep.subr.mxu0 0.0
    %1330 = vmatpush1.msra.mxu0 0.0
    %1331 = vmatprep.subr.mxu0 0.0
    %1332 = vmatpush1.msra.mxu0 0.0
    %1333 = vmatprep.subr.mxu0 0.0
    %1334 = vmatpush1.msra.mxu0 0.0
    %1335 = vmatprep.subr.mxu0 0.0
    %1336 = vmatpush1.msra.mxu0 0.0
    %1337 = vmatprep.subr.mxu0 0.0
    %1338 = vmatpush1.msra.mxu0 0.0
    %1339 = vmatprep.subr.mxu0 0.0
    %1340 = vmatpush1.msra.mxu0 0.0
    %1341 = vmatprep.subr.mxu0 0.0
    %1342 = vmatpush1.msra.mxu0 0.0
    %1343 = vmatprep.subr.mxu0 0.0
    %1344 = vmatpush1.msra.mxu0 0.0
    %1345 = vmatprep.subr.mxu0 0.0
    %1346 = vmatpush1.msra.mxu0 0.0
    %1347 = vmatprep.subr.mxu0 0.0
    %1348 = vmatpush1.msra.mxu0 0.0
    %1349 = vmatprep.subr.mxu0 0.0
    %1350 = vmatpush1.msra.mxu0 0.0
    %1351 = vmatprep.subr.mxu0 0.0
    %1352 = vmatpush1.msra.mxu0 0.0
    %1353 = vmatprep.subr.mxu0 0.0
    %1354 = vmatpush1.msra.mxu0 0.0
    %1355 = vmatprep.subr.mxu0 0.0
    %1356 = vmatpush1.msra.mxu0 0.0
    %1357 = vmatprep.subr.mxu0 0.0
    %1358 = vmatpush1.msra.mxu0 0.0
    %1359 = vmatprep.subr.mxu0 0.0
    %1360 = vmatpush1.msra.mxu0 0.0
    %1361 = vmatprep.subr.mxu0 0.0
    %1362 = vmatpush1.msra.mxu0 0.0
    %1363 = vmatprep.subr.mxu0 0.0
    %1364 = vmatpush1.msra.mxu0 0.0
    %1365 = vmatprep.subr.mxu0 0.0
    %1366 = vmatpush1.msra.mxu0 0.0
    %1367 = vmatprep.subr.mxu0 0.0
    %1368 = vmatpush1.msra.mxu0 0.0
    %1369 = vmatprep.subr.mxu0 0.0
    %1370 = vmatpush1.msra.mxu0 0.0
    %1371 = vmatprep.subr.mxu0 0.0
    %1372 = vmatpush1.msra.mxu0 0.0
    %1373 = vmatprep.mubr.f32.mxu0 0.0
    %1374 = vmatmul.mubr.f32.gmra.mrb[0].mxu0 %v1304
    %v1375 = vpop.f32.mrb[0].mxu0
    %v1376 = vadd.f32 0.0, %v1375
    %v1377 = vpop.f32.mrb[0].mxu0
    %1378 = vmatprep.mubr.f32.mxu0 0.0
    %1379 = vmatmul.mubr.f32.gmra.mrb[0].mxu0 %v1307
    %v1380 = vpop.f32.mrb[0].mxu0
    %v1381 = vadd.f32 0.0, %v1380
    %v1382 = vpop.f32.mrb[0].mxu0
    %1383 = vdwg.mxu0
    %v1385 = vsel %vm542, %v1376, 0
    %v1388 = vsel %vm542, %v1381, 0
    %1390 = vmatprep.subr.mxu0 0.0
    %1391 = vmatpush1.msra.mxu0 %v351
    %1392 = vmatprep.subr.mxu0 0.0
    %1393 = vmatpush1.msra.mxu0 %v352
    %1394 = vmatprep.subr.mxu0 0.0
    %1395 = vmatpush1.msra.mxu0 0.0
    %1396 = vmatprep.subr.mxu0 0.0
    %1397 = vmatpush1.msra.mxu0 0.0
    %1398 = vmatprep.subr.mxu0 0.0
    %1399 = vmatpush1.msra.mxu0 0.0
    %1400 = vmatprep.subr.mxu0 0.0
    %1401 = vmatpush1.msra.mxu0 0.0
    %1402 = vmatprep.subr.mxu0 0.0
    %1403 = vmatpush1.msra.mxu0 0.0
    %1404 = vmatprep.subr.mxu0 0.0
    %1405 = vmatpush1.msra.mxu0 0.0
    %1406 = vmatprep.subr.mxu0 0.0
    %1407 = vmatpush1.msra.mxu0 0.0
    %1408 = vmatprep.subr.mxu0 0.0
    %1409 = vmatpush1.msra.mxu0 0.0
    %1410 = vmatprep.subr.mxu0 0.0
    %1411 = vmatpush1.msra.mxu0 0.0
    %1412 = vmatprep.subr.mxu0 0.0
    %1413 = vmatpush1.msra.mxu0 0.0
    %1414 = vmatprep.subr.mxu0 0.0
    %1415 = vmatpush1.msra.mxu0 0.0
    %1416 = vmatprep.subr.mxu0 0.0
    %1417 = vmatpush1.msra.mxu0 0.0
    %1418 = vmatprep.subr.mxu0 0.0
    %1419 = vmatpush1.msra.mxu0 0.0
    %1420 = vmatprep.subr.mxu0 0.0
    %1421 = vmatpush1.msra.mxu0 0.0
    %1422 = vmatprep.subr.mxu0 0.0
    %1423 = vmatpush1.msra.mxu0 0.0
    %1424 = vmatprep.subr.mxu0 0.0
    %1425 = vmatpush1.msra.mxu0 0.0
    %1426 = vmatprep.subr.mxu0 0.0
    %1427 = vmatpush1.msra.mxu0 0.0
    %1428 = vmatprep.subr.mxu0 0.0
    %1429 = vmatpush1.msra.mxu0 0.0
    %1430 = vmatprep.subr.mxu0 0.0
    %1431 = vmatpush1.msra.mxu0 0.0
    %1432 = vmatprep.subr.mxu0 0.0
    %1433 = vmatpush1.msra.mxu0 0.0
    %1434 = vmatprep.subr.mxu0 0.0
    %1435 = vmatpush1.msra.mxu0 0.0
    %1436 = vmatprep.subr.mxu0 0.0
    %1437 = vmatpush1.msra.mxu0 0.0
    %1438 = vmatprep.subr.mxu0 0.0
    %1439 = vmatpush1.msra.mxu0 0.0
    %1440 = vmatprep.subr.mxu0 0.0
    %1441 = vmatpush1.msra.mxu0 0.0
    %1442 = vmatprep.subr.mxu0 0.0
    %1443 = vmatpush1.msra.mxu0 0.0
    %1444 = vmatprep.subr.mxu0 0.0
    %1445 = vmatpush1.msra.mxu0 0.0
    %1446 = vmatprep.subr.mxu0 0.0
    %1447 = vmatpush1.msra.mxu0 0.0
    %1448 = vmatprep.subr.mxu0 0.0
    %1449 = vmatpush1.msra.mxu0 0.0
    %1450 = vmatprep.subr.mxu0 0.0
    %1451 = vmatpush1.msra.mxu0 0.0
    %1452 = vmatprep.subr.mxu0 0.0
    %1453 = vmatpush1.msra.mxu0 0.0
    %1454 = vmatprep.mubr.f32.mxu0 0.0
    %1455 = vmatmul.mubr.f32.gmra.mrb[0].mxu0 %v1385
    %v1456 = vpop.f32.mrb[0].mxu0
    %v1457 = vadd.f32 0.0, %v1456
    %v1458 = vpop.f32.mrb[0].mxu0
    %1459 = vmatprep.mubr.f32.mxu0 0.0
    %1460 = vmatmul.mubr.f32.gmra.mrb[0].mxu0 %v1388
    %v1461 = vpop.f32.mrb[0].mxu0
    %v1462 = vadd.f32 0.0, %v1461
    %v1463 = vpop.f32.mrb[0].mxu0
    %1464 = vdwg.mxu0
    %v1465 = vadd.f32 %v1081, %v1457
    %v1466 = vadd.f32 %v1086, %v1462
    %1467 = vrot.lane.b32.xlu0 %v289, 104
    %v1468 = vpop.permute.xlu0 %1467
    %1469 = vrot.lane.b32.xlu0 %v290, 104
    %v1470 = vpop.permute.xlu0 %1469
    %v1471 = vsel %vm361, %v1468, 0
    %v1473 = vsel %vm361, %v1470, 0
    %1475 = vmatprep.subr.mxu0 0.0
    %1476 = vmatpush1.xpose.msra.mxu0 %v1101
    %1477 = vmatprep.subr.mxu0 0.0
    %1478 = vmatpush1.xpose.msra.mxu0 %v1103
    %1479 = vmatprep.subr.mxu0 0.0
    %1480 = vmatpush1.xpose.msra.mxu0 0.0
    %1481 = vmatprep.subr.mxu0 0.0
    %1482 = vmatpush1.xpose.msra.mxu0 0.0
    %1483 = vmatprep.subr.mxu0 0.0
    %1484 = vmatpush1.xpose.msra.mxu0 0.0
    %1485 = vmatprep.subr.mxu0 0.0
    %1486 = vmatpush1.xpose.msra.mxu0 0.0
    %1487 = vmatprep.subr.mxu0 0.0
    %1488 = vmatpush1.xpose.msra.mxu0 0.0
    %1489 = vmatprep.subr.mxu0 0.0
    %1490 = vmatpush1.xpose.msra.mxu0 0.0
    %1491 = vmatprep.subr.mxu0 0.0
    %1492 = vmatpush1.xpose.msra.mxu0 0.0
    %1493 = vmatprep.subr.mxu0 0.0
    %1494 = vmatpush1.xpose.msra.mxu0 0.0
    %1495 = vmatprep.subr.mxu0 0.0
    %1496 = vmatpush1.xpose.msra.mxu0 0.0
    %1497 = vmatprep.subr.mxu0 0.0
    %1498 = vmatpush1.xpose.msra.mxu0 0.0
    %1499 = vmatprep.subr.mxu0 0.0
    %1500 = vmatpush1.xpose.msra.mxu0 0.0
    %1501 = vmatprep.subr.mxu0 0.0
    %1502 = vmatpush1.xpose.msra.mxu0 0.0
    %1503 = vmatprep.subr.mxu0 0.0
    %1504 = vmatpush1.xpose.msra.mxu0 0.0
    %1505 = vmatprep.subr.mxu0 0.0
    %1506 = vmatpush1.xpose.msra.mxu0 0.0
    %1507 = vmatprep.subr.mxu0 0.0
    %1508 = vmatpush1.xpose.msra.mxu0 0.0
    %1509 = vmatprep.subr.mxu0 0.0
    %1510 = vmatpush1.xpose.msra.mxu0 0.0
    %1511 = vmatprep.subr.mxu0 0.0
    %1512 = vmatpush1.xpose.msra.mxu0 0.0
    %1513 = vmatprep.subr.mxu0 0.0
    %1514 = vmatpush1.xpose.msra.mxu0 0.0
    %1515 = vmatprep.subr.mxu0 0.0
    %1516 = vmatpush1.xpose.msra.mxu0 0.0
    %1517 = vmatprep.subr.mxu0 0.0
    %1518 = vmatpush1.xpose.msra.mxu0 0.0
    %1519 = vmatprep.subr.mxu0 0.0
    %1520 = vmatpush1.xpose.msra.mxu0 0.0
    %1521 = vmatprep.subr.mxu0 0.0
    %1522 = vmatpush1.xpose.msra.mxu0 0.0
    %1523 = vmatprep.subr.mxu0 0.0
    %1524 = vmatpush1.xpose.msra.mxu0 0.0
    %1525 = vmatprep.subr.mxu0 0.0
    %1526 = vmatpush1.xpose.msra.mxu0 0.0
    %1527 = vmatprep.subr.mxu0 0.0
    %1528 = vmatpush1.xpose.msra.mxu0 0.0
    %1529 = vmatprep.subr.mxu0 0.0
    %1530 = vmatpush1.xpose.msra.mxu0 0.0
    %1531 = vmatprep.subr.mxu0 0.0
    %1532 = vmatpush1.xpose.msra.mxu0 0.0
    %1533 = vmatprep.subr.mxu0 0.0
    %1534 = vmatpush1.xpose.msra.mxu0 0.0
    %1535 = vmatprep.subr.mxu0 0.0
    %1536 = vmatpush1.xpose.msra.mxu0 0.0
    %1537 = vmatprep.subr.mxu0 0.0
    %1538 = vmatpush1.xpose.msra.mxu0 0.0
    %1539 = vmatprep.mubr.f32.mxu0 0.0
    %1540 = vmatmul.mubr.f32.gmra.mrb[0].mxu0 %v1471
    %v1541 = vpop.f32.mrb[0].mxu0
    %v1542 = vadd.f32 0.0, %v1541
    %v1543 = vpop.f32.mrb[0].mxu0
    %1544 = vmatprep.mubr.f32.mxu0 0.0
    %1545 = vmatmul.mubr.f32.gmra.mrb[0].mxu0 %v1473
    %v1546 = vpop.f32.mrb[0].mxu0
    %v1547 = vadd.f32 0.0, %v1546
    %v1548 = vpop.f32.mrb[0].mxu0
    %1549 = vdwg.mxu0
    %1550 = vrot.lane.b32.xlu0 %v267, 104
    %v1551 = vpop.permute.xlu0 %1550
    %1552 = vrot.lane.b32.xlu0 %v268, 104
    %v1553 = vpop.permute.xlu0 %1552
    %v1554 = vsel %vm361, %v1551, 0
    %v1556 = vsel %vm361, %v1553, 0
    %1558 = vmatprep.subr.mxu0 0.0
    %1559 = vmatpush1.xpose.msra.mxu0 %v1192
    %1560 = vmatprep.subr.mxu0 0.0
    %1561 = vmatpush1.xpose.msra.mxu0 %v1194
    %1562 = vmatprep.subr.mxu0 0.0
    %1563 = vmatpush1.xpose.msra.mxu0 0.0
    %1564 = vmatprep.subr.mxu0 0.0
    %1565 = vmatpush1.xpose.msra.mxu0 0.0
    %1566 = vmatprep.subr.mxu0 0.0
    %1567 = vmatpush1.xpose.msra.mxu0 0.0
    %1568 = vmatprep.subr.mxu0 0.0
    %1569 = vmatpush1.xpose.msra.mxu0 0.0
    %1570 = vmatprep.subr.mxu0 0.0
    %1571 = vmatpush1.xpose.msra.mxu0 0.0
    %1572 = vmatprep.subr.mxu0 0.0
    %1573 = vmatpush1.xpose.msra.mxu0 0.0
    %1574 = vmatprep.subr.mxu0 0.0
    %1575 = vmatpush1.xpose.msra.mxu0 0.0
    %1576 = vmatprep.subr.mxu0 0.0
    %1577 = vmatpush1.xpose.msra.mxu0 0.0
    %1578 = vmatprep.subr.mxu0 0.0
    %1579 = vmatpush1.xpose.msra.mxu0 0.0
    %1580 = vmatprep.subr.mxu0 0.0
    %1581 = vmatpush1.xpose.msra.mxu0 0.0
    %1582 = vmatprep.subr.mxu0 0.0
    %1583 = vmatpush1.xpose.msra.mxu0 0.0
    %1584 = vmatprep.subr.mxu0 0.0
    %1585 = vmatpush1.xpose.msra.mxu0 0.0
    %1586 = vmatprep.subr.mxu0 0.0
    %1587 = vmatpush1.xpose.msra.mxu0 0.0
    %1588 = vmatprep.subr.mxu0 0.0
    %1589 = vmatpush1.xpose.msra.mxu0 0.0
    %1590 = vmatprep.subr.mxu0 0.0
    %1591 = vmatpush1.xpose.msra.mxu0 0.0
    %1592 = vmatprep.subr.mxu0 0.0
    %1593 = vmatpush1.xpose.msra.mxu0 0.0
    %1594 = vmatprep.subr.mxu0 0.0
    %1595 = vmatpush1.xpose.msra.mxu0 0.0
    %1596 = vmatprep.subr.mxu0 0.0
    %1597 = vmatpush1.xpose.msra.mxu0 0.0
    %1598 = vmatprep.subr.mxu0 0.0
    %1599 = vmatpush1.xpose.msra.mxu0 0.0
    %1600 = vmatprep.subr.mxu0 0.0
    %1601 = vmatpush1.xpose.msra.mxu0 0.0
    %1602 = vmatprep.subr.mxu0 0.0
    %1603 = vmatpush1.xpose.msra.mxu0 0.0
    %1604 = vmatprep.subr.mxu0 0.0
    %1605 = vmatpush1.xpose.msra.mxu0 0.0
    %1606 = vmatprep.subr.mxu0 0.0
    %1607 = vmatpush1.xpose.msra.mxu0 0.0
    %1608 = vmatprep.subr.mxu0 0.0
    %1609 = vmatpush1.xpose.msra.mxu0 0.0
    %1610 = vmatprep.subr.mxu0 0.0
    %1611 = vmatpush1.xpose.msra.mxu0 0.0
    %1612 = vmatprep.subr.mxu0 0.0
    %1613 = vmatpush1.xpose.msra.mxu0 0.0
    %1614 = vmatprep.subr.mxu0 0.0
    %1615 = vmatpush1.xpose.msra.mxu0 0.0
    %1616 = vmatprep.subr.mxu0 0.0
    %1617 = vmatpush1.xpose.msra.mxu0 0.0
    %1618 = vmatprep.subr.mxu0 0.0
    %1619 = vmatpush1.xpose.msra.mxu0 0.0
    %1620 = vmatprep.subr.mxu0 0.0
    %1621 = vmatpush1.xpose.msra.mxu0 0.0
    %1622 = vmatprep.mubr.f32.mxu0 0.0
    %1623 = vmatmul.mubr.f32.gmra.mrb[0].mxu0 %v1554
    %v1624 = vpop.f32.mrb[0].mxu0
    %v1625 = vadd.f32 %v1542, %v1624
    %v1626 = vpop.f32.mrb[0].mxu0
    %1627 = vmatprep.mubr.f32.mxu0 0.0
    %1628 = vmatmul.mubr.f32.gmra.mrb[0].mxu0 %v1556
    %v1629 = vpop.f32.mrb[0].mxu0
    %v1630 = vadd.f32 %v1547, %v1629
    %v1631 = vpop.f32.mrb[0].mxu0
    %1632 = vdwg.mxu0
    %v1633 = vmul.f32 %v1625, 0.25
    %v1634 = vmul.f32 %v1630, 0.25
    %v1635 = vadd.f32 %v1633, %v133
    %v1636 = vadd.f32 %v1634, %v134
    %v1637 = vsel %vm542, %v1635, -inf
    %1638 = vmax.xlane.f32.xlu0 %v1637
    %v1639 = vpop.xlane.xlu0 %1638
    %v1640 = vsel %vm542, %v1636, -inf
    %1641 = vmax.xlane.f32.xlu0 %v1640
    %v1642 = vpop.xlane.xlu0 %1641
    %v1643 = vsub.f32 %v1635, %v1639
    %v1644 = vsub.f32 %v1636, %v1642
    %v1645 = vmul.f32 %v1643, 1.442695
    %v1646 = vpow.pop %v1645
    %v1647 = vmul.f32 %v1644, 1.442695
    %v1648 = vpow.pop %v1647
    %v1649 = vsel %vm542, %v1646, 0.0
    %1650 = vadd.xlane.f32.xlu0 %v1649
    %v1651 = vpop.xlane.xlu0 %1650
    %v1652 = vsel %vm542, %v1648, 0.0
    %1653 = vadd.xlane.f32.xlu0 %v1652
    %v1654 = vpop.xlane.xlu0 %1653
    %v1655 = vrcp.pop %v1651
    %v1656 = vrcp.pop %v1654
    %v1657 = vmul.f32 %v1646, %v1655
    %v1658 = vmul.f32 %v1648, %v1656
    %v1660 = vsel %vm542, %v1657, 0
    %v1663 = vsel %vm542, %v1658, 0
    %1665 = vmatprep.subr.mxu0 0.0
    %1666 = vmatpush1.msra.mxu0 %v1298
    %1667 = vmatprep.subr.mxu0 0.0
    %1668 = vmatpush1.msra.mxu0 %v1300
    %1669 = vmatprep.subr.mxu0 0.0
    %1670 = vmatpush1.msra.mxu0 0.0
    %1671 = vmatprep.subr.mxu0 0.0
    %1672 = vmatpush1.msra.mxu0 0.0
    %1673 = vmatprep.subr.mxu0 0.0
    %1674 = vmatpush1.msra.mxu0 0.0
    %1675 = vmatprep.subr.mxu0 0.0
    %1676 = vmatpush1.msra.mxu0 0.0
    %1677 = vmatprep.subr.mxu0 0.0
    %1678 = vmatpush1.msra.mxu0 0.0
    %1679 = vmatprep.subr.mxu0 0.0
    %1680 = vmatpush1.msra.mxu0 0.0
    %1681 = vmatprep.subr.mxu0 0.0
    %1682 = vmatpush1.msra.mxu0 0.0
    %1683 = vmatprep.subr.mxu0 0.0
    %1684 = vmatpush1.msra.mxu0 0.0
    %1685 = vmatprep.subr.mxu0 0.0
    %1686 = vmatpush1.msra.mxu0 0.0
    %1687 = vmatprep.subr.mxu0 0.0
    %1688 = vmatpush1.msra.mxu0 0.0
    %1689 = vmatprep.subr.mxu0 0.0
    %1690 = vmatpush1.msra.mxu0 0.0
    %1691 = vmatprep.subr.mxu0 0.0
    %1692 = vmatpush1.msra.mxu0 0.0
    %1693 = vmatprep.subr.mxu0 0.0
    %1694 = vmatpush1.msra.mxu0 0.0
    %1695 = vmatprep.subr.mxu0 0.0
    %1696 = vmatpush1.msra.mxu0 0.0
    %1697 = vmatprep.subr.mxu0 0.0
    %1698 = vmatpush1.msra.mxu0 0.0
    %1699 = vmatprep.subr.mxu0 0.0
    %1700 = vmatpush1.msra.mxu0 0.0
    %1701 = vmatprep.subr.mxu0 0.0
    %1702 = vmatpush1.msra.mxu0 0.0
    %1703 = vmatprep.subr.mxu0 0.0
    %1704 = vmatpush1.msra.mxu0 0.0
    %1705 = vmatprep.subr.mxu0 0.0
    %1706 = vmatpush1.msra.mxu0 0.0
    %1707 = vmatprep.subr.mxu0 0.0
    %1708 = vmatpush1.msra.mxu0 0.0
    %1709 = vmatprep.subr.mxu0 0.0
    %1710 = vmatpush1.msra.mxu0 0.0
    %1711 = vmatprep.subr.mxu0 0.0
    %1712 = vmatpush1.msra.mxu0 0.0
    %1713 = vmatprep.subr.mxu0 0.0
    %1714 = vmatpush1.msra.mxu0 0.0
    %1715 = vmatprep.subr.mxu0 0.0
    %1716 = vmatpush1.msra.mxu0 0.0
    %1717 = vmatprep.subr.mxu0 0.0
    %1718 = vmatpush1.msra.mxu0 0.0
    %1719 = vmatprep.subr.mxu0 0.0
    %1720 = vmatpush1.msra.mxu0 0.0
    %1721 = vmatprep.subr.mxu0 0.0
    %1722 = vmatpush1.msra.mxu0 0.0
    %1723 = vmatprep.subr.mxu0 0.0
    %1724 = vmatpush1.msra.mxu0 0.0
    %1725 = vmatprep.subr.mxu0 0.0
    %1726 = vmatpush1.msra.mxu0 0.0
    %1727 = vmatprep.subr.mxu0 0.0
    %1728 = vmatpush1.msra.mxu0 0.0
    %1729 = vmatprep.mubr.f32.mxu0 0.0
    %1730 = vmatmul.mubr.f32.gmra.mrb[0].mxu0 %v1660
    %v1731 = vpop.f32.mrb[0].mxu0
    %v1732 = vadd.f32 0.0, %v1731
    %v1733 = vpop.f32.mrb[0].mxu0
    %1734 = vmatprep.mubr.f32.mxu0 0.0
    %1735 = vmatmul.mubr.f32.gmra.mrb[0].mxu0 %v1663
    %v1736 = vpop.f32.mrb[0].mxu0
    %v1737 = vadd.f32 0.0, %v1736
    %v1738 = vpop.f32.mrb[0].mxu0
    %1739 = vdwg.mxu0
    %v1741 = vsel %vm542, %v1732, 0
    %v1744 = vsel %vm542, %v1737, 0
    %1746 = vmatprep.subr.mxu0 0.0
    %1747 = vmatpush1.msra.mxu0 %v353
    %1748 = vmatprep.subr.mxu0 0.0
    %1749 = vmatpush1.msra.mxu0 %v354
    %1750 = vmatprep.subr.mxu0 0.0
    %1751 = vmatpush1.msra.mxu0 0.0
    %1752 = vmatprep.subr.mxu0 0.0
    %1753 = vmatpush1.msra.mxu0 0.0
    %1754 = vmatprep.subr.mxu0 0.0
    %1755 = vmatpush1.msra.mxu0 0.0
    %1756 = vmatprep.subr.mxu0 0.0
    %1757 = vmatpush1.msra.mxu0 0.0
    %1758 = vmatprep.subr.mxu0 0.0
    %1759 = vmatpush1.msra.mxu0 0.0
    %1760 = vmatprep.subr.mxu0 0.0
    %1761 = vmatpush1.msra.mxu0 0.0
    %1762 = vmatprep.subr.mxu0 0.0
    %1763 = vmatpush1.msra.mxu0 0.0
    %1764 = vmatprep.subr.mxu0 0.0
    %1765 = vmatpush1.msra.mxu0 0.0
    %1766 = vmatprep.subr.mxu0 0.0
    %1767 = vmatpush1.msra.mxu0 0.0
    %1768 = vmatprep.subr.mxu0 0.0
    %1769 = vmatpush1.msra.mxu0 0.0
    %1770 = vmatprep.subr.mxu0 0.0
    %1771 = vmatpush1.msra.mxu0 0.0
    %1772 = vmatprep.subr.mxu0 0.0
    %1773 = vmatpush1.msra.mxu0 0.0
    %1774 = vmatprep.subr.mxu0 0.0
    %1775 = vmatpush1.msra.mxu0 0.0
    %1776 = vmatprep.subr.mxu0 0.0
    %1777 = vmatpush1.msra.mxu0 0.0
    %1778 = vmatprep.subr.mxu0 0.0
    %1779 = vmatpush1.msra.mxu0 0.0
    %1780 = vmatprep.subr.mxu0 0.0
    %1781 = vmatpush1.msra.mxu0 0.0
    %1782 = vmatprep.subr.mxu0 0.0
    %1783 = vmatpush1.msra.mxu0 0.0
    %1784 = vmatprep.subr.mxu0 0.0
    %1785 = vmatpush1.msra.mxu0 0.0
    %1786 = vmatprep.subr.mxu0 0.0
    %1787 = vmatpush1.msra.mxu0 0.0
    %1788 = vmatprep.subr.mxu0 0.0
    %1789 = vmatpush1.msra.mxu0 0.0
    %1790 = vmatprep.subr.mxu0 0.0
    %1791 = vmatpush1.msra.mxu0 0.0
    %1792 = vmatprep.subr.mxu0 0.0
    %1793 = vmatpush1.msra.mxu0 0.0
    %1794 = vmatprep.subr.mxu0 0.0
    %1795 = vmatpush1.msra.mxu0 0.0
    %1796 = vmatprep.subr.mxu0 0.0
    %1797 = vmatpush1.msra.mxu0 0.0
    %1798 = vmatprep.subr.mxu0 0.0
    %1799 = vmatpush1.msra.mxu0 0.0
    %1800 = vmatprep.subr.mxu0 0.0
    %1801 = vmatpush1.msra.mxu0 0.0
    %1802 = vmatprep.subr.mxu0 0.0
    %1803 = vmatpush1.msra.mxu0 0.0
    %1804 = vmatprep.subr.mxu0 0.0
    %1805 = vmatpush1.msra.mxu0 0.0
    %1806 = vmatprep.subr.mxu0 0.0
    %1807 = vmatpush1.msra.mxu0 0.0
    %1808 = vmatprep.subr.mxu0 0.0
    %1809 = vmatpush1.msra.mxu0 0.0
    %1810 = vmatprep.mubr.f32.mxu0 0.0
    %1811 = vmatmul.mubr.f32.gmra.mrb[0].mxu0 %v1741
    %v1812 = vpop.f32.mrb[0].mxu0
    %v1813 = vadd.f32 0.0, %v1812
    %v1814 = vpop.f32.mrb[0].mxu0
    %1815 = vmatprep.mubr.f32.mxu0 0.0
    %1816 = vmatmul.mubr.f32.gmra.mrb[0].mxu0 %v1744
    %v1817 = vpop.f32.mrb[0].mxu0
    %v1818 = vadd.f32 0.0, %v1817
    %v1819 = vpop.f32.mrb[0].mxu0
    %1820 = vdwg.mxu0
    %v1821 = vadd.f32 %v1465, %v1813
    %v1822 = vadd.f32 %v1466, %v1818
    %v1823 = vadd.f32 %v131, %v1821
    %v1824 = vadd.f32 %v132, %v1822
    %v1825 = vld [vmem:[%s11] sm:$0x1]
    %v1826 = vmul.f32 %v1823, %v1823
    %v1827 = vmul.f32 %v1824, %v1824
    %v1828 = vsel %vm146, %v1826, 0.0
    %1829 = vadd.xlane.f32.xlu0 %v1828
    %v1830 = vpop.xlane.xlu0 %1829
    %v1831 = vsel %vm146, %v1827, 0.0
    %1832 = vadd.xlane.f32.xlu0 %v1831
    %v1833 = vpop.xlane.xlu0 %1832
    %v1834 = vmul.f32 %v1830, %v153
    %v1835 = vmul.f32 %v1833, %v153
    %v1836 = vadd.f32 %v1834, 1e-05
    %v1837 = vadd.f32 %v1835, 1e-05
    %v1838 = vrsqrt.pop %v1836
    %v1839 = vrsqrt.pop %v1837
    %v1840 = vmul.f32 %v1823, %v1838
    %v1841 = vmul.f32 %v1824, %v1839
    %v1843 = vlaneseq
    %v1844 = vshrl.u32 %v1843, 7
    %v1845 = vsub.s32 0, %v1844
    %v1846 = vrot.slane %v1825, %v1845
    %v1848 = vmul.f32 %v1840, %v1846
    %v1849 = vmul.f32 %v1841, %v1846
    %v1850 = vpack.c.bf16 %v1849, %v1848
    %v1851 = vld [vmem:[#allocation11] sm:$0xff]
    %v1852 = vld [vmem:[#allocation11 + $0x8] sm:$0xff]
    %v1853 = vld [vmem:[#allocation11 + $0x10] sm:$0xff]
    %v1854 = vld [vmem:[#allocation11 + $0x18] sm:$0xff]
    %v1855 = vld [vmem:[#allocation11 + $0x20] sm:$0xff]
    %v1856 = vld [vmem:[#allocation11 + $0x28] sm:$0xff]
    %v1857 = vld [vmem:[#allocation11 + $0x30] sm:$0xff]
    %v1858 = vld [vmem:[#allocation11 + $0x38] sm:$0xff]
    %v1867 = vunpack.c.l.b16 %v1851
    %v1868 = vunpack.c.h.b16 %v1851
    %v1869 = vunpack.c.l.b16 %v1852
    %v1870 = vunpack.c.h.b16 %v1852
    %v1871 = vunpack.c.l.b16 %v1853
    %v1872 = vunpack.c.h.b16 %v1853
    %v1873 = vunpack.c.l.b16 %v1854
    %v1874 = vunpack.c.h.b16 %v1854
    %v1875 = vunpack.c.l.b16 %v1855
    %v1876 = vunpack.c.h.b16 %v1855
    %v1877 = vunpack.c.l.b16 %v1856
    %v1878 = vunpack.c.h.b16 %v1856
    %v1879 = vunpack.c.l.b16 %v1857
    %v1880 = vunpack.c.h.b16 %v1857
    %v1881 = vunpack.c.l.b16 %v1858
    %v1882 = vunpack.c.h.b16 %v1858
    %v1883 = vpack.c.b16 %v1869, %v1867
    %v1884 = vpack.c.b16 %v1870, %v1868
    %v1885 = vpack.c.b16 %v1873, %v1871
    %v1886 = vpack.c.b16 %v1874, %v1872
    %v1887 = vpack.c.b16 %v1877, %v1875
    %v1888 = vpack.c.b16 %v1878, %v1876
    %v1889 = vpack.c.b16 %v1881, %v1879
    %v1890 = vpack.c.b16 %v1882, %v1880
    %v1900 = vsel %vm146, %v1850, 0
    %1902 = vmatprep.subr.bf16.mxu0 %v1884
    %1903 = vmatpush1.bf16.msra.mxu0 %v1883
    %1904 = vmatprep.subr.bf16.mxu0 %v1886
    %1905 = vmatpush1.bf16.msra.mxu0 %v1885
    %1906 = vmatprep.subr.bf16.mxu0 %v1888
    %1907 = vmatpush1.bf16.msra.mxu0 %v1887
    %1908 = vmatprep.subr.bf16.mxu0 %v1890
    %1909 = vmatpush1.bf16.msra.mxu0 %v1889
    %1910 = vmatprep.subr.bf16.mxu0 0
    %1911 = vmatpush1.bf16.msra.mxu0 0
    %1912 = vmatprep.subr.bf16.mxu0 0
    %1913 = vmatpush1.bf16.msra.mxu0 0
    %1914 = vmatprep.subr.bf16.mxu0 0
    %1915 = vmatpush1.bf16.msra.mxu0 0
    %1916 = vmatprep.subr.bf16.mxu0 0
    %1917 = vmatpush1.bf16.msra.mxu0 0
    %1918 = vmatprep.subr.bf16.mxu0 0
    %1919 = vmatpush1.bf16.msra.mxu0 0
    %1920 = vmatprep.subr.bf16.mxu0 0
    %1921 = vmatpush1.bf16.msra.mxu0 0
    %1922 = vmatprep.subr.bf16.mxu0 0
    %1923 = vmatpush1.bf16.msra.mxu0 0
    %1924 = vmatprep.subr.bf16.mxu0 0
    %1925 = vmatpush1.bf16.msra.mxu0 0
    %1926 = vmatprep.subr.bf16.mxu0 0
    %1927 = vmatpush1.bf16.msra.mxu0 0
    %1928 = vmatprep.subr.bf16.mxu0 0
    %1929 = vmatpush1.bf16.msra.mxu0 0
    %1930 = vmatprep.subr.bf16.mxu0 0
    %1931 = vmatpush1.bf16.msra.mxu0 0
    %1932 = vmatprep.subr.bf16.mxu0 0
    %1933 = vmatpush1.bf16.msra.mxu0 0
    %1934 = vmatprep.mubr.bf16.mxu0 0
    %1935 = vmatmul.mubr.bf16.gmra.mrb[0].mxu0 %v1900
    %v1936 = vpop.f32.mrb[0].mxu0
    %v1937 = vadd.f32 0.0, %v1936
    %v1938 = vpop.f32.mrb[0].mxu0
    %v1939 = vadd.f32 0.0, %v1938
    %v1940 = vpop.f32.mrb[0].mxu0
    %v1941 = vadd.f32 0.0, %v1940
    %v1942 = vpop.f32.mrb[0].mxu0
    %v1943 = vadd.f32 0.0, %v1942
    %1944 = vdwg.mxu0
    %v1945 = vxor.u32 %v1937, 2147483648
    %v1946 = vxor.u32 %v1941, 2147483648
    %v1947 = vmul.f32 %v1945, 1.442695
    %v1948 = vpow.pop %v1947
    %v1949 = vmul.f32 %v1946, 1.442695
    %v1950 = vpow.pop %v1949
    %v1951 = vadd.f32 %v1948, 1.0
    %v1952 = vadd.f32 %v1950, 1.0
    %v1953 = vrcp.pop %v1951
    %v1954 = vmul.f32 1.0, %v1953
    %v1955 = vrcp.pop %v1952
    %v1956 = vmul.f32 1.0, %v1955
    %v1957 = vmul.f32 %v1937, %v1954
    %v1958 = vmul.f32 %v1941, %v1956
    %v1959 = vmul.f32 %v1957, %v1939
    %v1960 = vmul.f32 %v1958, %v1943
    %v1961 = vpack.c.bf16 %v1960, %v1959
    %v1962 = vld [vmem:[%s13] sm:$0xf]
    %v1963 = vld [vmem:[%s13 + $0x4] sm:$0xf]
    %v1964 = vld [vmem:[%s13 + $0x8] sm:$0xf]
    %v1965 = vld [vmem:[%s13 + $0xc] sm:$0xf]
    %v1966 = vld [vmem:[%s13 + $0x10] sm:$0xf]
    %v1967 = vld [vmem:[%s13 + $0x14] sm:$0xf]
    %v1968 = vld [vmem:[%s13 + $0x18] sm:$0xf]
    %v1969 = vld [vmem:[%s13 + $0x1c] sm:$0xf]
    %v1970 = vld [vmem:[%s13 + $0x20] sm:$0xf]
    %v1971 = vld [vmem:[%s13 + $0x24] sm:$0xf]
    %v1972 = vld [vmem:[%s13 + $0x28] sm:$0xf]
    %v1973 = vld [vmem:[%s13 + $0x2c] sm:$0xf]
    %v1974 = vld [vmem:[%s13 + $0x30] sm:$0xf]
    %v1975 = vld [vmem:[%s13 + $0x34] sm:$0xf]
    %v1976 = vld [vmem:[%s13 + $0x38] sm:$0xf]
    %v1977 = vld [vmem:[%s13 + $0x3c] sm:$0xf]
    %v1994 = vunpack.c.l.b16 %v1962
    %v1995 = vunpack.c.l.b16 %v1963
    %v1996 = vunpack.c.l.b16 %v1964
    %v1997 = vunpack.c.l.b16 %v1965
    %v1998 = vunpack.c.l.b16 %v1966
    %v1999 = vunpack.c.l.b16 %v1967
    %v2000 = vunpack.c.l.b16 %v1968
    %v2001 = vunpack.c.l.b16 %v1969
    %v2002 = vunpack.c.l.b16 %v1970
    %v2003 = vunpack.c.l.b16 %v1971
    %v2004 = vunpack.c.l.b16 %v1972
    %v2005 = vunpack.c.l.b16 %v1973
    %v2006 = vunpack.c.l.b16 %v1974
    %v2007 = vunpack.c.l.b16 %v1975
    %v2008 = vunpack.c.l.b16 %v1976
    %v2009 = vunpack.c.l.b16 %v1977
    %v2010 = vpack.c.b16 %v1995, %v1994
    %v2011 = vpack.c.b16 %v1997, %v1996
    %v2012 = vpack.c.b16 %v1999, %v1998
    %v2013 = vpack.c.b16 %v2001, %v2000
    %v2014 = vpack.c.b16 %v2003, %v2002
    %v2015 = vpack.c.b16 %v2005, %v2004
    %v2016 = vpack.c.b16 %v2007, %v2006
    %v2017 = vpack.c.b16 %v2009, %v2008
    %2026 = vmatprep.subr.bf16.mxu0 0
    %2027 = vmatpush1.bf16.msra.mxu0 %v2010
    %2028 = vmatprep.subr.bf16.mxu0 0
    %2029 = vmatpush1.bf16.msra.mxu0 %v2011
    %2030 = vmatprep.subr.bf16.mxu0 0
    %2031 = vmatpush1.bf16.msra.mxu0 %v2012
    %2032 = vmatprep.subr.bf16.mxu0 0
    %2033 = vmatpush1.bf16.msra.mxu0 %v2013
    %2034 = vmatprep.subr.bf16.mxu0 0
    %2035 = vmatpush1.bf16.msra.mxu0 %v2014
    %2036 = vmatprep.subr.bf16.mxu0 0
    %2037 = vmatpush1.bf16.msra.mxu0 %v2015
    %2038 = vmatprep.subr.bf16.mxu0 0
    %2039 = vmatpush1.bf16.msra.mxu0 %v2016
    %2040 = vmatprep.subr.bf16.mxu0 0
    %2041 = vmatpush1.bf16.msra.mxu0 %v2017
    %2042 = vmatprep.subr.bf16.mxu0 0
    %2043 = vmatpush1.bf16.msra.mxu0 0
    %2044 = vmatprep.subr.bf16.mxu0 0
    %2045 = vmatpush1.bf16.msra.mxu0 0
    %2046 = vmatprep.subr.bf16.mxu0 0
    %2047 = vmatpush1.bf16.msra.mxu0 0
    %2048 = vmatprep.subr.bf16.mxu0 0
    %2049 = vmatpush1.bf16.msra.mxu0 0
    %2050 = vmatprep.subr.bf16.mxu0 0
    %2051 = vmatpush1.bf16.msra.mxu0 0
    %2052 = vmatprep.subr.bf16.mxu0 0
    %2053 = vmatpush1.bf16.msra.mxu0 0
    %2054 = vmatprep.subr.bf16.mxu0 0
    %2055 = vmatpush1.bf16.msra.mxu0 0
    %2056 = vmatprep.subr.bf16.mxu0 0
    %2057 = vmatpush1.bf16.msra.mxu0 0
    %2058 = vmatprep.mubr.bf16.mxu0 0
    %2059 = vmatmul.mubr.bf16.gmra.mrb[0].mxu0 %v1961
    %v2060 = vpop.f32.mrb[0].mxu0
    %v2061 = vadd.f32 0.0, %v2060
    %v2062 = vpop.f32.mrb[0].mxu0
    %v2063 = vpop.f32.mrb[0].mxu0
    %v2064 = vadd.f32 0.0, %v2063
    %v2065 = vpop.f32.mrb[0].mxu0
    %2066 = vdwg.mxu0
    %v2067 = vadd.f32 %v1823, %v2061
    %v2068 = vadd.f32 %v1824, %v2064
    %s2069 = scalar_lea.vmem %s8, 1
    %v2070 = vld [vmem:[%s2069] sm:$0x1]
    %v2071 = vmul.f32 %v2067, %v2067
    %v2072 = vmul.f32 %v2068, %v2068
    %v2073 = vsel %vm146, %v2071, 0.0
    %2074 = vadd.xlane.f32.xlu0 %v2073
    %v2075 = vpop.xlane.xlu0 %2074
    %v2076 = vsel %vm146, %v2072, 0.0
    %2077 = vadd.xlane.f32.xlu0 %v2076
    %v2078 = vpop.xlane.xlu0 %2077
    %v2079 = vmul.f32 %v2075, %v153
    %v2080 = vmul.f32 %v2078, %v153
    %v2081 = vadd.f32 %v2079, 1e-05
    %v2082 = vadd.f32 %v2080, 1e-05
    %v2083 = vrsqrt.pop %v2081
    %v2084 = vrsqrt.pop %v2082
    %v2085 = vmul.f32 %v2067, %v2083
    %v2086 = vmul.f32 %v2068, %v2084
    %v2088 = vlaneseq
    %v2089 = vshrl.u32 %v2088, 7
    %v2090 = vsub.s32 0, %v2089
    %v2091 = vrot.slane %v2070, %v2090
    %v2093 = vmul.f32 %v2085, %v2091
    %v2094 = vmul.f32 %v2086, %v2091
    %v2095 = vpack.c.bf16 %v2094, %v2093
    %s2096 = scalar_lea.vmem [#allocation10], 32
    %v2097 = vld [vmem:[%s2096] sm:$0xf]
    %v2098 = vld [vmem:[%s2096 + $0x4] sm:$0xf]
    %v2099 = vld [vmem:[%s2096 + $0x8] sm:$0xf]
    %v2100 = vld [vmem:[%s2096 + $0xc] sm:$0xf]
    %v2101 = vld [vmem:[%s2096 + $0x10] sm:$0xf]
    %v2102 = vld [vmem:[%s2096 + $0x14] sm:$0xf]
    %v2103 = vld [vmem:[%s2096 + $0x18] sm:$0xf]
    %v2104 = vld [vmem:[%s2096 + $0x1c] sm:$0xf]
    %v2113 = vunpack.c.l.b16 %v2097
    %v2114 = vunpack.c.l.b16 %v2098
    %v2115 = vunpack.c.l.b16 %v2099
    %v2116 = vunpack.c.l.b16 %v2100
    %v2117 = vunpack.c.l.b16 %v2101
    %v2118 = vunpack.c.l.b16 %v2102
    %v2119 = vunpack.c.l.b16 %v2103
    %v2120 = vunpack.c.l.b16 %v2104
    %v2121 = vpack.c.b16 %v2114, %v2113
    %v2122 = vpack.c.b16 %v2116, %v2115
    %v2123 = vpack.c.b16 %v2118, %v2117
    %v2124 = vpack.c.b16 %v2120, %v2119
    %v2130 = vsel %vm146, %v2095, 0
    %2132 = vmatprep.subr.bf16.mxu0 0
    %2133 = vmatpush1.bf16.msra.mxu0 %v2121
    %2134 = vmatprep.subr.bf16.mxu0 0
    %2135 = vmatpush1.bf16.msra.mxu0 %v2122
    %2136 = vmatprep.subr.bf16.mxu0 0
    %2137 = vmatpush1.bf16.msra.mxu0 %v2123
    %2138 = vmatprep.subr.bf16.mxu0 0
    %2139 = vmatpush1.bf16.msra.mxu0 %v2124
    %2140 = vmatprep.subr.bf16.mxu0 0
    %2141 = vmatpush1.bf16.msra.mxu0 0
    %2142 = vmatprep.subr.bf16.mxu0 0
    %2143 = vmatpush1.bf16.msra.mxu0 0
    %2144 = vmatprep.subr.bf16.mxu0 0
    %2145 = vmatpush1.bf16.msra.mxu0 0
    %2146 = vmatprep.subr.bf16.mxu0 0
    %2147 = vmatpush1.bf16.msra.mxu0 0
    %2148 = vmatprep.subr.bf16.mxu0 0
    %2149 = vmatpush1.bf16.msra.mxu0 0
    %2150 = vmatprep.subr.bf16.mxu0 0
    %2151 = vmatpush1.bf16.msra.mxu0 0
    %2152 = vmatprep.subr.bf16.mxu0 0
    %2153 = vmatpush1.bf16.msra.mxu0 0
    %2154 = vmatprep.subr.bf16.mxu0 0
    %2155 = vmatpush1.bf16.msra.mxu0 0
    %2156 = vmatprep.subr.bf16.mxu0 0
    %2157 = vmatpush1.bf16.msra.mxu0 0
    %2158 = vmatprep.subr.bf16.mxu0 0
    %2159 = vmatpush1.bf16.msra.mxu0 0
    %2160 = vmatprep.subr.bf16.mxu0 0
    %2161 = vmatpush1.bf16.msra.mxu0 0
    %2162 = vmatprep.subr.bf16.mxu0 0
    %2163 = vmatpush1.bf16.msra.mxu0 0
    %2164 = vmatprep.mubr.bf16.mxu0 0
    %2165 = vmatmul.mubr.bf16.gmra.mrb[0].mxu0 %v2130
    %v2166 = vpop.f32.mrb[0].mxu0
    %v2167 = vadd.f32 0.0, %v2166
    %v2168 = vpop.f32.mrb[0].mxu0
    %v2169 = vpop.f32.mrb[0].mxu0
    %v2170 = vadd.f32 0.0, %v2169
    %v2171 = vpop.f32.mrb[0].mxu0
    %2172 = vdwg.mxu0
    %v2173 = vmul.f32 %v2167, %v135
    %v2174 = vmul.f32 %v2170, %v136
    %v2175 = vmul.f32 %v2167, %v252
    %v2176 = vmul.f32 %v2170, %v254
    %2179 = vrot.lane.b32.xlu0 %v2175, 96
    %v2180 = vpop.permute.xlu0 %2179
    %2181 = vrot.lane.b32.xlu0 %v2176, 96
    %v2182 = vpop.permute.xlu0 %2181
    %v2185 = vsub.f32 %v2173, %v2180
    %v2186 = vsub.f32 %v2174, %v2182
    %v2187 = vmul.f32 %v2167, %v137
    %v2188 = vmul.f32 %v2170, %v138
    %v2189 = vmul.f32 %v2167, %v274
    %v2190 = vmul.f32 %v2170, %v276
    %2193 = vrot.lane.b32.xlu0 %v2189, 96
    %v2194 = vpop.permute.xlu0 %2193
    %2195 = vrot.lane.b32.xlu0 %v2190, 96
    %v2196 = vpop.permute.xlu0 %2195
    %v2199 = vadd.f32 %v2187, %v2194
    %v2200 = vadd.f32 %v2188, %v2196
    %v2201 = vmul.f32 %v2167, %v294
    %v2202 = vmul.f32 %v2170, %v296
    %v2203 = vmul.f32 %v2167, %v304
    %v2204 = vmul.f32 %v2170, %v306
    %2207 = vrot.lane.b32.xlu0 %v2203, 112
    %v2208 = vpop.permute.xlu0 %2207
    %2209 = vrot.lane.b32.xlu0 %v2204, 112
    %v2210 = vpop.permute.xlu0 %2209
    %v2213 = vsub.f32 %v2201, %v2208
    %v2214 = vsub.f32 %v2202, %v2210
    %v2215 = vmul.f32 %v2167, %v322
    %v2216 = vmul.f32 %v2170, %v324
    %v2217 = vmul.f32 %v2167, %v330
    %v2218 = vmul.f32 %v2170, %v332
    %2221 = vrot.lane.b32.xlu0 %v2217, 112
    %v2222 = vpop.permute.xlu0 %2221
    %2223 = vrot.lane.b32.xlu0 %v2218, 112
    %v2224 = vpop.permute.xlu0 %2223
    %v2227 = vadd.f32 %v2215, %v2222
    %v2228 = vadd.f32 %v2216, %v2224
    %s2229 = scalar_lea.vmem %s10, 64
    %v2230 = vld [vmem:[%s2229] sm:$0xff]
    %v2231 = vld [vmem:[%s2229 + $0x8] sm:$0xff]
    %v2232 = vld [vmem:[%s2229 + $0x10] sm:$0xff]
    %v2233 = vld [vmem:[%s2229 + $0x18] sm:$0xff]
    %v2234 = vld [vmem:[%s2229 + $0x20] sm:$0xff]
    %v2235 = vld [vmem:[%s2229 + $0x28] sm:$0xff]
    %v2236 = vld [vmem:[%s2229 + $0x30] sm:$0xff]
    %v2237 = vld [vmem:[%s2229 + $0x38] sm:$0xff]
    %2240 = vrot.lane.b32.xlu0 %v2227, 64
    %v2241 = vpop.permute.xlu0 %2240
    %2242 = vrot.lane.b32.xlu0 %v2228, 64
    %v2243 = vpop.permute.xlu0 %2242
    %v2245 = vsel %vm361, %v2199, 0
    %v2248 = vsel %vm361, %v2200, 0
    %v2250 = vsel %vm361, %v2241, 0
    %v2252 = vsel %vm361, %v2243, 0
    %2254 = vmatprep.subr.mxu0 0.0
    %2255 = vmatpush1.xpose.msra.mxu0 %v2250
    %2256 = vmatprep.subr.mxu0 0.0
    %2257 = vmatpush1.xpose.msra.mxu0 %v2252
    %2258 = vmatprep.subr.mxu0 0.0
    %2259 = vmatpush1.xpose.msra.mxu0 0.0
    %2260 = vmatprep.subr.mxu0 0.0
    %2261 = vmatpush1.xpose.msra.mxu0 0.0
    %2262 = vmatprep.subr.mxu0 0.0
    %2263 = vmatpush1.xpose.msra.mxu0 0.0
    %2264 = vmatprep.subr.mxu0 0.0
    %2265 = vmatpush1.xpose.msra.mxu0 0.0
    %2266 = vmatprep.subr.mxu0 0.0
    %2267 = vmatpush1.xpose.msra.mxu0 0.0
    %2268 = vmatprep.subr.mxu0 0.0
    %2269 = vmatpush1.xpose.msra.mxu0 0.0
    %2270 = vmatprep.subr.mxu0 0.0
    %2271 = vmatpush1.xpose.msra.mxu0 0.0
    %2272 = vmatprep.subr.mxu0 0.0
    %2273 = vmatpush1.xpose.msra.mxu0 0.0
    %2274 = vmatprep.subr.mxu0 0.0
    %2275 = vmatpush1.xpose.msra.mxu0 0.0
    %2276 = vmatprep.subr.mxu0 0.0
    %2277 = vmatpush1.xpose.msra.mxu0 0.0
    %2278 = vmatprep.subr.mxu0 0.0
    %2279 = vmatpush1.xpose.msra.mxu0 0.0
    %2280 = vmatprep.subr.mxu0 0.0
    %2281 = vmatpush1.xpose.msra.mxu0 0.0
    %2282 = vmatprep.subr.mxu0 0.0
    %2283 = vmatpush1.xpose.msra.mxu0 0.0
    %2284 = vmatprep.subr.mxu0 0.0
    %2285 = vmatpush1.xpose.msra.mxu0 0.0
    %2286 = vmatprep.subr.mxu0 0.0
    %2287 = vmatpush1.xpose.msra.mxu0 0.0
    %2288 = vmatprep.subr.mxu0 0.0
    %2289 = vmatpush1.xpose.msra.mxu0 0.0
    %2290 = vmatprep.subr.mxu0 0.0
    %2291 = vmatpush1.xpose.msra.mxu0 0.0
    %2292 = vmatprep.subr.mxu0 0.0
    %2293 = vmatpush1.xpose.msra.mxu0 0.0
    %2294 = vmatprep.subr.mxu0 0.0
    %2295 = vmatpush1.xpose.msra.mxu0 0.0
    %2296 = vmatprep.subr.mxu0 0.0
    %2297 = vmatpush1.xpose.msra.mxu0 0.0
    %2298 = vmatprep.subr.mxu0 0.0
    %2299 = vmatpush1.xpose.msra.mxu0 0.0
    %2300 = vmatprep.subr.mxu0 0.0
    %2301 = vmatpush1.xpose.msra.mxu0 0.0
    %2302 = vmatprep.subr.mxu0 0.0
    %2303 = vmatpush1.xpose.msra.mxu0 0.0
    %2304 = vmatprep.subr.mxu0 0.0
    %2305 = vmatpush1.xpose.msra.mxu0 0.0
    %2306 = vmatprep.subr.mxu0 0.0
    %2307 = vmatpush1.xpose.msra.mxu0 0.0
    %2308 = vmatprep.subr.mxu0 0.0
    %2309 = vmatpush1.xpose.msra.mxu0 0.0
    %2310 = vmatprep.subr.mxu0 0.0
    %2311 = vmatpush1.xpose.msra.mxu0 0.0
    %2312 = vmatprep.subr.mxu0 0.0
    %2313 = vmatpush1.xpose.msra.mxu0 0.0
    %2314 = vmatprep.subr.mxu0 0.0
    %2315 = vmatpush1.xpose.msra.mxu0 0.0
    %2316 = vmatprep.subr.mxu0 0.0
    %2317 = vmatpush1.xpose.msra.mxu0 0.0
    %2318 = vmatprep.mubr.f32.mxu0 0.0
    %2319 = vmatmul.mubr.f32.gmra.mrb[0].mxu0 %v2245
    %v2320 = vpop.f32.mrb[0].mxu0
    %v2321 = vadd.f32 0.0, %v2320
    %v2322 = vpop.f32.mrb[0].mxu0
    %2323 = vmatprep.mubr.f32.mxu0 0.0
    %2324 = vmatmul.mubr.f32.gmra.mrb[0].mxu0 %v2248
    %v2325 = vpop.f32.mrb[0].mxu0
    %v2326 = vadd.f32 0.0, %v2325
    %v2327 = vpop.f32.mrb[0].mxu0
    %2328 = vdwg.mxu0
    %2331 = vrot.lane.b32.xlu0 %v2213, 64
    %v2332 = vpop.permute.xlu0 %2331
    %2333 = vrot.lane.b32.xlu0 %v2214, 64
    %v2334 = vpop.permute.xlu0 %2333
    %v2336 = vsel %vm361, %v2185, 0
    %v2339 = vsel %vm361, %v2186, 0
    %v2341 = vsel %vm361, %v2332, 0
    %v2343 = vsel %vm361, %v2334, 0
    %2345 = vmatprep.subr.mxu0 0.0
    %2346 = vmatpush1.xpose.msra.mxu0 %v2341
    %2347 = vmatprep.subr.mxu0 0.0
    %2348 = vmatpush1.xpose.msra.mxu0 %v2343
    %2349 = vmatprep.subr.mxu0 0.0
    %2350 = vmatpush1.xpose.msra.mxu0 0.0
    %2351 = vmatprep.subr.mxu0 0.0
    %2352 = vmatpush1.xpose.msra.mxu0 0.0
    %2353 = vmatprep.subr.mxu0 0.0
    %2354 = vmatpush1.xpose.msra.mxu0 0.0
    %2355 = vmatprep.subr.mxu0 0.0
    %2356 = vmatpush1.xpose.msra.mxu0 0.0
    %2357 = vmatprep.subr.mxu0 0.0
    %2358 = vmatpush1.xpose.msra.mxu0 0.0
    %2359 = vmatprep.subr.mxu0 0.0
    %2360 = vmatpush1.xpose.msra.mxu0 0.0
    %2361 = vmatprep.subr.mxu0 0.0
    %2362 = vmatpush1.xpose.msra.mxu0 0.0
    %2363 = vmatprep.subr.mxu0 0.0
    %2364 = vmatpush1.xpose.msra.mxu0 0.0
    %2365 = vmatprep.subr.mxu0 0.0
    %2366 = vmatpush1.xpose.msra.mxu0 0.0
    %2367 = vmatprep.subr.mxu0 0.0
    %2368 = vmatpush1.xpose.msra.mxu0 0.0
    %2369 = vmatprep.subr.mxu0 0.0
    %2370 = vmatpush1.xpose.msra.mxu0 0.0
    %2371 = vmatprep.subr.mxu0 0.0
    %2372 = vmatpush1.xpose.msra.mxu0 0.0
    %2373 = vmatprep.subr.mxu0 0.0
    %2374 = vmatpush1.xpose.msra.mxu0 0.0
    %2375 = vmatprep.subr.mxu0 0.0
    %2376 = vmatpush1.xpose.msra.mxu0 0.0
    %2377 = vmatprep.subr.mxu0 0.0
    %2378 = vmatpush1.xpose.msra.mxu0 0.0
    %2379 = vmatprep.subr.mxu0 0.0
    %2380 = vmatpush1.xpose.msra.mxu0 0.0
    %2381 = vmatprep.subr.mxu0 0.0
    %2382 = vmatpush1.xpose.msra.mxu0 0.0
    %2383 = vmatprep.subr.mxu0 0.0
    %2384 = vmatpush1.xpose.msra.mxu0 0.0
    %2385 = vmatprep.subr.mxu0 0.0
    %2386 = vmatpush1.xpose.msra.mxu0 0.0
    %2387 = vmatprep.subr.mxu0 0.0
    %2388 = vmatpush1.xpose.msra.mxu0 0.0
    %2389 = vmatprep.subr.mxu0 0.0
    %2390 = vmatpush1.xpose.msra.mxu0 0.0
    %2391 = vmatprep.subr.mxu0 0.0
    %2392 = vmatpush1.xpose.msra.mxu0 0.0
    %2393 = vmatprep.subr.mxu0 0.0
    %2394 = vmatpush1.xpose.msra.mxu0 0.0
    %2395 = vmatprep.subr.mxu0 0.0
    %2396 = vmatpush1.xpose.msra.mxu0 0.0
    %2397 = vmatprep.subr.mxu0 0.0
    %2398 = vmatpush1.xpose.msra.mxu0 0.0
    %2399 = vmatprep.subr.mxu0 0.0
    %2400 = vmatpush1.xpose.msra.mxu0 0.0
    %2401 = vmatprep.subr.mxu0 0.0
    %2402 = vmatpush1.xpose.msra.mxu0 0.0
    %2403 = vmatprep.subr.mxu0 0.0
    %2404 = vmatpush1.xpose.msra.mxu0 0.0
    %2405 = vmatprep.subr.mxu0 0.0
    %2406 = vmatpush1.xpose.msra.mxu0 0.0
    %2407 = vmatprep.subr.mxu0 0.0
    %2408 = vmatpush1.xpose.msra.mxu0 0.0
    %2409 = vmatprep.mubr.f32.mxu0 0.0
    %2410 = vmatmul.mubr.f32.gmra.mrb[0].mxu0 %v2336
    %v2411 = vpop.f32.mrb[0].mxu0
    %v2412 = vadd.f32 %v2321, %v2411
    %v2413 = vpop.f32.mrb[0].mxu0
    %2414 = vmatprep.mubr.f32.mxu0 0.0
    %2415 = vmatmul.mubr.f32.gmra.mrb[0].mxu0 %v2339
    %v2416 = vpop.f32.mrb[0].mxu0
    %v2417 = vadd.f32 %v2326, %v2416
    %v2418 = vpop.f32.mrb[0].mxu0
    %2419 = vdwg.mxu0
    %v2420 = vmul.f32 %v2412, 0.25
    %v2421 = vmul.f32 %v2417, 0.25
    %v2422 = vadd.f32 %v2420, %v133
    %v2423 = vadd.f32 %v2421, %v134
    %v2424 = vsel %vm542, %v2422, -inf
    %2425 = vmax.xlane.f32.xlu0 %v2424
    %v2426 = vpop.xlane.xlu0 %2425
    %v2427 = vsel %vm542, %v2423, -inf
    %2428 = vmax.xlane.f32.xlu0 %v2427
    %v2429 = vpop.xlane.xlu0 %2428
    %v2430 = vsub.f32 %v2422, %v2426
    %v2431 = vsub.f32 %v2423, %v2429
    %v2432 = vmul.f32 %v2430, 1.442695
    %v2433 = vpow.pop %v2432
    %v2434 = vmul.f32 %v2431, 1.442695
    %v2435 = vpow.pop %v2434
    %v2436 = vsel %vm542, %v2433, 0.0
    %2437 = vadd.xlane.f32.xlu0 %v2436
    %v2438 = vpop.xlane.xlu0 %2437
    %v2439 = vsel %vm542, %v2435, 0.0
    %2440 = vadd.xlane.f32.xlu0 %v2439
    %v2441 = vpop.xlane.xlu0 %2440
    %v2442 = vrcp.pop %v2438
    %v2443 = vrcp.pop %v2441
    %v2444 = vmul.f32 %v2433, %v2442
    %v2445 = vmul.f32 %v2435, %v2443
    %2448 = vrot.lane.b32.xlu0 %v2167, 32
    %v2449 = vpop.permute.xlu0 %2448
    %2450 = vrot.lane.b32.xlu0 %v2170, 32
    %v2451 = vpop.permute.xlu0 %2450
    %v2455 = vsel %vm542, %v2444, 0
    %v2458 = vsel %vm542, %v2445, 0
    %2460 = vmatprep.subr.mxu0 0.0
    %2461 = vmatpush1.msra.mxu0 %v2449
    %2462 = vmatprep.subr.mxu0 0.0
    %2463 = vmatpush1.msra.mxu0 %v2451
    %2464 = vmatprep.subr.mxu0 0.0
    %2465 = vmatpush1.msra.mxu0 0.0
    %2466 = vmatprep.subr.mxu0 0.0
    %2467 = vmatpush1.msra.mxu0 0.0
    %2468 = vmatprep.subr.mxu0 0.0
    %2469 = vmatpush1.msra.mxu0 0.0
    %2470 = vmatprep.subr.mxu0 0.0
    %2471 = vmatpush1.msra.mxu0 0.0
    %2472 = vmatprep.subr.mxu0 0.0
    %2473 = vmatpush1.msra.mxu0 0.0
    %2474 = vmatprep.subr.mxu0 0.0
    %2475 = vmatpush1.msra.mxu0 0.0
    %2476 = vmatprep.subr.mxu0 0.0
    %2477 = vmatpush1.msra.mxu0 0.0
    %2478 = vmatprep.subr.mxu0 0.0
    %2479 = vmatpush1.msra.mxu0 0.0
    %2480 = vmatprep.subr.mxu0 0.0
    %2481 = vmatpush1.msra.mxu0 0.0
    %2482 = vmatprep.subr.mxu0 0.0
    %2483 = vmatpush1.msra.mxu0 0.0
    %2484 = vmatprep.subr.mxu0 0.0
    %2485 = vmatpush1.msra.mxu0 0.0
    %2486 = vmatprep.subr.mxu0 0.0
    %2487 = vmatpush1.msra.mxu0 0.0
    %2488 = vmatprep.subr.mxu0 0.0
    %2489 = vmatpush1.msra.mxu0 0.0
    %2490 = vmatprep.subr.mxu0 0.0
    %2491 = vmatpush1.msra.mxu0 0.0
    %2492 = vmatprep.subr.mxu0 0.0
    %2493 = vmatpush1.msra.mxu0 0.0
    %2494 = vmatprep.subr.mxu0 0.0
    %2495 = vmatpush1.msra.mxu0 0.0
    %2496 = vmatprep.subr.mxu0 0.0
    %2497 = vmatpush1.msra.mxu0 0.0
    %2498 = vmatprep.subr.mxu0 0.0
    %2499 = vmatpush1.msra.mxu0 0.0
    %2500 = vmatprep.subr.mxu0 0.0
    %2501 = vmatpush1.msra.mxu0 0.0
    %2502 = vmatprep.subr.mxu0 0.0
    %2503 = vmatpush1.msra.mxu0 0.0
    %2504 = vmatprep.subr.mxu0 0.0
    %2505 = vmatpush1.msra.mxu0 0.0
    %2506 = vmatprep.subr.mxu0 0.0
    %2507 = vmatpush1.msra.mxu0 0.0
    %2508 = vmatprep.subr.mxu0 0.0
    %2509 = vmatpush1.msra.mxu0 0.0
    %2510 = vmatprep.subr.mxu0 0.0
    %2511 = vmatpush1.msra.mxu0 0.0
    %2512 = vmatprep.subr.mxu0 0.0
    %2513 = vmatpush1.msra.mxu0 0.0
    %2514 = vmatprep.subr.mxu0 0.0
    %2515 = vmatpush1.msra.mxu0 0.0
    %2516 = vmatprep.subr.mxu0 0.0
    %2517 = vmatpush1.msra.mxu0 0.0
    %2518 = vmatprep.subr.mxu0 0.0
    %2519 = vmatpush1.msra.mxu0 0.0
    %2520 = vmatprep.subr.mxu0 0.0
    %2521 = vmatpush1.msra.mxu0 0.0
    %2522 = vmatprep.subr.mxu0 0.0
    %2523 = vmatpush1.msra.mxu0 0.0
    %2524 = vmatprep.mubr.f32.mxu0 0.0
    %2525 = vmatmul.mubr.f32.gmra.mrb[0].mxu0 %v2455
    %v2526 = vpop.f32.mrb[0].mxu0
    %v2527 = vadd.f32 0.0, %v2526
    %v2528 = vpop.f32.mrb[0].mxu0
    %2529 = vmatprep.mubr.f32.mxu0 0.0
    %2530 = vmatmul.mubr.f32.gmra.mrb[0].mxu0 %v2458
    %v2531 = vpop.f32.mrb[0].mxu0
    %v2532 = vadd.f32 0.0, %v2531
    %v2533 = vpop.f32.mrb[0].mxu0
    %2534 = vdwg.mxu0
    %2535 = vrot.lane.b32.xlu0 %v2199, 120
    %v2536 = vpop.permute.xlu0 %2535
    %2537 = vrot.lane.b32.xlu0 %v2200, 120
    %v2538 = vpop.permute.xlu0 %2537
    %v2539 = vsel %vm361, %v2536, 0
    %v2541 = vsel %vm361, %v2538, 0
    %2543 = vmatprep.subr.mxu0 0.0
    %2544 = vmatpush1.xpose.msra.mxu0 %v2250
    %2545 = vmatprep.subr.mxu0 0.0
    %2546 = vmatpush1.xpose.msra.mxu0 %v2252
    %2547 = vmatprep.subr.mxu0 0.0
    %2548 = vmatpush1.xpose.msra.mxu0 0.0
    %2549 = vmatprep.subr.mxu0 0.0
    %2550 = vmatpush1.xpose.msra.mxu0 0.0
    %2551 = vmatprep.subr.mxu0 0.0
    %2552 = vmatpush1.xpose.msra.mxu0 0.0
    %2553 = vmatprep.subr.mxu0 0.0
    %2554 = vmatpush1.xpose.msra.mxu0 0.0
    %2555 = vmatprep.subr.mxu0 0.0
    %2556 = vmatpush1.xpose.msra.mxu0 0.0
    %2557 = vmatprep.subr.mxu0 0.0
    %2558 = vmatpush1.xpose.msra.mxu0 0.0
    %2559 = vmatprep.subr.mxu0 0.0
    %2560 = vmatpush1.xpose.msra.mxu0 0.0
    %2561 = vmatprep.subr.mxu0 0.0
    %2562 = vmatpush1.xpose.msra.mxu0 0.0
    %2563 = vmatprep.subr.mxu0 0.0
    %2564 = vmatpush1.xpose.msra.mxu0 0.0
    %2565 = vmatprep.subr.mxu0 0.0
    %2566 = vmatpush1.xpose.msra.mxu0 0.0
    %2567 = vmatprep.subr.mxu0 0.0
    %2568 = vmatpush1.xpose.msra.mxu0 0.0
    %2569 = vmatprep.subr.mxu0 0.0
    %2570 = vmatpush1.xpose.msra.mxu0 0.0
    %2571 = vmatprep.subr.mxu0 0.0
    %2572 = vmatpush1.xpose.msra.mxu0 0.0
    %2573 = vmatprep.subr.mxu0 0.0
    %2574 = vmatpush1.xpose.msra.mxu0 0.0
    %2575 = vmatprep.subr.mxu0 0.0
    %2576 = vmatpush1.xpose.msra.mxu0 0.0
    %2577 = vmatprep.subr.mxu0 0.0
    %2578 = vmatpush1.xpose.msra.mxu0 0.0
    %2579 = vmatprep.subr.mxu0 0.0
    %2580 = vmatpush1.xpose.msra.mxu0 0.0
    %2581 = vmatprep.subr.mxu0 0.0
    %2582 = vmatpush1.xpose.msra.mxu0 0.0
    %2583 = vmatprep.subr.mxu0 0.0
    %2584 = vmatpush1.xpose.msra.mxu0 0.0
    %2585 = vmatprep.subr.mxu0 0.0
    %2586 = vmatpush1.xpose.msra.mxu0 0.0
    %2587 = vmatprep.subr.mxu0 0.0
    %2588 = vmatpush1.xpose.msra.mxu0 0.0
    %2589 = vmatprep.subr.mxu0 0.0
    %2590 = vmatpush1.xpose.msra.mxu0 0.0
    %2591 = vmatprep.subr.mxu0 0.0
    %2592 = vmatpush1.xpose.msra.mxu0 0.0
    %2593 = vmatprep.subr.mxu0 0.0
    %2594 = vmatpush1.xpose.msra.mxu0 0.0
    %2595 = vmatprep.subr.mxu0 0.0
    %2596 = vmatpush1.xpose.msra.mxu0 0.0
    %2597 = vmatprep.subr.mxu0 0.0
    %2598 = vmatpush1.xpose.msra.mxu0 0.0
    %2599 = vmatprep.subr.mxu0 0.0
    %2600 = vmatpush1.xpose.msra.mxu0 0.0
    %2601 = vmatprep.subr.mxu0 0.0
    %2602 = vmatpush1.xpose.msra.mxu0 0.0
    %2603 = vmatprep.subr.mxu0 0.0
    %2604 = vmatpush1.xpose.msra.mxu0 0.0
    %2605 = vmatprep.subr.mxu0 0.0
    %2606 = vmatpush1.xpose.msra.mxu0 0.0
    %2607 = vmatprep.mubr.f32.mxu0 0.0
    %2608 = vmatmul.mubr.f32.gmra.mrb[0].mxu0 %v2539
    %v2609 = vpop.f32.mrb[0].mxu0
    %v2610 = vadd.f32 0.0, %v2609
    %v2611 = vpop.f32.mrb[0].mxu0
    %2612 = vmatprep.mubr.f32.mxu0 0.0
    %2613 = vmatmul.mubr.f32.gmra.mrb[0].mxu0 %v2541
    %v2614 = vpop.f32.mrb[0].mxu0
    %v2615 = vadd.f32 0.0, %v2614
    %v2616 = vpop.f32.mrb[0].mxu0
    %2617 = vdwg.mxu0
    %2618 = vrot.lane.b32.xlu0 %v2185, 120
    %v2619 = vpop.permute.xlu0 %2618
    %2620 = vrot.lane.b32.xlu0 %v2186, 120
    %v2621 = vpop.permute.xlu0 %2620
    %v2622 = vsel %vm361, %v2619, 0
    %v2624 = vsel %vm361, %v2621, 0
    %2626 = vmatprep.subr.mxu0 0.0
    %2627 = vmatpush1.xpose.msra.mxu0 %v2341
    %2628 = vmatprep.subr.mxu0 0.0
    %2629 = vmatpush1.xpose.msra.mxu0 %v2343
    %2630 = vmatprep.subr.mxu0 0.0
    %2631 = vmatpush1.xpose.msra.mxu0 0.0
    %2632 = vmatprep.subr.mxu0 0.0
    %2633 = vmatpush1.xpose.msra.mxu0 0.0
    %2634 = vmatprep.subr.mxu0 0.0
    %2635 = vmatpush1.xpose.msra.mxu0 0.0
    %2636 = vmatprep.subr.mxu0 0.0
    %2637 = vmatpush1.xpose.msra.mxu0 0.0
    %2638 = vmatprep.subr.mxu0 0.0
    %2639 = vmatpush1.xpose.msra.mxu0 0.0
    %2640 = vmatprep.subr.mxu0 0.0
    %2641 = vmatpush1.xpose.msra.mxu0 0.0
    %2642 = vmatprep.subr.mxu0 0.0
    %2643 = vmatpush1.xpose.msra.mxu0 0.0
    %2644 = vmatprep.subr.mxu0 0.0
    %2645 = vmatpush1.xpose.msra.mxu0 0.0
    %2646 = vmatprep.subr.mxu0 0.0
    %2647 = vmatpush1.xpose.msra.mxu0 0.0
    %2648 = vmatprep.subr.mxu0 0.0
    %2649 = vmatpush1.xpose.msra.mxu0 0.0
    %2650 = vmatprep.subr.mxu0 0.0
    %2651 = vmatpush1.xpose.msra.mxu0 0.0
    %2652 = vmatprep.subr.mxu0 0.0
    %2653 = vmatpush1.xpose.msra.mxu0 0.0
    %2654 = vmatprep.subr.mxu0 0.0
    %2655 = vmatpush1.xpose.msra.mxu0 0.0
    %2656 = vmatprep.subr.mxu0 0.0
    %2657 = vmatpush1.xpose.msra.mxu0 0.0
    %2658 = vmatprep.subr.mxu0 0.0
    %2659 = vmatpush1.xpose.msra.mxu0 0.0
    %2660 = vmatprep.subr.mxu0 0.0
    %2661 = vmatpush1.xpose.msra.mxu0 0.0
    %2662 = vmatprep.subr.mxu0 0.0
    %2663 = vmatpush1.xpose.msra.mxu0 0.0
    %2664 = vmatprep.subr.mxu0 0.0
    %2665 = vmatpush1.xpose.msra.mxu0 0.0
    %2666 = vmatprep.subr.mxu0 0.0
    %2667 = vmatpush1.xpose.msra.mxu0 0.0
    %2668 = vmatprep.subr.mxu0 0.0
    %2669 = vmatpush1.xpose.msra.mxu0 0.0
    %2670 = vmatprep.subr.mxu0 0.0
    %2671 = vmatpush1.xpose.msra.mxu0 0.0
    %2672 = vmatprep.subr.mxu0 0.0
    %2673 = vmatpush1.xpose.msra.mxu0 0.0
    %2674 = vmatprep.subr.mxu0 0.0
    %2675 = vmatpush1.xpose.msra.mxu0 0.0
    %2676 = vmatprep.subr.mxu0 0.0
    %2677 = vmatpush1.xpose.msra.mxu0 0.0
    %2678 = vmatprep.subr.mxu0 0.0
    %2679 = vmatpush1.xpose.msra.mxu0 0.0
    %2680 = vmatprep.subr.mxu0 0.0
    %2681 = vmatpush1.xpose.msra.mxu0 0.0
    %2682 = vmatprep.subr.mxu0 0.0
    %2683 = vmatpush1.xpose.msra.mxu0 0.0
    %2684 = vmatprep.subr.mxu0 0.0
    %2685 = vmatpush1.xpose.msra.mxu0 0.0
    %2686 = vmatprep.subr.mxu0 0.0
    %2687 = vmatpush1.xpose.msra.mxu0 0.0
    %2688 = vmatprep.subr.mxu0 0.0
    %2689 = vmatpush1.xpose.msra.mxu0 0.0
    %2690 = vmatprep.mubr.f32.mxu0 0.0
    %2691 = vmatmul.mubr.f32.gmra.mrb[0].mxu0 %v2622
    %v2692 = vpop.f32.mrb[0].mxu0
    %v2693 = vadd.f32 %v2610, %v2692
    %v2694 = vpop.f32.mrb[0].mxu0
    %2695 = vmatprep.mubr.f32.mxu0 0.0
    %2696 = vmatmul.mubr.f32.gmra.mrb[0].mxu0 %v2624
    %v2697 = vpop.f32.mrb[0].mxu0
    %v2698 = vadd.f32 %v2615, %v2697
    %v2699 = vpop.f32.mrb[0].mxu0
    %2700 = vdwg.mxu0
    %v2701 = vmul.f32 %v2693, 0.25
    %v2702 = vmul.f32 %v2698, 0.25
    %v2703 = vadd.f32 %v2701, %v133
    %v2704 = vadd.f32 %v2702, %v134
    %v2705 = vsel %vm542, %v2703, -inf
    %2706 = vmax.xlane.f32.xlu0 %v2705
    %v2707 = vpop.xlane.xlu0 %2706
    %v2708 = vsel %vm542, %v2704, -inf
    %2709 = vmax.xlane.f32.xlu0 %v2708
    %v2710 = vpop.xlane.xlu0 %2709
    %v2711 = vsub.f32 %v2703, %v2707
    %v2712 = vsub.f32 %v2704, %v2710
    %v2713 = vmul.f32 %v2711, 1.442695
    %v2714 = vpow.pop %v2713
    %v2715 = vmul.f32 %v2712, 1.442695
    %v2716 = vpow.pop %v2715
    %v2717 = vsel %vm542, %v2714, 0.0
    %2718 = vadd.xlane.f32.xlu0 %v2717
    %v2719 = vpop.xlane.xlu0 %2718
    %v2720 = vsel %vm542, %v2716, 0.0
    %2721 = vadd.xlane.f32.xlu0 %v2720
    %v2722 = vpop.xlane.xlu0 %2721
    %v2723 = vrcp.pop %v2719
    %v2724 = vrcp.pop %v2722
    %v2725 = vmul.f32 %v2714, %v2723
    %v2726 = vmul.f32 %v2716, %v2724
    %v2728 = vsel %vm542, %v2725, 0
    %v2731 = vsel %vm542, %v2726, 0
    %2733 = vmatprep.subr.mxu0 0.0
    %2734 = vmatpush1.msra.mxu0 %v2449
    %2735 = vmatprep.subr.mxu0 0.0
    %2736 = vmatpush1.msra.mxu0 %v2451
    %2737 = vmatprep.subr.mxu0 0.0
    %2738 = vmatpush1.msra.mxu0 0.0
    %2739 = vmatprep.subr.mxu0 0.0
    %2740 = vmatpush1.msra.mxu0 0.0
    %2741 = vmatprep.subr.mxu0 0.0
    %2742 = vmatpush1.msra.mxu0 0.0
    %2743 = vmatprep.subr.mxu0 0.0
    %2744 = vmatpush1.msra.mxu0 0.0
    %2745 = vmatprep.subr.mxu0 0.0
    %2746 = vmatpush1.msra.mxu0 0.0
    %2747 = vmatprep.subr.mxu0 0.0
    %2748 = vmatpush1.msra.mxu0 0.0
    %2749 = vmatprep.subr.mxu0 0.0
    %2750 = vmatpush1.msra.mxu0 0.0
    %2751 = vmatprep.subr.mxu0 0.0
    %2752 = vmatpush1.msra.mxu0 0.0
    %2753 = vmatprep.subr.mxu0 0.0
    %2754 = vmatpush1.msra.mxu0 0.0
    %2755 = vmatprep.subr.mxu0 0.0
    %2756 = vmatpush1.msra.mxu0 0.0
    %2757 = vmatprep.subr.mxu0 0.0
    %2758 = vmatpush1.msra.mxu0 0.0
    %2759 = vmatprep.subr.mxu0 0.0
    %2760 = vmatpush1.msra.mxu0 0.0
    %2761 = vmatprep.subr.mxu0 0.0
    %2762 = vmatpush1.msra.mxu0 0.0
    %2763 = vmatprep.subr.mxu0 0.0
    %2764 = vmatpush1.msra.mxu0 0.0
    %2765 = vmatprep.subr.mxu0 0.0
    %2766 = vmatpush1.msra.mxu0 0.0
    %2767 = vmatprep.subr.mxu0 0.0
    %2768 = vmatpush1.msra.mxu0 0.0
    %2769 = vmatprep.subr.mxu0 0.0
    %2770 = vmatpush1.msra.mxu0 0.0
    %2771 = vmatprep.subr.mxu0 0.0
    %2772 = vmatpush1.msra.mxu0 0.0
    %2773 = vmatprep.subr.mxu0 0.0
    %2774 = vmatpush1.msra.mxu0 0.0
    %2775 = vmatprep.subr.mxu0 0.0
    %2776 = vmatpush1.msra.mxu0 0.0
    %2777 = vmatprep.subr.mxu0 0.0
    %2778 = vmatpush1.msra.mxu0 0.0
    %2779 = vmatprep.subr.mxu0 0.0
    %2780 = vmatpush1.msra.mxu0 0.0
    %2781 = vmatprep.subr.mxu0 0.0
    %2782 = vmatpush1.msra.mxu0 0.0
    %2783 = vmatprep.subr.mxu0 0.0
    %2784 = vmatpush1.msra.mxu0 0.0
    %2785 = vmatprep.subr.mxu0 0.0
    %2786 = vmatpush1.msra.mxu0 0.0
    %2787 = vmatprep.subr.mxu0 0.0
    %2788 = vmatpush1.msra.mxu0 0.0
    %2789 = vmatprep.subr.mxu0 0.0
    %2790 = vmatpush1.msra.mxu0 0.0
    %2791 = vmatprep.subr.mxu0 0.0
    %2792 = vmatpush1.msra.mxu0 0.0
    %2793 = vmatprep.subr.mxu0 0.0
    %2794 = vmatpush1.msra.mxu0 0.0
    %2795 = vmatprep.subr.mxu0 0.0
    %2796 = vmatpush1.msra.mxu0 0.0
    %2797 = vmatprep.mubr.f32.mxu0 0.0
    %2798 = vmatmul.mubr.f32.gmra.mrb[0].mxu0 %v2728
    %v2799 = vpop.f32.mrb[0].mxu0
    %v2800 = vadd.f32 0.0, %v2799
    %v2801 = vpop.f32.mrb[0].mxu0
    %2802 = vmatprep.mubr.f32.mxu0 0.0
    %2803 = vmatmul.mubr.f32.gmra.mrb[0].mxu0 %v2731
    %v2804 = vpop.f32.mrb[0].mxu0
    %v2805 = vadd.f32 0.0, %v2804
    %v2806 = vpop.f32.mrb[0].mxu0
    %2807 = vdwg.mxu0
    %v2809 = vsel %vm542, %v2800, 0
    %v2812 = vsel %vm542, %v2805, 0
    %2814 = vmatprep.subr.mxu0 0.0
    %2815 = vmatpush1.msra.mxu0 %v2232
    %2816 = vmatprep.subr.mxu0 0.0
    %2817 = vmatpush1.msra.mxu0 %v2233
    %2818 = vmatprep.subr.mxu0 0.0
    %2819 = vmatpush1.msra.mxu0 0.0
    %2820 = vmatprep.subr.mxu0 0.0
    %2821 = vmatpush1.msra.mxu0 0.0
    %2822 = vmatprep.subr.mxu0 0.0
    %2823 = vmatpush1.msra.mxu0 0.0
    %2824 = vmatprep.subr.mxu0 0.0
    %2825 = vmatpush1.msra.mxu0 0.0
    %2826 = vmatprep.subr.mxu0 0.0
    %2827 = vmatpush1.msra.mxu0 0.0
    %2828 = vmatprep.subr.mxu0 0.0
    %2829 = vmatpush1.msra.mxu0 0.0
    %2830 = vmatprep.subr.mxu0 0.0
    %2831 = vmatpush1.msra.mxu0 0.0
    %2832 = vmatprep.subr.mxu0 0.0
    %2833 = vmatpush1.msra.mxu0 0.0
    %2834 = vmatprep.subr.mxu0 0.0
    %2835 = vmatpush1.msra.mxu0 0.0
    %2836 = vmatprep.subr.mxu0 0.0
    %2837 = vmatpush1.msra.mxu0 0.0
    %2838 = vmatprep.subr.mxu0 0.0
    %2839 = vmatpush1.msra.mxu0 0.0
    %2840 = vmatprep.subr.mxu0 0.0
    %2841 = vmatpush1.msra.mxu0 0.0
    %2842 = vmatprep.subr.mxu0 0.0
    %2843 = vmatpush1.msra.mxu0 0.0
    %2844 = vmatprep.subr.mxu0 0.0
    %2845 = vmatpush1.msra.mxu0 0.0
    %2846 = vmatprep.subr.mxu0 0.0
    %2847 = vmatpush1.msra.mxu0 0.0
    %2848 = vmatprep.subr.mxu0 0.0
    %2849 = vmatpush1.msra.mxu0 0.0
    %2850 = vmatprep.subr.mxu0 0.0
    %2851 = vmatpush1.msra.mxu0 0.0
    %2852 = vmatprep.subr.mxu0 0.0
    %2853 = vmatpush1.msra.mxu0 0.0
    %2854 = vmatprep.subr.mxu0 0.0
    %2855 = vmatpush1.msra.mxu0 0.0
    %2856 = vmatprep.subr.mxu0 0.0
    %2857 = vmatpush1.msra.mxu0 0.0
    %2858 = vmatprep.subr.mxu0 0.0
    %2859 = vmatpush1.msra.mxu0 0.0
    %2860 = vmatprep.subr.mxu0 0.0
    %2861 = vmatpush1.msra.mxu0 0.0
    %2862 = vmatprep.subr.mxu0 0.0
    %2863 = vmatpush1.msra.mxu0 0.0
    %2864 = vmatprep.subr.mxu0 0.0
    %2865 = vmatpush1.msra.mxu0 0.0
    %2866 = vmatprep.subr.mxu0 0.0
    %2867 = vmatpush1.msra.mxu0 0.0
    %2868 = vmatprep.subr.mxu0 0.0
    %2869 = vmatpush1.msra.mxu0 0.0
    %2870 = vmatprep.subr.mxu0 0.0
    %2871 = vmatpush1.msra.mxu0 0.0
    %2872 = vmatprep.subr.mxu0 0.0
    %2873 = vmatpush1.msra.mxu0 0.0
    %2874 = vmatprep.subr.mxu0 0.0
    %2875 = vmatpush1.msra.mxu0 0.0
    %2876 = vmatprep.subr.mxu0 0.0
    %2877 = vmatpush1.msra.mxu0 0.0
    %2878 = vmatprep.mubr.f32.mxu0 0.0
    %2879 = vmatmul.mubr.f32.gmra.mrb[0].mxu0 %v2809
    %v2880 = vpop.f32.mrb[0].mxu0
    %v2881 = vadd.f32 0.0, %v2880
    %v2882 = vpop.f32.mrb[0].mxu0
    %2883 = vmatprep.mubr.f32.mxu0 0.0
    %2884 = vmatmul.mubr.f32.gmra.mrb[0].mxu0 %v2812
    %v2885 = vpop.f32.mrb[0].mxu0
    %v2886 = vadd.f32 0.0, %v2885
    %v2887 = vpop.f32.mrb[0].mxu0
    %2888 = vdwg.mxu0
    %v2890 = vsel %vm542, %v2527, 0
    %v2893 = vsel %vm542, %v2532, 0
    %2895 = vmatprep.subr.mxu0 0.0
    %2896 = vmatpush1.msra.mxu0 %v2230
    %2897 = vmatprep.subr.mxu0 0.0
    %2898 = vmatpush1.msra.mxu0 %v2231
    %2899 = vmatprep.subr.mxu0 0.0
    %2900 = vmatpush1.msra.mxu0 0.0
    %2901 = vmatprep.subr.mxu0 0.0
    %2902 = vmatpush1.msra.mxu0 0.0
    %2903 = vmatprep.subr.mxu0 0.0
    %2904 = vmatpush1.msra.mxu0 0.0
    %2905 = vmatprep.subr.mxu0 0.0
    %2906 = vmatpush1.msra.mxu0 0.0
    %2907 = vmatprep.subr.mxu0 0.0
    %2908 = vmatpush1.msra.mxu0 0.0
    %2909 = vmatprep.subr.mxu0 0.0
    %2910 = vmatpush1.msra.mxu0 0.0
    %2911 = vmatprep.subr.mxu0 0.0
    %2912 = vmatpush1.msra.mxu0 0.0
    %2913 = vmatprep.subr.mxu0 0.0
    %2914 = vmatpush1.msra.mxu0 0.0
    %2915 = vmatprep.subr.mxu0 0.0
    %2916 = vmatpush1.msra.mxu0 0.0
    %2917 = vmatprep.subr.mxu0 0.0
    %2918 = vmatpush1.msra.mxu0 0.0
    %2919 = vmatprep.subr.mxu0 0.0
    %2920 = vmatpush1.msra.mxu0 0.0
    %2921 = vmatprep.subr.mxu0 0.0
    %2922 = vmatpush1.msra.mxu0 0.0
    %2923 = vmatprep.subr.mxu0 0.0
    %2924 = vmatpush1.msra.mxu0 0.0
    %2925 = vmatprep.subr.mxu0 0.0
    %2926 = vmatpush1.msra.mxu0 0.0
    %2927 = vmatprep.subr.mxu0 0.0
    %2928 = vmatpush1.msra.mxu0 0.0
    %2929 = vmatprep.subr.mxu0 0.0
    %2930 = vmatpush1.msra.mxu0 0.0
    %2931 = vmatprep.subr.mxu0 0.0
    %2932 = vmatpush1.msra.mxu0 0.0
    %2933 = vmatprep.subr.mxu0 0.0
    %2934 = vmatpush1.msra.mxu0 0.0
    %2935 = vmatprep.subr.mxu0 0.0
    %2936 = vmatpush1.msra.mxu0 0.0
    %2937 = vmatprep.subr.mxu0 0.0
    %2938 = vmatpush1.msra.mxu0 0.0
    %2939 = vmatprep.subr.mxu0 0.0
    %2940 = vmatpush1.msra.mxu0 0.0
    %2941 = vmatprep.subr.mxu0 0.0
    %2942 = vmatpush1.msra.mxu0 0.0
    %2943 = vmatprep.subr.mxu0 0.0
    %2944 = vmatpush1.msra.mxu0 0.0
    %2945 = vmatprep.subr.mxu0 0.0
    %2946 = vmatpush1.msra.mxu0 0.0
    %2947 = vmatprep.subr.mxu0 0.0
    %2948 = vmatpush1.msra.mxu0 0.0
    %2949 = vmatprep.subr.mxu0 0.0
    %2950 = vmatpush1.msra.mxu0 0.0
    %2951 = vmatprep.subr.mxu0 0.0
    %2952 = vmatpush1.msra.mxu0 0.0
    %2953 = vmatprep.subr.mxu0 0.0
    %2954 = vmatpush1.msra.mxu0 0.0
    %2955 = vmatprep.subr.mxu0 0.0
    %2956 = vmatpush1.msra.mxu0 0.0
    %2957 = vmatprep.subr.mxu0 0.0
    %2958 = vmatpush1.msra.mxu0 0.0
    %2959 = vmatprep.mubr.f32.mxu0 0.0
    %2960 = vmatmul.mubr.f32.gmra.mrb[0].mxu0 %v2890
    %v2961 = vpop.f32.mrb[0].mxu0
    %v2962 = vadd.f32 %v2881, %v2961
    %v2963 = vpop.f32.mrb[0].mxu0
    %2964 = vmatprep.mubr.f32.mxu0 0.0
    %2965 = vmatmul.mubr.f32.gmra.mrb[0].mxu0 %v2893
    %v2966 = vpop.f32.mrb[0].mxu0
    %v2967 = vadd.f32 %v2886, %v2966
    %v2968 = vpop.f32.mrb[0].mxu0
    %2969 = vdwg.mxu0
    %2970 = vrot.lane.b32.xlu0 %v2199, 112
    %v2971 = vpop.permute.xlu0 %2970
    %2972 = vrot.lane.b32.xlu0 %v2200, 112
    %v2973 = vpop.permute.xlu0 %2972
    %2974 = vrot.lane.b32.xlu0 %v2227, 56
    %v2975 = vpop.permute.xlu0 %2974
    %2976 = vrot.lane.b32.xlu0 %v2228, 56
    %v2977 = vpop.permute.xlu0 %2976
    %v2978 = vsel %vm361, %v2971, 0
    %v2980 = vsel %vm361, %v2973, 0
    %v2982 = vsel %vm361, %v2975, 0
    %v2984 = vsel %vm361, %v2977, 0
    %2986 = vmatprep.subr.mxu0 0.0
    %2987 = vmatpush1.xpose.msra.mxu0 %v2982
    %2988 = vmatprep.subr.mxu0 0.0
    %2989 = vmatpush1.xpose.msra.mxu0 %v2984
    %2990 = vmatprep.subr.mxu0 0.0
    %2991 = vmatpush1.xpose.msra.mxu0 0.0
    %2992 = vmatprep.subr.mxu0 0.0
    %2993 = vmatpush1.xpose.msra.mxu0 0.0
    %2994 = vmatprep.subr.mxu0 0.0
    %2995 = vmatpush1.xpose.msra.mxu0 0.0
    %2996 = vmatprep.subr.mxu0 0.0
    %2997 = vmatpush1.xpose.msra.mxu0 0.0
    %2998 = vmatprep.subr.mxu0 0.0
    %2999 = vmatpush1.xpose.msra.mxu0 0.0
    %3000 = vmatprep.subr.mxu0 0.0
    %3001 = vmatpush1.xpose.msra.mxu0 0.0
    %3002 = vmatprep.subr.mxu0 0.0
    %3003 = vmatpush1.xpose.msra.mxu0 0.0
    %3004 = vmatprep.subr.mxu0 0.0
    %3005 = vmatpush1.xpose.msra.mxu0 0.0
    %3006 = vmatprep.subr.mxu0 0.0
    %3007 = vmatpush1.xpose.msra.mxu0 0.0
    %3008 = vmatprep.subr.mxu0 0.0
    %3009 = vmatpush1.xpose.msra.mxu0 0.0
    %3010 = vmatprep.subr.mxu0 0.0
    %3011 = vmatpush1.xpose.msra.mxu0 0.0
    %3012 = vmatprep.subr.mxu0 0.0
    %3013 = vmatpush1.xpose.msra.mxu0 0.0
    %3014 = vmatprep.subr.mxu0 0.0
    %3015 = vmatpush1.xpose.msra.mxu0 0.0
    %3016 = vmatprep.subr.mxu0 0.0
    %3017 = vmatpush1.xpose.msra.mxu0 0.0
    %3018 = vmatprep.subr.mxu0 0.0
    %3019 = vmatpush1.xpose.msra.mxu0 0.0
    %3020 = vmatprep.subr.mxu0 0.0
    %3021 = vmatpush1.xpose.msra.mxu0 0.0
    %3022 = vmatprep.subr.mxu0 0.0
    %3023 = vmatpush1.xpose.msra.mxu0 0.0
    %3024 = vmatprep.subr.mxu0 0.0
    %3025 = vmatpush1.xpose.msra.mxu0 0.0
    %3026 = vmatprep.subr.mxu0 0.0
    %3027 = vmatpush1.xpose.msra.mxu0 0.0
    %3028 = vmatprep.subr.mxu0 0.0
    %3029 = vmatpush1.xpose.msra.mxu0 0.0
    %3030 = vmatprep.subr.mxu0 0.0
    %3031 = vmatpush1.xpose.msra.mxu0 0.0
    %3032 = vmatprep.subr.mxu0 0.0
    %3033 = vmatpush1.xpose.msra.mxu0 0.0
    %3034 = vmatprep.subr.mxu0 0.0
    %3035 = vmatpush1.xpose.msra.mxu0 0.0
    %3036 = vmatprep.subr.mxu0 0.0
    %3037 = vmatpush1.xpose.msra.mxu0 0.0
    %3038 = vmatprep.subr.mxu0 0.0
    %3039 = vmatpush1.xpose.msra.mxu0 0.0
    %3040 = vmatprep.subr.mxu0 0.0
    %3041 = vmatpush1.xpose.msra.mxu0 0.0
    %3042 = vmatprep.subr.mxu0 0.0
    %3043 = vmatpush1.xpose.msra.mxu0 0.0
    %3044 = vmatprep.subr.mxu0 0.0
    %3045 = vmatpush1.xpose.msra.mxu0 0.0
    %3046 = vmatprep.subr.mxu0 0.0
    %3047 = vmatpush1.xpose.msra.mxu0 0.0
    %3048 = vmatprep.subr.mxu0 0.0
    %3049 = vmatpush1.xpose.msra.mxu0 0.0
    %3050 = vmatprep.mubr.f32.mxu0 0.0
    %3051 = vmatmul.mubr.f32.gmra.mrb[0].mxu0 %v2978
    %v3052 = vpop.f32.mrb[0].mxu0
    %v3053 = vadd.f32 0.0, %v3052
    %v3054 = vpop.f32.mrb[0].mxu0
    %3055 = vmatprep.mubr.f32.mxu0 0.0
    %3056 = vmatmul.mubr.f32.gmra.mrb[0].mxu0 %v2980
    %v3057 = vpop.f32.mrb[0].mxu0
    %v3058 = vadd.f32 0.0, %v3057
    %v3059 = vpop.f32.mrb[0].mxu0
    %3060 = vdwg.mxu0
    %3061 = vrot.lane.b32.xlu0 %v2185, 112
    %v3062 = vpop.permute.xlu0 %3061
    %3063 = vrot.lane.b32.xlu0 %v2186, 112
    %v3064 = vpop.permute.xlu0 %3063
    %3065 = vrot.lane.b32.xlu0 %v2213, 56
    %v3066 = vpop.permute.xlu0 %3065
    %3067 = vrot.lane.b32.xlu0 %v2214, 56
    %v3068 = vpop.permute.xlu0 %3067
    %v3069 = vsel %vm361, %v3062, 0
    %v3071 = vsel %vm361, %v3064, 0
    %v3073 = vsel %vm361, %v3066, 0
    %v3075 = vsel %vm361, %v3068, 0
    %3077 = vmatprep.subr.mxu0 0.0
    %3078 = vmatpush1.xpose.msra.mxu0 %v3073
    %3079 = vmatprep.subr.mxu0 0.0
    %3080 = vmatpush1.xpose.msra.mxu0 %v3075
    %3081 = vmatprep.subr.mxu0 0.0
    %3082 = vmatpush1.xpose.msra.mxu0 0.0
    %3083 = vmatprep.subr.mxu0 0.0
    %3084 = vmatpush1.xpose.msra.mxu0 0.0
    %3085 = vmatprep.subr.mxu0 0.0
    %3086 = vmatpush1.xpose.msra.mxu0 0.0
    %3087 = vmatprep.subr.mxu0 0.0
    %3088 = vmatpush1.xpose.msra.mxu0 0.0
    %3089 = vmatprep.subr.mxu0 0.0
    %3090 = vmatpush1.xpose.msra.mxu0 0.0
    %3091 = vmatprep.subr.mxu0 0.0
    %3092 = vmatpush1.xpose.msra.mxu0 0.0
    %3093 = vmatprep.subr.mxu0 0.0
    %3094 = vmatpush1.xpose.msra.mxu0 0.0
    %3095 = vmatprep.subr.mxu0 0.0
    %3096 = vmatpush1.xpose.msra.mxu0 0.0
    %3097 = vmatprep.subr.mxu0 0.0
    %3098 = vmatpush1.xpose.msra.mxu0 0.0
    %3099 = vmatprep.subr.mxu0 0.0
    %3100 = vmatpush1.xpose.msra.mxu0 0.0
    %3101 = vmatprep.subr.mxu0 0.0
    %3102 = vmatpush1.xpose.msra.mxu0 0.0
    %3103 = vmatprep.subr.mxu0 0.0
    %3104 = vmatpush1.xpose.msra.mxu0 0.0
    %3105 = vmatprep.subr.mxu0 0.0
    %3106 = vmatpush1.xpose.msra.mxu0 0.0
    %3107 = vmatprep.subr.mxu0 0.0
    %3108 = vmatpush1.xpose.msra.mxu0 0.0
    %3109 = vmatprep.subr.mxu0 0.0
    %3110 = vmatpush1.xpose.msra.mxu0 0.0
    %3111 = vmatprep.subr.mxu0 0.0
    %3112 = vmatpush1.xpose.msra.mxu0 0.0
    %3113 = vmatprep.subr.mxu0 0.0
    %3114 = vmatpush1.xpose.msra.mxu0 0.0
    %3115 = vmatprep.subr.mxu0 0.0
    %3116 = vmatpush1.xpose.msra.mxu0 0.0
    %3117 = vmatprep.subr.mxu0 0.0
    %3118 = vmatpush1.xpose.msra.mxu0 0.0
    %3119 = vmatprep.subr.mxu0 0.0
    %3120 = vmatpush1.xpose.msra.mxu0 0.0
    %3121 = vmatprep.subr.mxu0 0.0
    %3122 = vmatpush1.xpose.msra.mxu0 0.0
    %3123 = vmatprep.subr.mxu0 0.0
    %3124 = vmatpush1.xpose.msra.mxu0 0.0
    %3125 = vmatprep.subr.mxu0 0.0
    %3126 = vmatpush1.xpose.msra.mxu0 0.0
    %3127 = vmatprep.subr.mxu0 0.0
    %3128 = vmatpush1.xpose.msra.mxu0 0.0
    %3129 = vmatprep.subr.mxu0 0.0
    %3130 = vmatpush1.xpose.msra.mxu0 0.0
    %3131 = vmatprep.subr.mxu0 0.0
    %3132 = vmatpush1.xpose.msra.mxu0 0.0
    %3133 = vmatprep.subr.mxu0 0.0
    %3134 = vmatpush1.xpose.msra.mxu0 0.0
    %3135 = vmatprep.subr.mxu0 0.0
    %3136 = vmatpush1.xpose.msra.mxu0 0.0
    %3137 = vmatprep.subr.mxu0 0.0
    %3138 = vmatpush1.xpose.msra.mxu0 0.0
    %3139 = vmatprep.subr.mxu0 0.0
    %3140 = vmatpush1.xpose.msra.mxu0 0.0
    %3141 = vmatprep.mubr.f32.mxu0 0.0
    %3142 = vmatmul.mubr.f32.gmra.mrb[0].mxu0 %v3069
    %v3143 = vpop.f32.mrb[0].mxu0
    %v3144 = vadd.f32 %v3053, %v3143
    %v3145 = vpop.f32.mrb[0].mxu0
    %3146 = vmatprep.mubr.f32.mxu0 0.0
    %3147 = vmatmul.mubr.f32.gmra.mrb[0].mxu0 %v3071
    %v3148 = vpop.f32.mrb[0].mxu0
    %v3149 = vadd.f32 %v3058, %v3148
    %v3150 = vpop.f32.mrb[0].mxu0
    %3151 = vdwg.mxu0
    %v3152 = vmul.f32 %v3144, 0.25
    %v3153 = vmul.f32 %v3149, 0.25
    %v3154 = vadd.f32 %v3152, %v133
    %v3155 = vadd.f32 %v3153, %v134
    %v3156 = vsel %vm542, %v3154, -inf
    %3157 = vmax.xlane.f32.xlu0 %v3156
    %v3158 = vpop.xlane.xlu0 %3157
    %v3159 = vsel %vm542, %v3155, -inf
    %3160 = vmax.xlane.f32.xlu0 %v3159
    %v3161 = vpop.xlane.xlu0 %3160
    %v3162 = vsub.f32 %v3154, %v3158
    %v3163 = vsub.f32 %v3155, %v3161
    %v3164 = vmul.f32 %v3162, 1.442695
    %v3165 = vpow.pop %v3164
    %v3166 = vmul.f32 %v3163, 1.442695
    %v3167 = vpow.pop %v3166
    %v3168 = vsel %vm542, %v3165, 0.0
    %3169 = vadd.xlane.f32.xlu0 %v3168
    %v3170 = vpop.xlane.xlu0 %3169
    %v3171 = vsel %vm542, %v3167, 0.0
    %3172 = vadd.xlane.f32.xlu0 %v3171
    %v3173 = vpop.xlane.xlu0 %3172
    %v3174 = vrcp.pop %v3170
    %v3175 = vrcp.pop %v3173
    %v3176 = vmul.f32 %v3165, %v3174
    %v3177 = vmul.f32 %v3167, %v3175
    %3178 = vrot.lane.b32.xlu0 %v2167, 16
    %v3179 = vpop.permute.xlu0 %3178
    %3180 = vrot.lane.b32.xlu0 %v2170, 16
    %v3181 = vpop.permute.xlu0 %3180
    %v3185 = vsel %vm542, %v3176, 0
    %v3188 = vsel %vm542, %v3177, 0
    %3190 = vmatprep.subr.mxu0 0.0
    %3191 = vmatpush1.msra.mxu0 %v3179
    %3192 = vmatprep.subr.mxu0 0.0
    %3193 = vmatpush1.msra.mxu0 %v3181
    %3194 = vmatprep.subr.mxu0 0.0
    %3195 = vmatpush1.msra.mxu0 0.0
    %3196 = vmatprep.subr.mxu0 0.0
    %3197 = vmatpush1.msra.mxu0 0.0
    %3198 = vmatprep.subr.mxu0 0.0
    %3199 = vmatpush1.msra.mxu0 0.0
    %3200 = vmatprep.subr.mxu0 0.0
    %3201 = vmatpush1.msra.mxu0 0.0
    %3202 = vmatprep.subr.mxu0 0.0
    %3203 = vmatpush1.msra.mxu0 0.0
    %3204 = vmatprep.subr.mxu0 0.0
    %3205 = vmatpush1.msra.mxu0 0.0
    %3206 = vmatprep.subr.mxu0 0.0
    %3207 = vmatpush1.msra.mxu0 0.0
    %3208 = vmatprep.subr.mxu0 0.0
    %3209 = vmatpush1.msra.mxu0 0.0
    %3210 = vmatprep.subr.mxu0 0.0
    %3211 = vmatpush1.msra.mxu0 0.0
    %3212 = vmatprep.subr.mxu0 0.0
    %3213 = vmatpush1.msra.mxu0 0.0
    %3214 = vmatprep.subr.mxu0 0.0
    %3215 = vmatpush1.msra.mxu0 0.0
    %3216 = vmatprep.subr.mxu0 0.0
    %3217 = vmatpush1.msra.mxu0 0.0
    %3218 = vmatprep.subr.mxu0 0.0
    %3219 = vmatpush1.msra.mxu0 0.0
    %3220 = vmatprep.subr.mxu0 0.0
    %3221 = vmatpush1.msra.mxu0 0.0
    %3222 = vmatprep.subr.mxu0 0.0
    %3223 = vmatpush1.msra.mxu0 0.0
    %3224 = vmatprep.subr.mxu0 0.0
    %3225 = vmatpush1.msra.mxu0 0.0
    %3226 = vmatprep.subr.mxu0 0.0
    %3227 = vmatpush1.msra.mxu0 0.0
    %3228 = vmatprep.subr.mxu0 0.0
    %3229 = vmatpush1.msra.mxu0 0.0
    %3230 = vmatprep.subr.mxu0 0.0
    %3231 = vmatpush1.msra.mxu0 0.0
    %3232 = vmatprep.subr.mxu0 0.0
    %3233 = vmatpush1.msra.mxu0 0.0
    %3234 = vmatprep.subr.mxu0 0.0
    %3235 = vmatpush1.msra.mxu0 0.0
    %3236 = vmatprep.subr.mxu0 0.0
    %3237 = vmatpush1.msra.mxu0 0.0
    %3238 = vmatprep.subr.mxu0 0.0
    %3239 = vmatpush1.msra.mxu0 0.0
    %3240 = vmatprep.subr.mxu0 0.0
    %3241 = vmatpush1.msra.mxu0 0.0
    %3242 = vmatprep.subr.mxu0 0.0
    %3243 = vmatpush1.msra.mxu0 0.0
    %3244 = vmatprep.subr.mxu0 0.0
    %3245 = vmatpush1.msra.mxu0 0.0
    %3246 = vmatprep.subr.mxu0 0.0
    %3247 = vmatpush1.msra.mxu0 0.0
    %3248 = vmatprep.subr.mxu0 0.0
    %3249 = vmatpush1.msra.mxu0 0.0
    %3250 = vmatprep.subr.mxu0 0.0
    %3251 = vmatpush1.msra.mxu0 0.0
    %3252 = vmatprep.subr.mxu0 0.0
    %3253 = vmatpush1.msra.mxu0 0.0
    %3254 = vmatprep.mubr.f32.mxu0 0.0
    %3255 = vmatmul.mubr.f32.gmra.mrb[0].mxu0 %v3185
    %v3256 = vpop.f32.mrb[0].mxu0
    %v3257 = vadd.f32 0.0, %v3256
    %v3258 = vpop.f32.mrb[0].mxu0
    %3259 = vmatprep.mubr.f32.mxu0 0.0
    %3260 = vmatmul.mubr.f32.gmra.mrb[0].mxu0 %v3188
    %v3261 = vpop.f32.mrb[0].mxu0
    %v3262 = vadd.f32 0.0, %v3261
    %v3263 = vpop.f32.mrb[0].mxu0
    %3264 = vdwg.mxu0
    %v3266 = vsel %vm542, %v3257, 0
    %v3269 = vsel %vm542, %v3262, 0
    %3271 = vmatprep.subr.mxu0 0.0
    %3272 = vmatpush1.msra.mxu0 %v2234
    %3273 = vmatprep.subr.mxu0 0.0
    %3274 = vmatpush1.msra.mxu0 %v2235
    %3275 = vmatprep.subr.mxu0 0.0
    %3276 = vmatpush1.msra.mxu0 0.0
    %3277 = vmatprep.subr.mxu0 0.0
    %3278 = vmatpush1.msra.mxu0 0.0
    %3279 = vmatprep.subr.mxu0 0.0
    %3280 = vmatpush1.msra.mxu0 0.0
    %3281 = vmatprep.subr.mxu0 0.0
    %3282 = vmatpush1.msra.mxu0 0.0
    %3283 = vmatprep.subr.mxu0 0.0
    %3284 = vmatpush1.msra.mxu0 0.0
    %3285 = vmatprep.subr.mxu0 0.0
    %3286 = vmatpush1.msra.mxu0 0.0
    %3287 = vmatprep.subr.mxu0 0.0
    %3288 = vmatpush1.msra.mxu0 0.0
    %3289 = vmatprep.subr.mxu0 0.0
    %3290 = vmatpush1.msra.mxu0 0.0
    %3291 = vmatprep.subr.mxu0 0.0
    %3292 = vmatpush1.msra.mxu0 0.0
    %3293 = vmatprep.subr.mxu0 0.0
    %3294 = vmatpush1.msra.mxu0 0.0
    %3295 = vmatprep.subr.mxu0 0.0
    %3296 = vmatpush1.msra.mxu0 0.0
    %3297 = vmatprep.subr.mxu0 0.0
    %3298 = vmatpush1.msra.mxu0 0.0
    %3299 = vmatprep.subr.mxu0 0.0
    %3300 = vmatpush1.msra.mxu0 0.0
    %3301 = vmatprep.subr.mxu0 0.0
    %3302 = vmatpush1.msra.mxu0 0.0
    %3303 = vmatprep.subr.mxu0 0.0
    %3304 = vmatpush1.msra.mxu0 0.0
    %3305 = vmatprep.subr.mxu0 0.0
    %3306 = vmatpush1.msra.mxu0 0.0
    %3307 = vmatprep.subr.mxu0 0.0
    %3308 = vmatpush1.msra.mxu0 0.0
    %3309 = vmatprep.subr.mxu0 0.0
    %3310 = vmatpush1.msra.mxu0 0.0
    %3311 = vmatprep.subr.mxu0 0.0
    %3312 = vmatpush1.msra.mxu0 0.0
    %3313 = vmatprep.subr.mxu0 0.0
    %3314 = vmatpush1.msra.mxu0 0.0
    %3315 = vmatprep.subr.mxu0 0.0
    %3316 = vmatpush1.msra.mxu0 0.0
    %3317 = vmatprep.subr.mxu0 0.0
    %3318 = vmatpush1.msra.mxu0 0.0
    %3319 = vmatprep.subr.mxu0 0.0
    %3320 = vmatpush1.msra.mxu0 0.0
    %3321 = vmatprep.subr.mxu0 0.0
    %3322 = vmatpush1.msra.mxu0 0.0
    %3323 = vmatprep.subr.mxu0 0.0
    %3324 = vmatpush1.msra.mxu0 0.0
    %3325 = vmatprep.subr.mxu0 0.0
    %3326 = vmatpush1.msra.mxu0 0.0
    %3327 = vmatprep.subr.mxu0 0.0
    %3328 = vmatpush1.msra.mxu0 0.0
    %3329 = vmatprep.subr.mxu0 0.0
    %3330 = vmatpush1.msra.mxu0 0.0
    %3331 = vmatprep.subr.mxu0 0.0
    %3332 = vmatpush1.msra.mxu0 0.0
    %3333 = vmatprep.subr.mxu0 0.0
    %3334 = vmatpush1.msra.mxu0 0.0
    %3335 = vmatprep.mubr.f32.mxu0 0.0
    %3336 = vmatmul.mubr.f32.gmra.mrb[0].mxu0 %v3266
    %v3337 = vpop.f32.mrb[0].mxu0
    %v3338 = vadd.f32 0.0, %v3337
    %v3339 = vpop.f32.mrb[0].mxu0
    %3340 = vmatprep.mubr.f32.mxu0 0.0
    %3341 = vmatmul.mubr.f32.gmra.mrb[0].mxu0 %v3269
    %v3342 = vpop.f32.mrb[0].mxu0
    %v3343 = vadd.f32 0.0, %v3342
    %v3344 = vpop.f32.mrb[0].mxu0
    %3345 = vdwg.mxu0
    %v3346 = vadd.f32 %v2962, %v3338
    %v3347 = vadd.f32 %v2967, %v3343
    %3348 = vrot.lane.b32.xlu0 %v2199, 104
    %v3349 = vpop.permute.xlu0 %3348
    %3350 = vrot.lane.b32.xlu0 %v2200, 104
    %v3351 = vpop.permute.xlu0 %3350
    %v3352 = vsel %vm361, %v3349, 0
    %v3354 = vsel %vm361, %v3351, 0
    %3356 = vmatprep.subr.mxu0 0.0
    %3357 = vmatpush1.xpose.msra.mxu0 %v2982
    %3358 = vmatprep.subr.mxu0 0.0
    %3359 = vmatpush1.xpose.msra.mxu0 %v2984
    %3360 = vmatprep.subr.mxu0 0.0
    %3361 = vmatpush1.xpose.msra.mxu0 0.0
    %3362 = vmatprep.subr.mxu0 0.0
    %3363 = vmatpush1.xpose.msra.mxu0 0.0
    %3364 = vmatprep.subr.mxu0 0.0
    %3365 = vmatpush1.xpose.msra.mxu0 0.0
    %3366 = vmatprep.subr.mxu0 0.0
    %3367 = vmatpush1.xpose.msra.mxu0 0.0
    %3368 = vmatprep.subr.mxu0 0.0
    %3369 = vmatpush1.xpose.msra.mxu0 0.0
    %3370 = vmatprep.subr.mxu0 0.0
    %3371 = vmatpush1.xpose.msra.mxu0 0.0
    %3372 = vmatprep.subr.mxu0 0.0
    %3373 = vmatpush1.xpose.msra.mxu0 0.0
    %3374 = vmatprep.subr.mxu0 0.0
    %3375 = vmatpush1.xpose.msra.mxu0 0.0
    %3376 = vmatprep.subr.mxu0 0.0
    %3377 = vmatpush1.xpose.msra.mxu0 0.0
    %3378 = vmatprep.subr.mxu0 0.0
    %3379 = vmatpush1.xpose.msra.mxu0 0.0
    %3380 = vmatprep.subr.mxu0 0.0
    %3381 = vmatpush1.xpose.msra.mxu0 0.0
    %3382 = vmatprep.subr.mxu0 0.0
    %3383 = vmatpush1.xpose.msra.mxu0 0.0
    %3384 = vmatprep.subr.mxu0 0.0
    %3385 = vmatpush1.xpose.msra.mxu0 0.0
    %3386 = vmatprep.subr.mxu0 0.0
    %3387 = vmatpush1.xpose.msra.mxu0 0.0
    %3388 = vmatprep.subr.mxu0 0.0
    %3389 = vmatpush1.xpose.msra.mxu0 0.0
    %3390 = vmatprep.subr.mxu0 0.0
    %3391 = vmatpush1.xpose.msra.mxu0 0.0
    %3392 = vmatprep.subr.mxu0 0.0
    %3393 = vmatpush1.xpose.msra.mxu0 0.0
    %3394 = vmatprep.subr.mxu0 0.0
    %3395 = vmatpush1.xpose.msra.mxu0 0.0
    %3396 = vmatprep.subr.mxu0 0.0
    %3397 = vmatpush1.xpose.msra.mxu0 0.0
    %3398 = vmatprep.subr.mxu0 0.0
    %3399 = vmatpush1.xpose.msra.mxu0 0.0
    %3400 = vmatprep.subr.mxu0 0.0
    %3401 = vmatpush1.xpose.msra.mxu0 0.0
    %3402 = vmatprep.subr.mxu0 0.0
    %3403 = vmatpush1.xpose.msra.mxu0 0.0
    %3404 = vmatprep.subr.mxu0 0.0
    %3405 = vmatpush1.xpose.msra.mxu0 0.0
    %3406 = vmatprep.subr.mxu0 0.0
    %3407 = vmatpush1.xpose.msra.mxu0 0.0
    %3408 = vmatprep.subr.mxu0 0.0
    %3409 = vmatpush1.xpose.msra.mxu0 0.0
    %3410 = vmatprep.subr.mxu0 0.0
    %3411 = vmatpush1.xpose.msra.mxu0 0.0
    %3412 = vmatprep.subr.mxu0 0.0
    %3413 = vmatpush1.xpose.msra.mxu0 0.0
    %3414 = vmatprep.subr.mxu0 0.0
    %3415 = vmatpush1.xpose.msra.mxu0 0.0
    %3416 = vmatprep.subr.mxu0 0.0
    %3417 = vmatpush1.xpose.msra.mxu0 0.0
    %3418 = vmatprep.subr.mxu0 0.0
    %3419 = vmatpush1.xpose.msra.mxu0 0.0
    %3420 = vmatprep.mubr.f32.mxu0 0.0
    %3421 = vmatmul.mubr.f32.gmra.mrb[0].mxu0 %v3352
    %v3422 = vpop.f32.mrb[0].mxu0
    %v3423 = vadd.f32 0.0, %v3422
    %v3424 = vpop.f32.mrb[0].mxu0
    %3425 = vmatprep.mubr.f32.mxu0 0.0
    %3426 = vmatmul.mubr.f32.gmra.mrb[0].mxu0 %v3354
    %v3427 = vpop.f32.mrb[0].mxu0
    %v3428 = vadd.f32 0.0, %v3427
    %v3429 = vpop.f32.mrb[0].mxu0
    %3430 = vdwg.mxu0
    %3431 = vrot.lane.b32.xlu0 %v2185, 104
    %v3432 = vpop.permute.xlu0 %3431
    %3433 = vrot.lane.b32.xlu0 %v2186, 104
    %v3434 = vpop.permute.xlu0 %3433
    %v3435 = vsel %vm361, %v3432, 0
    %v3437 = vsel %vm361, %v3434, 0
    %3439 = vmatprep.subr.mxu0 0.0
    %3440 = vmatpush1.xpose.msra.mxu0 %v3073
    %3441 = vmatprep.subr.mxu0 0.0
    %3442 = vmatpush1.xpose.msra.mxu0 %v3075
    %3443 = vmatprep.subr.mxu0 0.0
    %3444 = vmatpush1.xpose.msra.mxu0 0.0
    %3445 = vmatprep.subr.mxu0 0.0
    %3446 = vmatpush1.xpose.msra.mxu0 0.0
    %3447 = vmatprep.subr.mxu0 0.0
    %3448 = vmatpush1.xpose.msra.mxu0 0.0
    %3449 = vmatprep.subr.mxu0 0.0
    %3450 = vmatpush1.xpose.msra.mxu0 0.0
    %3451 = vmatprep.subr.mxu0 0.0
    %3452 = vmatpush1.xpose.msra.mxu0 0.0
    %3453 = vmatprep.subr.mxu0 0.0
    %3454 = vmatpush1.xpose.msra.mxu0 0.0
    %3455 = vmatprep.subr.mxu0 0.0
    %3456 = vmatpush1.xpose.msra.mxu0 0.0
    %3457 = vmatprep.subr.mxu0 0.0
    %3458 = vmatpush1.xpose.msra.mxu0 0.0
    %3459 = vmatprep.subr.mxu0 0.0
    %3460 = vmatpush1.xpose.msra.mxu0 0.0
    %3461 = vmatprep.subr.mxu0 0.0
    %3462 = vmatpush1.xpose.msra.mxu0 0.0
    %3463 = vmatprep.subr.mxu0 0.0
    %3464 = vmatpush1.xpose.msra.mxu0 0.0
    %3465 = vmatprep.subr.mxu0 0.0
    %3466 = vmatpush1.xpose.msra.mxu0 0.0
    %3467 = vmatprep.subr.mxu0 0.0
    %3468 = vmatpush1.xpose.msra.mxu0 0.0
    %3469 = vmatprep.subr.mxu0 0.0
    %3470 = vmatpush1.xpose.msra.mxu0 0.0
    %3471 = vmatprep.subr.mxu0 0.0
    %3472 = vmatpush1.xpose.msra.mxu0 0.0
    %3473 = vmatprep.subr.mxu0 0.0
    %3474 = vmatpush1.xpose.msra.mxu0 0.0
    %3475 = vmatprep.subr.mxu0 0.0
    %3476 = vmatpush1.xpose.msra.mxu0 0.0
    %3477 = vmatprep.subr.mxu0 0.0
    %3478 = vmatpush1.xpose.msra.mxu0 0.0
    %3479 = vmatprep.subr.mxu0 0.0
    %3480 = vmatpush1.xpose.msra.mxu0 0.0
    %3481 = vmatprep.subr.mxu0 0.0
    %3482 = vmatpush1.xpose.msra.mxu0 0.0
    %3483 = vmatprep.subr.mxu0 0.0
    %3484 = vmatpush1.xpose.msra.mxu0 0.0
    %3485 = vmatprep.subr.mxu0 0.0
    %3486 = vmatpush1.xpose.msra.mxu0 0.0
    %3487 = vmatprep.subr.mxu0 0.0
    %3488 = vmatpush1.xpose.msra.mxu0 0.0
    %3489 = vmatprep.subr.mxu0 0.0
    %3490 = vmatpush1.xpose.msra.mxu0 0.0
    %3491 = vmatprep.subr.mxu0 0.0
    %3492 = vmatpush1.xpose.msra.mxu0 0.0
    %3493 = vmatprep.subr.mxu0 0.0
    %3494 = vmatpush1.xpose.msra.mxu0 0.0
    %3495 = vmatprep.subr.mxu0 0.0
    %3496 = vmatpush1.xpose.msra.mxu0 0.0
    %3497 = vmatprep.subr.mxu0 0.0
    %3498 = vmatpush1.xpose.msra.mxu0 0.0
    %3499 = vmatprep.subr.mxu0 0.0
    %3500 = vmatpush1.xpose.msra.mxu0 0.0
    %3501 = vmatprep.subr.mxu0 0.0
    %3502 = vmatpush1.xpose.msra.mxu0 0.0
    %3503 = vmatprep.mubr.f32.mxu0 0.0
    %3504 = vmatmul.mubr.f32.gmra.mrb[0].mxu0 %v3435
    %v3505 = vpop.f32.mrb[0].mxu0
    %v3506 = vadd.f32 %v3423, %v3505
    %v3507 = vpop.f32.mrb[0].mxu0
    %3508 = vmatprep.mubr.f32.mxu0 0.0
    %3509 = vmatmul.mubr.f32.gmra.mrb[0].mxu0 %v3437
    %v3510 = vpop.f32.mrb[0].mxu0
    %v3511 = vadd.f32 %v3428, %v3510
    %v3512 = vpop.f32.mrb[0].mxu0
    %3513 = vdwg.mxu0
    %v3514 = vmul.f32 %v3506, 0.25
    %v3515 = vmul.f32 %v3511, 0.25
    %v3516 = vadd.f32 %v3514, %v133
    %v3517 = vadd.f32 %v3515, %v134
    %v3518 = vsel %vm542, %v3516, -inf
    %3519 = vmax.xlane.f32.xlu0 %v3518
    %v3520 = vpop.xlane.xlu0 %3519
    %v3521 = vsel %vm542, %v3517, -inf
    %3522 = vmax.xlane.f32.xlu0 %v3521
    %v3523 = vpop.xlane.xlu0 %3522
    %v3524 = vsub.f32 %v3516, %v3520
    %v3525 = vsub.f32 %v3517, %v3523
    %v3526 = vmul.f32 %v3524, 1.442695
    %v3527 = vpow.pop %v3526
    %v3528 = vmul.f32 %v3525, 1.442695
    %v3529 = vpow.pop %v3528
    %v3530 = vsel %vm542, %v3527, 0.0
    %3531 = vadd.xlane.f32.xlu0 %v3530
    %v3532 = vpop.xlane.xlu0 %3531
    %v3533 = vsel %vm542, %v3529, 0.0
    %3534 = vadd.xlane.f32.xlu0 %v3533
    %v3535 = vpop.xlane.xlu0 %3534
    %v3536 = vrcp.pop %v3532
    %v3537 = vrcp.pop %v3535
    %v3538 = vmul.f32 %v3527, %v3536
    %v3539 = vmul.f32 %v3529, %v3537
    %v3541 = vsel %vm542, %v3538, 0
    %v3544 = vsel %vm542, %v3539, 0
    %3546 = vmatprep.subr.mxu0 0.0
    %3547 = vmatpush1.msra.mxu0 %v3179
    %3548 = vmatprep.subr.mxu0 0.0
    %3549 = vmatpush1.msra.mxu0 %v3181
    %3550 = vmatprep.subr.mxu0 0.0
    %3551 = vmatpush1.msra.mxu0 0.0
    %3552 = vmatprep.subr.mxu0 0.0
    %3553 = vmatpush1.msra.mxu0 0.0
    %3554 = vmatprep.subr.mxu0 0.0
    %3555 = vmatpush1.msra.mxu0 0.0
    %3556 = vmatprep.subr.mxu0 0.0
    %3557 = vmatpush1.msra.mxu0 0.0
    %3558 = vmatprep.subr.mxu0 0.0
    %3559 = vmatpush1.msra.mxu0 0.0
    %3560 = vmatprep.subr.mxu0 0.0
    %3561 = vmatpush1.msra.mxu0 0.0
    %3562 = vmatprep.subr.mxu0 0.0
    %3563 = vmatpush1.msra.mxu0 0.0
    %3564 = vmatprep.subr.mxu0 0.0
    %3565 = vmatpush1.msra.mxu0 0.0
    %3566 = vmatprep.subr.mxu0 0.0
    %3567 = vmatpush1.msra.mxu0 0.0
    %3568 = vmatprep.subr.mxu0 0.0
    %3569 = vmatpush1.msra.mxu0 0.0
    %3570 = vmatprep.subr.mxu0 0.0
    %3571 = vmatpush1.msra.mxu0 0.0
    %3572 = vmatprep.subr.mxu0 0.0
    %3573 = vmatpush1.msra.mxu0 0.0
    %3574 = vmatprep.subr.mxu0 0.0
    %3575 = vmatpush1.msra.mxu0 0.0
    %3576 = vmatprep.subr.mxu0 0.0
    %3577 = vmatpush1.msra.mxu0 0.0
    %3578 = vmatprep.subr.mxu0 0.0
    %3579 = vmatpush1.msra.mxu0 0.0
    %3580 = vmatprep.subr.mxu0 0.0
    %3581 = vmatpush1.msra.mxu0 0.0
    %3582 = vmatprep.subr.mxu0 0.0
    %3583 = vmatpush1.msra.mxu0 0.0
    %3584 = vmatprep.subr.mxu0 0.0
    %3585 = vmatpush1.msra.mxu0 0.0
    %3586 = vmatprep.subr.mxu0 0.0
    %3587 = vmatpush1.msra.mxu0 0.0
    %3588 = vmatprep.subr.mxu0 0.0
    %3589 = vmatpush1.msra.mxu0 0.0
    %3590 = vmatprep.subr.mxu0 0.0
    %3591 = vmatpush1.msra.mxu0 0.0
    %3592 = vmatprep.subr.mxu0 0.0
    %3593 = vmatpush1.msra.mxu0 0.0
    %3594 = vmatprep.subr.mxu0 0.0
    %3595 = vmatpush1.msra.mxu0 0.0
    %3596 = vmatprep.subr.mxu0 0.0
    %3597 = vmatpush1.msra.mxu0 0.0
    %3598 = vmatprep.subr.mxu0 0.0
    %3599 = vmatpush1.msra.mxu0 0.0
    %3600 = vmatprep.subr.mxu0 0.0
    %3601 = vmatpush1.msra.mxu0 0.0
    %3602 = vmatprep.subr.mxu0 0.0
    %3603 = vmatpush1.msra.mxu0 0.0
    %3604 = vmatprep.subr.mxu0 0.0
    %3605 = vmatpush1.msra.mxu0 0.0
    %3606 = vmatprep.subr.mxu0 0.0
    %3607 = vmatpush1.msra.mxu0 0.0
    %3608 = vmatprep.subr.mxu0 0.0
    %3609 = vmatpush1.msra.mxu0 0.0
    %3610 = vmatprep.mubr.f32.mxu0 0.0
    %3611 = vmatmul.mubr.f32.gmra.mrb[0].mxu0 %v3541
    %v3612 = vpop.f32.mrb[0].mxu0
    %v3613 = vadd.f32 0.0, %v3612
    %v3614 = vpop.f32.mrb[0].mxu0
    %3615 = vmatprep.mubr.f32.mxu0 0.0
    %3616 = vmatmul.mubr.f32.gmra.mrb[0].mxu0 %v3544
    %v3617 = vpop.f32.mrb[0].mxu0
    %v3618 = vadd.f32 0.0, %v3617
    %v3619 = vpop.f32.mrb[0].mxu0
    %3620 = vdwg.mxu0
    %v3622 = vsel %vm542, %v3613, 0
    %v3625 = vsel %vm542, %v3618, 0
    %3627 = vmatprep.subr.mxu0 0.0
    %3628 = vmatpush1.msra.mxu0 %v2236
    %3629 = vmatprep.subr.mxu0 0.0
    %3630 = vmatpush1.msra.mxu0 %v2237
    %3631 = vmatprep.subr.mxu0 0.0
    %3632 = vmatpush1.msra.mxu0 0.0
    %3633 = vmatprep.subr.mxu0 0.0
    %3634 = vmatpush1.msra.mxu0 0.0
    %3635 = vmatprep.subr.mxu0 0.0
    %3636 = vmatpush1.msra.mxu0 0.0
    %3637 = vmatprep.subr.mxu0 0.0
    %3638 = vmatpush1.msra.mxu0 0.0
    %3639 = vmatprep.subr.mxu0 0.0
    %3640 = vmatpush1.msra.mxu0 0.0
    %3641 = vmatprep.subr.mxu0 0.0
    %3642 = vmatpush1.msra.mxu0 0.0
    %3643 = vmatprep.subr.mxu0 0.0
    %3644 = vmatpush1.msra.mxu0 0.0
    %3645 = vmatprep.subr.mxu0 0.0
    %3646 = vmatpush1.msra.mxu0 0.0
    %3647 = vmatprep.subr.mxu0 0.0
    %3648 = vmatpush1.msra.mxu0 0.0
    %3649 = vmatprep.subr.mxu0 0.0
    %3650 = vmatpush1.msra.mxu0 0.0
    %3651 = vmatprep.subr.mxu0 0.0
    %3652 = vmatpush1.msra.mxu0 0.0
    %3653 = vmatprep.subr.mxu0 0.0
    %3654 = vmatpush1.msra.mxu0 0.0
    %3655 = vmatprep.subr.mxu0 0.0
    %3656 = vmatpush1.msra.mxu0 0.0
    %3657 = vmatprep.subr.mxu0 0.0
    %3658 = vmatpush1.msra.mxu0 0.0
    %3659 = vmatprep.subr.mxu0 0.0
    %3660 = vmatpush1.msra.mxu0 0.0
    %3661 = vmatprep.subr.mxu0 0.0
    %3662 = vmatpush1.msra.mxu0 0.0
    %3663 = vmatprep.subr.mxu0 0.0
    %3664 = vmatpush1.msra.mxu0 0.0
    %3665 = vmatprep.subr.mxu0 0.0
    %3666 = vmatpush1.msra.mxu0 0.0
    %3667 = vmatprep.subr.mxu0 0.0
    %3668 = vmatpush1.msra.mxu0 0.0
    %3669 = vmatprep.subr.mxu0 0.0
    %3670 = vmatpush1.msra.mxu0 0.0
    %3671 = vmatprep.subr.mxu0 0.0
    %3672 = vmatpush1.msra.mxu0 0.0
    %3673 = vmatprep.subr.mxu0 0.0
    %3674 = vmatpush1.msra.mxu0 0.0
    %3675 = vmatprep.subr.mxu0 0.0
    %3676 = vmatpush1.msra.mxu0 0.0
    %3677 = vmatprep.subr.mxu0 0.0
    %3678 = vmatpush1.msra.mxu0 0.0
    %3679 = vmatprep.subr.mxu0 0.0
    %3680 = vmatpush1.msra.mxu0 0.0
    %3681 = vmatprep.subr.mxu0 0.0
    %3682 = vmatpush1.msra.mxu0 0.0
    %3683 = vmatprep.subr.mxu0 0.0
    %3684 = vmatpush1.msra.mxu0 0.0
    %3685 = vmatprep.subr.mxu0 0.0
    %3686 = vmatpush1.msra.mxu0 0.0
    %3687 = vmatprep.subr.mxu0 0.0
    %3688 = vmatpush1.msra.mxu0 0.0
    %3689 = vmatprep.subr.mxu0 0.0
    %3690 = vmatpush1.msra.mxu0 0.0
    %3691 = vmatprep.mubr.f32.mxu0 0.0
    %3692 = vmatmul.mubr.f32.gmra.mrb[0].mxu0 %v3622
    %v3693 = vpop.f32.mrb[0].mxu0
    %v3694 = vadd.f32 0.0, %v3693
    %v3695 = vpop.f32.mrb[0].mxu0
    %3696 = vmatprep.mubr.f32.mxu0 0.0
    %3697 = vmatmul.mubr.f32.gmra.mrb[0].mxu0 %v3625
    %v3698 = vpop.f32.mrb[0].mxu0
    %v3699 = vadd.f32 0.0, %v3698
    %v3700 = vpop.f32.mrb[0].mxu0
    %3701 = vdwg.mxu0
    %v3702 = vadd.f32 %v3346, %v3694
    %v3703 = vadd.f32 %v3347, %v3699
    %v3704 = vadd.f32 %v2067, %v3702
    %v3705 = vadd.f32 %v2068, %v3703
    %s3706 = scalar_lea.vmem %s11, 1
    %v3707 = vld [vmem:[%s3706] sm:$0x1]
    %v3708 = vmul.f32 %v3704, %v3704
    %v3709 = vmul.f32 %v3705, %v3705
    %v3710 = vsel %vm146, %v3708, 0.0
    %3711 = vadd.xlane.f32.xlu0 %v3710
    %v3712 = vpop.xlane.xlu0 %3711
    %v3713 = vsel %vm146, %v3709, 0.0
    %3714 = vadd.xlane.f32.xlu0 %v3713
    %v3715 = vpop.xlane.xlu0 %3714
    %v3716 = vmul.f32 %v3712, %v153
    %v3717 = vmul.f32 %v3715, %v153
    %v3718 = vadd.f32 %v3716, 1e-05
    %v3719 = vadd.f32 %v3717, 1e-05
    %v3720 = vrsqrt.pop %v3718
    %v3721 = vrsqrt.pop %v3719
    %v3722 = vmul.f32 %v3704, %v3720
    %v3723 = vmul.f32 %v3705, %v3721
    %v3725 = vlaneseq
    %v3726 = vshrl.u32 %v3725, 7
    %v3727 = vsub.s32 0, %v3726
    %v3728 = vrot.slane %v3707, %v3727
    %v3730 = vmul.f32 %v3722, %v3728
    %v3731 = vmul.f32 %v3723, %v3728
    %v3732 = vpack.c.bf16 %v3731, %v3730
    %s3733 = scalar_lea.vmem [#allocation11], 64
    %v3734 = vld [vmem:[%s3733] sm:$0xff]
    %v3735 = vld [vmem:[%s3733 + $0x8] sm:$0xff]
    %v3736 = vld [vmem:[%s3733 + $0x10] sm:$0xff]
    %v3737 = vld [vmem:[%s3733 + $0x18] sm:$0xff]
    %v3738 = vld [vmem:[%s3733 + $0x20] sm:$0xff]
    %v3739 = vld [vmem:[%s3733 + $0x28] sm:$0xff]
    %v3740 = vld [vmem:[%s3733 + $0x30] sm:$0xff]
    %v3741 = vld [vmem:[%s3733 + $0x38] sm:$0xff]
    %v3750 = vunpack.c.l.b16 %v3734
    %v3751 = vunpack.c.h.b16 %v3734
    %v3752 = vunpack.c.l.b16 %v3735
    %v3753 = vunpack.c.h.b16 %v3735
    %v3754 = vunpack.c.l.b16 %v3736
    %v3755 = vunpack.c.h.b16 %v3736
    %v3756 = vunpack.c.l.b16 %v3737
    %v3757 = vunpack.c.h.b16 %v3737
    %v3758 = vunpack.c.l.b16 %v3738
    %v3759 = vunpack.c.h.b16 %v3738
    %v3760 = vunpack.c.l.b16 %v3739
    %v3761 = vunpack.c.h.b16 %v3739
    %v3762 = vunpack.c.l.b16 %v3740
    %v3763 = vunpack.c.h.b16 %v3740
    %v3764 = vunpack.c.l.b16 %v3741
    %v3765 = vunpack.c.h.b16 %v3741
    %v3766 = vpack.c.b16 %v3752, %v3750
    %v3767 = vpack.c.b16 %v3753, %v3751
    %v3768 = vpack.c.b16 %v3756, %v3754
    %v3769 = vpack.c.b16 %v3757, %v3755
    %v3770 = vpack.c.b16 %v3760, %v3758
    %v3771 = vpack.c.b16 %v3761, %v3759
    %v3772 = vpack.c.b16 %v3764, %v3762
    %v3773 = vpack.c.b16 %v3765, %v3763
    %v3783 = vsel %vm146, %v3732, 0
    %3785 = vmatprep.subr.bf16.mxu0 %v3767
    %3786 = vmatpush1.bf16.msra.mxu0 %v3766
    %3787 = vmatprep.subr.bf16.mxu0 %v3769
    %3788 = vmatpush1.bf16.msra.mxu0 %v3768
    %3789 = vmatprep.subr.bf16.mxu0 %v3771
    %3790 = vmatpush1.bf16.msra.mxu0 %v3770
    %3791 = vmatprep.subr.bf16.mxu0 %v3773
    %3792 = vmatpush1.bf16.msra.mxu0 %v3772
    %3793 = vmatprep.subr.bf16.mxu0 0
    %3794 = vmatpush1.bf16.msra.mxu0 0
    %3795 = vmatprep.subr.bf16.mxu0 0
    %3796 = vmatpush1.bf16.msra.mxu0 0
    %3797 = vmatprep.subr.bf16.mxu0 0
    %3798 = vmatpush1.bf16.msra.mxu0 0
    %3799 = vmatprep.subr.bf16.mxu0 0
    %3800 = vmatpush1.bf16.msra.mxu0 0
    %3801 = vmatprep.subr.bf16.mxu0 0
    %3802 = vmatpush1.bf16.msra.mxu0 0
    %3803 = vmatprep.subr.bf16.mxu0 0
    %3804 = vmatpush1.bf16.msra.mxu0 0
    %3805 = vmatprep.subr.bf16.mxu0 0
    %3806 = vmatpush1.bf16.msra.mxu0 0
    %3807 = vmatprep.subr.bf16.mxu0 0
    %3808 = vmatpush1.bf16.msra.mxu0 0
    %3809 = vmatprep.subr.bf16.mxu0 0
    %3810 = vmatpush1.bf16.msra.mxu0 0
    %3811 = vmatprep.subr.bf16.mxu0 0
    %3812 = vmatpush1.bf16.msra.mxu0 0
    %3813 = vmatprep.subr.bf16.mxu0 0
    %3814 = vmatpush1.bf16.msra.mxu0 0
    %3815 = vmatprep.subr.bf16.mxu0 0
    %3816 = vmatpush1.bf16.msra.mxu0 0
    %3817 = vmatprep.mubr.bf16.mxu0 0
    %3818 = vmatmul.mubr.bf16.gmra.mrb[0].mxu0 %v3783
    %v3819 = vpop.f32.mrb[0].mxu0
    %v3820 = vadd.f32 0.0, %v3819
    %v3821 = vpop.f32.mrb[0].mxu0
    %v3822 = vadd.f32 0.0, %v3821
    %v3823 = vpop.f32.mrb[0].mxu0
    %v3824 = vadd.f32 0.0, %v3823
    %v3825 = vpop.f32.mrb[0].mxu0
    %v3826 = vadd.f32 0.0, %v3825
    %3827 = vdwg.mxu0
    %v3828 = vxor.u32 %v3820, 2147483648
    %v3829 = vxor.u32 %v3824, 2147483648
    %v3830 = vmul.f32 %v3828, 1.442695
    %v3831 = vpow.pop %v3830
    %v3832 = vmul.f32 %v3829, 1.442695
    %v3833 = vpow.pop %v3832
    %v3834 = vadd.f32 %v3831, 1.0
    %v3835 = vadd.f32 %v3833, 1.0
    %v3836 = vrcp.pop %v3834
    %v3837 = vmul.f32 1.0, %v3836
    %v3838 = vrcp.pop %v3835
    %v3839 = vmul.f32 1.0, %v3838
    %v3840 = vmul.f32 %v3820, %v3837
    %v3841 = vmul.f32 %v3824, %v3839
    %v3842 = vmul.f32 %v3840, %v3822
    %v3843 = vmul.f32 %v3841, %v3826
    %v3844 = vpack.c.bf16 %v3843, %v3842
    %s3845 = scalar_lea.vmem %s13, 64
    %v3846 = vld [vmem:[%s3845] sm:$0xf]
    %v3847 = vld [vmem:[%s3845 + $0x4] sm:$0xf]
    %v3848 = vld [vmem:[%s3845 + $0x8] sm:$0xf]
    %v3849 = vld [vmem:[%s3845 + $0xc] sm:$0xf]
    %v3850 = vld [vmem:[%s3845 + $0x10] sm:$0xf]
    %v3851 = vld [vmem:[%s3845 + $0x14] sm:$0xf]
    %v3852 = vld [vmem:[%s3845 + $0x18] sm:$0xf]
    %v3853 = vld [vmem:[%s3845 + $0x1c] sm:$0xf]
    %v3854 = vld [vmem:[%s3845 + $0x20] sm:$0xf]
    %v3855 = vld [vmem:[%s3845 + $0x24] sm:$0xf]
    %v3856 = vld [vmem:[%s3845 + $0x28] sm:$0xf]
    %v3857 = vld [vmem:[%s3845 + $0x2c] sm:$0xf]
    %v3858 = vld [vmem:[%s3845 + $0x30] sm:$0xf]
    %v3859 = vld [vmem:[%s3845 + $0x34] sm:$0xf]
    %v3860 = vld [vmem:[%s3845 + $0x38] sm:$0xf]
    %v3861 = vld [vmem:[%s3845 + $0x3c] sm:$0xf]
    %v3878 = vunpack.c.l.b16 %v3846
    %v3879 = vunpack.c.l.b16 %v3847
    %v3880 = vunpack.c.l.b16 %v3848
    %v3881 = vunpack.c.l.b16 %v3849
    %v3882 = vunpack.c.l.b16 %v3850
    %v3883 = vunpack.c.l.b16 %v3851
    %v3884 = vunpack.c.l.b16 %v3852
    %v3885 = vunpack.c.l.b16 %v3853
    %v3886 = vunpack.c.l.b16 %v3854
    %v3887 = vunpack.c.l.b16 %v3855
    %v3888 = vunpack.c.l.b16 %v3856
    %v3889 = vunpack.c.l.b16 %v3857
    %v3890 = vunpack.c.l.b16 %v3858
    %v3891 = vunpack.c.l.b16 %v3859
    %v3892 = vunpack.c.l.b16 %v3860
    %v3893 = vunpack.c.l.b16 %v3861
    %v3894 = vpack.c.b16 %v3879, %v3878
    %v3895 = vpack.c.b16 %v3881, %v3880
    %v3896 = vpack.c.b16 %v3883, %v3882
    %v3897 = vpack.c.b16 %v3885, %v3884
    %v3898 = vpack.c.b16 %v3887, %v3886
    %v3899 = vpack.c.b16 %v3889, %v3888
    %v3900 = vpack.c.b16 %v3891, %v3890
    %v3901 = vpack.c.b16 %v3893, %v3892
    %3910 = vmatprep.subr.bf16.mxu0 0
    %3911 = vmatpush1.bf16.msra.mxu0 %v3894
    %3912 = vmatprep.subr.bf16.mxu0 0
    %3913 = vmatpush1.bf16.msra.mxu0 %v3895
    %3914 = vmatprep.subr.bf16.mxu0 0
    %3915 = vmatpush1.bf16.msra.mxu0 %v3896
    %3916 = vmatprep.subr.bf16.mxu0 0
    %3917 = vmatpush1.bf16.msra.mxu0 %v3897
    %3918 = vmatprep.subr.bf16.mxu0 0
    %3919 = vmatpush1.bf16.msra.mxu0 %v3898
    %3920 = vmatprep.subr.bf16.mxu0 0
    %3921 = vmatpush1.bf16.msra.mxu0 %v3899
    %3922 = vmatprep.subr.bf16.mxu0 0
    %3923 = vmatpush1.bf16.msra.mxu0 %v3900
    %3924 = vmatprep.subr.bf16.mxu0 0
    %3925 = vmatpush1.bf16.msra.mxu0 %v3901
    %3926 = vmatprep.subr.bf16.mxu0 0
    %3927 = vmatpush1.bf16.msra.mxu0 0
    %3928 = vmatprep.subr.bf16.mxu0 0
    %3929 = vmatpush1.bf16.msra.mxu0 0
    %3930 = vmatprep.subr.bf16.mxu0 0
    %3931 = vmatpush1.bf16.msra.mxu0 0
    %3932 = vmatprep.subr.bf16.mxu0 0
    %3933 = vmatpush1.bf16.msra.mxu0 0
    %3934 = vmatprep.subr.bf16.mxu0 0
    %3935 = vmatpush1.bf16.msra.mxu0 0
    %3936 = vmatprep.subr.bf16.mxu0 0
    %3937 = vmatpush1.bf16.msra.mxu0 0
    %3938 = vmatprep.subr.bf16.mxu0 0
    %3939 = vmatpush1.bf16.msra.mxu0 0
    %3940 = vmatprep.subr.bf16.mxu0 0
    %3941 = vmatpush1.bf16.msra.mxu0 0
    %3942 = vmatprep.mubr.bf16.mxu0 0
    %3943 = vmatmul.mubr.bf16.gmra.mrb[0].mxu0 %v3844
    %v3944 = vpop.f32.mrb[0].mxu0
    %v3945 = vadd.f32 0.0, %v3944
    %v3946 = vpop.f32.mrb[0].mxu0
    %v3947 = vpop.f32.mrb[0].mxu0
    %v3948 = vadd.f32 0.0, %v3947
    %v3949 = vpop.f32.mrb[0].mxu0
    %3950 = vdwg.mxu0
    %v3951 = vadd.f32 %v3704, %v3945
    %v3952 = vadd.f32 %v3705, %v3948
    %v3953 = vld [vmem:[%s6] sm:$0x1]
    %v3954 = vmul.f32 %v3951, %v3951
    %v3955 = vmul.f32 %v3952, %v3952
    %v3956 = vsel %vm146, %v3954, 0.0
    %3957 = vadd.xlane.f32.xlu0 %v3956
    %v3958 = vpop.xlane.xlu0 %3957
    %v3959 = vsel %vm146, %v3955, 0.0
    %3960 = vadd.xlane.f32.xlu0 %v3959
    %v3961 = vpop.xlane.xlu0 %3960
    %v3962 = vmul.f32 %v3958, %v153
    %v3963 = vmul.f32 %v3961, %v153
    %v3964 = vadd.f32 %v3962, 1e-05
    %v3965 = vadd.f32 %v3963, 1e-05
    %v3966 = vrsqrt.pop %v3964
    %v3967 = vrsqrt.pop %v3965
    %v3968 = vmul.f32 %v3951, %v3966
    %v3969 = vmul.f32 %v3952, %v3967
    %v3971 = vlaneseq
    %v3972 = vshrl.u32 %v3971, 7
    %v3973 = vsub.s32 0, %v3972
    %v3974 = vrot.slane %v3953, %v3973
    %v3976 = vmul.f32 %v3968, %v3974
    %v3977 = vmul.f32 %v3969, %v3974
    %v3978 = vpack.c.bf16 %v3977, %v3976
    %v3979 = vld [vmem:[%s7] sm:$0xff]
    %v3980 = vld [vmem:[%s7 + $0x8] sm:$0xff]
    %v3981 = vld [vmem:[%s7 + $0x10] sm:$0xff]
    %v3982 = vld [vmem:[%s7 + $0x18] sm:$0xff]
    %v3983 = vld [vmem:[%s7 + $0x20] sm:$0xff]
    %v3984 = vld [vmem:[%s7 + $0x28] sm:$0xff]
    %v3985 = vld [vmem:[%s7 + $0x30] sm:$0xff]
    %v3986 = vld [vmem:[%s7 + $0x38] sm:$0xff]
    %v3995 = vunpack.c.l.b16 %v3979
    %v3996 = vunpack.c.h.b16 %v3979
    %v3997 = vunpack.c.l.b16 %v3980
    %v3998 = vunpack.c.h.b16 %v3980
    %v3999 = vunpack.c.l.b16 %v3981
    %v4000 = vunpack.c.h.b16 %v3981
    %v4001 = vunpack.c.l.b16 %v3982
    %v4002 = vunpack.c.h.b16 %v3982
    %v4003 = vunpack.c.l.b16 %v3983
    %v4004 = vunpack.c.h.b16 %v3983
    %v4005 = vunpack.c.l.b16 %v3984
    %v4006 = vunpack.c.h.b16 %v3984
    %v4007 = vunpack.c.l.b16 %v3985
    %v4008 = vunpack.c.h.b16 %v3985
    %v4009 = vunpack.c.l.b16 %v3986
    %v4010 = vunpack.c.h.b16 %v3986
    %v4011 = vpack.c.b16 %v3997, %v3995
    %v4012 = vpack.c.b16 %v3998, %v3996
    %v4013 = vpack.c.b16 %v4001, %v3999
    %v4014 = vpack.c.b16 %v4002, %v4000
    %v4015 = vpack.c.b16 %v4005, %v4003
    %v4016 = vpack.c.b16 %v4006, %v4004
    %v4017 = vpack.c.b16 %v4009, %v4007
    %v4018 = vpack.c.b16 %v4010, %v4008
    %v4028 = vsel %vm146, %v3978, 0
    %4030 = vmatprep.subr.bf16.mxu0 %v4012
    %4031 = vmatpush1.bf16.msra.mxu0 %v4011
    %4032 = vmatprep.subr.bf16.mxu0 %v4014
    %4033 = vmatpush1.bf16.msra.mxu0 %v4013
    %4034 = vmatprep.subr.bf16.mxu0 %v4016
    %4035 = vmatpush1.bf16.msra.mxu0 %v4015
    %4036 = vmatprep.subr.bf16.mxu0 %v4018
    %4037 = vmatpush1.bf16.msra.mxu0 %v4017
    %4038 = vmatprep.subr.bf16.mxu0 0
    %4039 = vmatpush1.bf16.msra.mxu0 0
    %4040 = vmatprep.subr.bf16.mxu0 0
    %4041 = vmatpush1.bf16.msra.mxu0 0
    %4042 = vmatprep.subr.bf16.mxu0 0
    %4043 = vmatpush1.bf16.msra.mxu0 0
    %4044 = vmatprep.subr.bf16.mxu0 0
    %4045 = vmatpush1.bf16.msra.mxu0 0
    %4046 = vmatprep.subr.bf16.mxu0 0
    %4047 = vmatpush1.bf16.msra.mxu0 0
    %4048 = vmatprep.subr.bf16.mxu0 0
    %4049 = vmatpush1.bf16.msra.mxu0 0
    %4050 = vmatprep.subr.bf16.mxu0 0
    %4051 = vmatpush1.bf16.msra.mxu0 0
    %4052 = vmatprep.subr.bf16.mxu0 0
    %4053 = vmatpush1.bf16.msra.mxu0 0
    %4054 = vmatprep.subr.bf16.mxu0 0
    %4055 = vmatpush1.bf16.msra.mxu0 0
    %4056 = vmatprep.subr.bf16.mxu0 0
    %4057 = vmatpush1.bf16.msra.mxu0 0
    %4058 = vmatprep.subr.bf16.mxu0 0
    %4059 = vmatpush1.bf16.msra.mxu0 0
    %4060 = vmatprep.subr.bf16.mxu0 0
    %4061 = vmatpush1.bf16.msra.mxu0 0
    %4062 = vmatprep.mubr.bf16.mxu0 0
    %4063 = vmatmul.mubr.bf16.gmra.mrb[0].mxu0 %v4028
    %v4064 = vpop.f32.mrb[0].mxu0
    %v4065 = vadd.f32 0.0, %v4064
    %v4066 = vpop.f32.mrb[0].mxu0
    %v4067 = vadd.f32 0.0, %v4066
    %v4068 = vpop.f32.mrb[0].mxu0
    %v4069 = vadd.f32 0.0, %v4068
    %v4070 = vpop.f32.mrb[0].mxu0
    %v4071 = vadd.f32 0.0, %v4070
    %4072 = vdwg.mxu0
    %4073 = vst [vmem:[#allocation13] sm:$0xff] %v4065
    %4074 = vst [vmem:[#allocation13 + $0x8] sm:$0xff] %v4067
    %4075 = vst [vmem:[#allocation13 + $0x10] sm:$0xff] %v4069
    %4076 = vst [vmem:[#allocation13 + $0x18] sm:$0xff] %v4071
    // Predicated region
    $region82: #{tpu_custom_call.1} parent=1 // pred_check
      _
    $region83: #{tpu_custom_call.1} parent=1 // pred_check_branch
      %4078 = sbr.rel (0) target = $region85
    $region84: #{tpu_custom_call.1} parent=1 // pred_region
      %s4080 = ssub.s32 512, 512
      %4081 = vsyncadd [#allocation4], %s4080
      %s4082 = sshll.u32 [#allocation13], 4
      %s4083 = int_to_ptr.vmem [resolvable:$true] %s4082
      %4088 = dma.vmem_to_hbm [thread:$0]  %s4083, 512, %s14, [#allocation4], 256, 256, 16
    $region85: #{tpu_custom_call.1} parent=1 // pred_fallthru
      _
    // Predicated region
    $region86: #{tpu_custom_call.1} parent=1 // pred_check
      _
    $region87: #{tpu_custom_call.1} parent=1 // pred_check_branch
      %4090 = sbr.rel (0) target = $region89
    $region88: #{tpu_custom_call.1} parent=1 // pred_region
      %4091 = dma.done [#allocation4], 512
    $region89: #{tpu_custom_call.1} parent=1 // pred_fallthru
      _
    %4092 = vsyncpa [#allocation3], 1
    %4093 = vsyncpa [#allocation6], 1
    %4094 = vsyncpa [#allocation9], 1
    %4095 = vsyncpa [#allocation12], 1
    %4096 = vsyncpa [#allocation4], 1

</llo_original>
